<compile_context>
chip_gen: v7x
topology: tpu7x:2x2x1
jax: 0.10.0
libtpu: 0.0.40
codegen_flags: <defaults>
</compile_context>

<pallas_src>
import functools

import jax
import jax.numpy as jnp
from jax import lax
from jax.experimental import pallas as pl
from jax.experimental.pallas import tpu as pltpu


# ------------------------------ fused kernel --------------------------------
def _hlfs_kernel(x_ref, yy_ref, xx_ref, wA_ref, bdp_ref, wB_ref, bbig_ref,
                 wgT_ref, bg_ref, o_ref, *, H, W):
    f32 = jnp.float32
    bf16 = jnp.bfloat16
    BN = x_ref.shape[0]
    HW = x_ref.shape[-1]

    yy = yy_ref[...]                       # (1, HW) int32 : pixel row index
    xx = xx_ref[...]                       # (1, HW) int32 : pixel col index

    def tap(v, dy, dx):
        """v[:, p] evaluated at pixel (y+dy, x+dx); zero outside the image."""
        s = dy * W + dx
        r = v if s == 0 else pltpu.roll(v, shift=(-s) % HW, axis=1)
        if dy == 0 and dx == 0:
            return r
        m = (yy >= -dy) & (yy < H - dy) & (xx >= -dx) & (xx < W - dx)
        return r * m.astype(f32)           # (1,HW) mask broadcast over sublanes

    offs1 = [(dy, dx) for dy in (-1, 0, 1) for dx in (-1, 0, 1)]
    offs2 = [(dy, dx) for dy in (-2, 0, 2) for dx in (-2, 0, 2)]

    wA = wA_ref[...]                       # (9,  Cout, Cin)  bf16
    wB = wB_ref[...]                       # (19, Cout, Cout) bf16
    wgT = wgT_ref[...]                     # (Cout, Cout)     f32
    bdp = bdp_ref[...]                     # (Cout, 1)        f32
    bbig = bbig_ref[...]                   # (Cout, 1)        f32
    bg = bg_ref[...]                       # (Cout, 1)        f32

    for b in range(BN):
        xb = x_ref[b]                      # (Cin, HW) f32

        # stage A: depthwise 3x3 (+bias) -> pointwise 1x1 (+bias), folded.
        acc = None
        for k, (dy, dx) in enumerate(offs1):
            d = jnp.dot(wA[k], tap(xb, dy, dx).astype(bf16),
                        preferred_element_type=f32)
            acc = d if acc is None else acc + d
        base = acc + bdp                   # (Cout, HW) f32

        # stage B: [base | dilated r=1 | dilated r=2] -> BN(eval) -> 1x1 fusion
        facc = jnp.dot(wB[0], base.astype(bf16), preferred_element_type=f32)
        ti = 1
        for offs in (offs1, offs2):
            for (dy, dx) in offs:
                facc = facc + jnp.dot(wB[ti], tap(base, dy, dx).astype(bf16),
                                      preferred_element_type=f32)
                ti += 1
        fused = facc + bbig                # (Cout, HW) f32

        # contrast guide: sigmoid(Wg @ GAP(fused) + bg) == sigmoid(GAP(Wg@fused)+bg)
        g2 = jnp.dot(wgT, fused, preferred_element_type=f32)      # (Cout, HW)
        guide = jax.nn.sigmoid(jnp.mean(g2, axis=1, keepdims=True) + bg)

        # ReLU + unmasked full-lane (Cout, HW) store
        o_ref[b] = jnp.maximum(fused * guide, 0.0)


# ------------------------------- wrapper ------------------------------------
def hlfs_block(x, p, *, block_n=None):
    """HLFSBlock forward.  x: (N, H, W, Cin) float32 NHWC -> (N, H, W, Cout)."""
    N, H, W, Cin = x.shape
    Cout = p["wgT"].shape[0]
    HW = H * W
    f32 = jnp.float32

    if block_n is None:
        # amortize per-grid-step overhead, but keep >= 2 steps for v7x megacore
        block_n = 1 if N <= 2 else max(1, min(8, N // 2))
    while N % block_n:
        block_n -= 1
    grid_n = N // block_n

    # channels-first with spatial flattened onto the lane axis (cheap XLA ops)
    x_cp = jnp.transpose(x, (0, 3, 1, 2)).reshape(N, Cin, HW)
    pos = jnp.arange(HW, dtype=jnp.int32)
    yy = (pos // W).reshape(1, HW)
    xx = (pos % W).reshape(1, HW)

    def full(a):
        nd = a.ndim
        return pl.BlockSpec(a.shape, lambda n, _nd=nd: (0,) * _nd)

    kernel = functools.partial(_hlfs_kernel, H=H, W=W)
    flops = int(2 * N * HW * Cout * (9 * Cin + 20 * Cout))
    bytes_accessed = int(4 * (x.size + N * Cout * HW + 2 * HW)
                         + 2 * (p["wA"].size + p["wB"].size)
                         + 4 * (p["bdp"].size + p["bbig"].size
                                + p["wgT"].size + p["bg"].size))

    out = pl.pallas_call(
        kernel,
        out_shape=jax.ShapeDtypeStruct((N, Cout, HW), f32),
        grid=(grid_n,),
        in_specs=[
            pl.BlockSpec((block_n, Cin, HW), lambda n: (n, 0, 0)),
            full(yy), full(xx), full(p["wA"]), full(p["bdp"]), full(p["wB"]),
            full(p["bbig"]), full(p["wgT"]), full(p["bg"]),
        ],
        out_specs=pl.BlockSpec((block_n, Cout, HW), lambda n: (n, 0, 0)),
        compiler_params=pltpu.CompilerParams(dimension_semantics=("parallel",)),
        cost_estimate=pl.CostEstimate(flops=flops,
                                      transcendentals=int(N * Cout),
                                      bytes_accessed=bytes_accessed),
    )(x_cp, yy, xx, p["wA"], p["bdp"], p["wB"], p["bbig"], p["wgT"], p["bg"])

    # (N, Cout, H*W) -> NHWC; cheap lane-dense XLA relayout outside the kernel.
    return jnp.transpose(out.reshape(N, Cout, H, W), (0, 2, 3, 1))


# --------------------- trace-time weight folding (eval BN) -------------------
def fold_hlfs_params(wdw_hwc, bdw, wpw, bpw, wd1_hwio, wd2_hwio,
                     gamma, beta, rmean, rvar, wf, bf, wg, bg, eps=1e-5):
    hp = lax.Precision.HIGHEST
    Cin, Cout = wpw.shape
    # depthwise (3,3,Cin) x pointwise (Cin,Cout): wA[k,o,c] = wdw[k,c]*wpw[c,o]
    wdw9 = wdw_hwc.reshape(9, Cin)
    wA = wdw9[:, None, :] * jnp.transpose(wpw)[None, :, :]          # (9,Cout,Cin)
    bdp = jnp.dot(bdw, wpw, precision=hp) + bpw                     # (Cout,)
    # BN(eval) folded into the 1x1 fusion, then fused with the dilated weights.
    bn_scale = gamma / jnp.sqrt(rvar + eps)
    bn_shift = beta - rmean * bn_scale
    wf_s = bn_scale[:, None] * wf                                   # (3Cout,Cout)
    wd1_9 = wd1_hwio.reshape(9, Cout, Cout)
    wd2_9 = wd2_hwio.reshape(9, Cout, Cout)
    wB = jnp.concatenate(
        [jnp.transpose(wf_s[0:Cout])[None]]
        + [jnp.transpose(jnp.dot(wd1_9[k], wf_s[Cout:2 * Cout], precision=hp))[None]
           for k in range(9)]
        + [jnp.transpose(jnp.dot(wd2_9[k], wf_s[2 * Cout:3 * Cout], precision=hp))[None]
           for k in range(9)], axis=0)                              # (19,Cout,Cout)
    bbig = jnp.dot(bn_shift, wf, precision=hp) + bf                 # (Cout,)
    return dict(
        wA=wA.astype(jnp.bfloat16),                  # MXU operands in bf16
        bdp=bdp.reshape(Cout, 1).astype(jnp.float32),
        wB=wB.astype(jnp.bfloat16),
        bbig=bbig.reshape(Cout, 1).astype(jnp.float32),
        wgT=jnp.transpose(wg).astype(jnp.float32),   # guide weight, [out, in]
        bg=bg.reshape(Cout, 1).astype(jnp.float32),
    )


# ------------------------ pure-JAX reference (NCHW) --------------------------
def reference(x_nhwc, w):
    Cin = x_nhwc.shape[-1]
    Cout = w["wpw"].shape[1]
    dn = ("NCHW", "OIHW", "NCHW")
    hp = lax.Precision.HIGHEST
    x = jnp.transpose(x_nhwc, (0, 3, 1, 2))

    w_dw = jnp.transpose(w["wdw_hwc"], (2, 0, 1))[:, None, :, :]   # (Cin,1,3,3)
    y = lax.conv_general_dilated(x, w_dw, (1, 1), [(1, 1), (1, 1)],
                                 dimension_numbers=dn,
                                 feature_group_count=Cin, precision=hp)
    y = y + w["bdw"].reshape(1, Cin, 1, 1)

    w_pw = jnp.transpose(w["wpw"], (1, 0))[:, :, None, None]
    base = lax.conv_general_dilated(y, w_pw, (1, 1), [(0, 0), (0, 0)],
                                    dimension_numbers=dn, precision=hp)
    base = base + w["bpw"].reshape(1, Cout, 1, 1)

    feats = [base]
    for r, wh in ((1, w["wd1_hwio"]), (2, w["wd2_hwio"])):
        wo = jnp.transpose(wh, (3, 2, 0, 1))                       # OIHW
        feats.append(lax.conv_general_dilated(
            base, wo, (1, 1), [(r, r), (r, r)], rhs_dilation=(r, r),
            dimension_numbers=dn, precision=hp))
    cat = jnp.concatenate(feats, axis=1)

    scale = w["gamma"] / jnp.sqrt(w["var"] + 1e-5)
    cat = ((cat - w["mean"].reshape(1, -1, 1, 1)) * scale.reshape(1, -1, 1, 1)
           + w["beta"].reshape(1, -1, 1, 1))

    w_f = jnp.transpose(w["wf"], (1, 0))[:, :, None, None]
    fused = lax.conv_general_dilated(cat, w_f, (1, 1), [(0, 0), (0, 0)],
                                     dimension_numbers=dn, precision=hp)
    fused = fused + w["bf"].reshape(1, Cout, 1, 1)

    gap = jnp.mean(fused, axis=(2, 3), keepdims=True)
    w_g = jnp.transpose(w["wg"], (1, 0))[:, :, None, None]
    g = lax.conv_general_dilated(gap, w_g, (1, 1), [(0, 0), (0, 0)],
                                 dimension_numbers=dn, precision=hp)
    g = jax.nn.sigmoid(g + w["bg"].reshape(1, Cout, 1, 1))
    out = jnp.maximum(fused * g, 0.0)
    return jnp.transpose(out, (0, 2, 3, 1))                        # back to NHWC


if __name__ == "__main__":
    N, H, W, Cin, Cout = 2, 16, 16, 4, 8
    key = jax.random.PRNGKey(0)
    ks = jax.random.split(key, 16)

    x = jax.random.normal(ks[0], (N, H, W, Cin), jnp.float32)

    # deterministic synthetic parameters (shapes follow HLFSBlock.__init__)
    wdw_hwc = 0.2 * jax.random.normal(ks[1], (3, 3, Cin), jnp.float32)
    bdw = 0.1 * jax.random.normal(ks[2], (Cin,), jnp.float32)
    wpw = 0.2 * jax.random.normal(ks[3], (Cin, Cout), jnp.float32)
    bpw = 0.1 * jax.random.normal(ks[4], (Cout,), jnp.float32)
    wd1_hwio = 0.2 * jax.random.normal(ks[5], (3, 3, Cout, Cout), jnp.float32)
    wd2_hwio = 0.2 * jax.random.normal(ks[6], (3, 3, Cout, Cout), jnp.float32)
    gamma = 1.0 + 0.1 * jax.random.normal(ks[7], (3 * Cout,), jnp.float32)
    beta = 0.1 * jax.random.normal(ks[8], (3 * Cout,), jnp.float32)
    rmean = 0.1 * jax.random.normal(ks[9], (3 * Cout,), jnp.float32)
    rvar = 1.0 + 0.1 * jnp.abs(jax.random.normal(ks[10], (3 * Cout,), jnp.float32))
    wf = 0.2 * jax.random.normal(ks[11], (3 * Cout, Cout), jnp.float32)
    bf = 0.1 * jax.random.normal(ks[12], (Cout,), jnp.float32)
    wg = 0.2 * jax.random.normal(ks[13], (Cout, Cout), jnp.float32)
    bg = 0.1 * jax.random.normal(ks[14], (Cout,), jnp.float32)

    kernel_params = fold_hlfs_params(wdw_hwc, bdw, wpw, bpw, wd1_hwio, wd2_hwio,
                                     gamma, beta, rmean, rvar, wf, bf, wg, bg)
    ref_params = dict(wdw_hwc=wdw_hwc, bdw=bdw, wpw=wpw, bpw=bpw,
                      wd1_hwio=wd1_hwio, wd2_hwio=wd2_hwio,
                      gamma=gamma, beta=beta, mean=rmean, var=rvar,
                      wf=wf, bf=bf, wg=wg, bg=bg)

    out = jax.block_until_ready(hlfs_block(x, kernel_params))
    ref = jax.block_until_ready(reference(x, ref_params))

    assert out.shape == (N, H, W, Cout), out.shape
    max_err = float(jnp.max(jnp.abs(out - ref)))
    # tolerance accounts for bf16 MXU operands (accumulation stays f32)
    if max_err > 3e-2:
        raise AssertionError(f"kernel mismatch vs reference: max_err={max_err}")
    print("KERNEL_OK")
</pallas_src>

<mosaic_0001>
module attributes {stable_mosaic.version = 11 : i64} {
  func.func @_hlfs_kernel(%arg0: i32, %arg1: memref<1x4x256xf32, #tpu.memory_space<vmem>>, %arg2: memref<1x256xi32, #tpu.memory_space<vmem>>, %arg3: memref<1x256xi32, #tpu.memory_space<vmem>>, %arg4: memref<9x8x4xbf16, #tpu.memory_space<vmem>>, %arg5: memref<8x1xf32, #tpu.memory_space<vmem>>, %arg6: memref<19x8x8xbf16, #tpu.memory_space<vmem>>, %arg7: memref<8x1xf32, #tpu.memory_space<vmem>>, %arg8: memref<8x8xf32, #tpu.memory_space<vmem>>, %arg9: memref<8x1xf32, #tpu.memory_space<vmem>>, %arg10: memref<1x8x256xf32, #tpu.memory_space<vmem>>) attributes {dimension_semantics = [#tpu.dimension_semantics<parallel>], iteration_bounds = array<i64: 2>, scalar_prefetch = 0 : i64, scratch_operands = 0 : i64, tpu.core_type = #tpu.core_type<tc>, window_params = [{transform_indices = @transform_0, window_bounds = array<i64: 1, 4, 256>}, {pipeline_mode = #tpu.pipeline_mode<synchronous>, transform_indices = @transform_1, window_bounds = array<i64: 1, 256>}, {pipeline_mode = #tpu.pipeline_mode<synchronous>, transform_indices = @transform_2, window_bounds = array<i64: 1, 256>}, {pipeline_mode = #tpu.pipeline_mode<synchronous>, transform_indices = @transform_3, window_bounds = array<i64: 9, 8, 4>}, {pipeline_mode = #tpu.pipeline_mode<synchronous>, transform_indices = @transform_4, window_bounds = array<i64: 8, 1>}, {pipeline_mode = #tpu.pipeline_mode<synchronous>, transform_indices = @transform_5, window_bounds = array<i64: 19, 8, 8>}, {pipeline_mode = #tpu.pipeline_mode<synchronous>, transform_indices = @transform_6, window_bounds = array<i64: 8, 1>}, {pipeline_mode = #tpu.pipeline_mode<synchronous>, transform_indices = @transform_7, window_bounds = array<i64: 8, 8>}, {pipeline_mode = #tpu.pipeline_mode<synchronous>, transform_indices = @transform_8, window_bounds = array<i64: 8, 1>}, {transform_indices = @transform_9, window_bounds = array<i64: 1, 8, 256>}]} {
    %c0 = arith.constant 0 : index
    %c0_0 = arith.constant 0 : index
    %0 = vector.load %arg2[%c0, %c0_0] : memref<1x256xi32, #tpu.memory_space<vmem>>, vector<1x256xi32>
    %c0_1 = arith.constant 0 : index
    %c0_2 = arith.constant 0 : index
    %1 = vector.load %arg3[%c0_1, %c0_2] : memref<1x256xi32, #tpu.memory_space<vmem>>, vector<1x256xi32>
    %c0_3 = arith.constant 0 : index
    %c0_4 = arith.constant 0 : index
    %c0_5 = arith.constant 0 : index
    %2 = vector.load %arg4[%c0_3, %c0_4, %c0_5] : memref<9x8x4xbf16, #tpu.memory_space<vmem>>, vector<9x8x4xbf16>
    %c0_6 = arith.constant 0 : index
    %c0_7 = arith.constant 0 : index
    %c0_8 = arith.constant 0 : index
    %3 = vector.load %arg6[%c0_6, %c0_7, %c0_8] : memref<19x8x8xbf16, #tpu.memory_space<vmem>>, vector<19x8x8xbf16>
    %c0_9 = arith.constant 0 : index
    %c0_10 = arith.constant 0 : index
    %4 = vector.load %arg8[%c0_9, %c0_10] : memref<8x8xf32, #tpu.memory_space<vmem>>, vector<8x8xf32>
    %c0_11 = arith.constant 0 : index
    %c0_12 = arith.constant 0 : index
    %5 = vector.load %arg5[%c0_11, %c0_12] : memref<8x1xf32, #tpu.memory_space<vmem>>, vector<8x1xf32>
    %c0_13 = arith.constant 0 : index
    %c0_14 = arith.constant 0 : index
    %6 = vector.load %arg7[%c0_13, %c0_14] : memref<8x1xf32, #tpu.memory_space<vmem>>, vector<8x1xf32>
    %c0_15 = arith.constant 0 : index
    %c0_16 = arith.constant 0 : index
    %7 = vector.load %arg9[%c0_15, %c0_16] : memref<8x1xf32, #tpu.memory_space<vmem>>, vector<8x1xf32>
    %c0_17 = arith.constant 0 : index
    %c0_18 = arith.constant 0 : index
    %c0_19 = arith.constant 0 : index
    %8 = vector.load %arg1[%c0_17, %c0_18, %c0_19] : memref<1x4x256xf32, #tpu.memory_space<vmem>>, vector<1x4x256xf32>
    %9 = vector.shape_cast %8 : vector<1x4x256xf32> to vector<4x256xf32>
    %10 = vector.extract_strided_slice %2 {offsets = [0, 0, 0], sizes = [1, 8, 4], strides = [1, 1, 1]} : vector<9x8x4xbf16> to vector<1x8x4xbf16>
    %11 = vector.shape_cast %10 : vector<1x8x4xbf16> to vector<8x4xbf16>
    %c17_i32 = arith.constant 17 : i32
    %12 = tpu.dynamic_rotate %9 by %c17_i32 dim 1 : vector<4x256xf32>, i32 -> vector<4x256xf32>
    %c1_i32 = arith.constant 1 : i32
    %13 = vector.broadcast %c1_i32 : i32 to vector<1x256xi32>
    %14 = arith.cmpi sge, %0, %13 : vector<1x256xi32>
    %c17_i32_20 = arith.constant 17 : i32
    %15 = vector.broadcast %c17_i32_20 : i32 to vector<1x256xi32>
    %16 = arith.cmpi slt, %0, %15 : vector<1x256xi32>
    %17 = arith.andi %14, %16 : vector<1x256xi1>
    %c1_i32_21 = arith.constant 1 : i32
    %18 = vector.broadcast %c1_i32_21 : i32 to vector<1x256xi32>
    %19 = arith.cmpi sge, %1, %18 : vector<1x256xi32>
    %20 = arith.andi %17, %19 : vector<1x256xi1>
    %c17_i32_22 = arith.constant 17 : i32
    %21 = vector.broadcast %c17_i32_22 : i32 to vector<1x256xi32>
    %22 = arith.cmpi slt, %1, %21 : vector<1x256xi32>
    %23 = arith.andi %20, %22 : vector<1x256xi1>
    %24 = arith.extui %23 : vector<1x256xi1> to vector<1x256xi32>
    %25 = arith.sitofp %24 : vector<1x256xi32> to vector<1x256xf32>
    %26 = vector.broadcast %25 : vector<1x256xf32> to vector<4x256xf32>
    %27 = arith.mulf %12, %26 : vector<4x256xf32>
    %28 = arith.truncf %27 : vector<4x256xf32> to vector<4x256xbf16>
    %cst = arith.constant dense<0.000000e+00> : vector<8x256xf32>
    %29 = tpu.matmul %11, %28, %cst {dimension_numbers = #tpu.dot_dimension_numbers<[1], [0], [0], [1], [0, 0, 1, 1], [], []>} : vector<8x4xbf16>, vector<4x256xbf16>, vector<8x256xf32> -> vector<8x256xf32>
    %30 = vector.extract_strided_slice %2 {offsets = [1, 0, 0], sizes = [1, 8, 4], strides = [1, 1, 1]} : vector<9x8x4xbf16> to vector<1x8x4xbf16>
    %31 = vector.shape_cast %30 : vector<1x8x4xbf16> to vector<8x4xbf16>
    %c16_i32 = arith.constant 16 : i32
    %32 = tpu.dynamic_rotate %9 by %c16_i32 dim 1 : vector<4x256xf32>, i32 -> vector<4x256xf32>
    %c1_i32_23 = arith.constant 1 : i32
    %33 = vector.broadcast %c1_i32_23 : i32 to vector<1x256xi32>
    %34 = arith.cmpi sge, %0, %33 : vector<1x256xi32>
    %c17_i32_24 = arith.constant 17 : i32
    %35 = vector.broadcast %c17_i32_24 : i32 to vector<1x256xi32>
    %36 = arith.cmpi slt, %0, %35 : vector<1x256xi32>
    %37 = arith.andi %34, %36 : vector<1x256xi1>
    %c0_i32 = arith.constant 0 : i32
    %38 = vector.broadcast %c0_i32 : i32 to vector<1x256xi32>
    %39 = arith.cmpi sge, %1, %38 : vector<1x256xi32>
    %40 = arith.andi %37, %39 : vector<1x256xi1>
    %c16_i32_25 = arith.constant 16 : i32
    %41 = vector.broadcast %c16_i32_25 : i32 to vector<1x256xi32>
    %42 = arith.cmpi slt, %1, %41 : vector<1x256xi32>
    %43 = arith.andi %40, %42 : vector<1x256xi1>
    %44 = arith.extui %43 : vector<1x256xi1> to vector<1x256xi32>
    %45 = arith.sitofp %44 : vector<1x256xi32> to vector<1x256xf32>
    %46 = vector.broadcast %45 : vector<1x256xf32> to vector<4x256xf32>
    %47 = arith.mulf %32, %46 : vector<4x256xf32>
    %48 = arith.truncf %47 : vector<4x256xf32> to vector<4x256xbf16>
    %cst_26 = arith.constant dense<0.000000e+00> : vector<8x256xf32>
    %49 = tpu.matmul %31, %48, %cst_26 {dimension_numbers = #tpu.dot_dimension_numbers<[1], [0], [0], [1], [0, 0, 1, 1], [], []>} : vector<8x4xbf16>, vector<4x256xbf16>, vector<8x256xf32> -> vector<8x256xf32>
    %50 = arith.addf %29, %49 : vector<8x256xf32>
    %51 = vector.extract_strided_slice %2 {offsets = [2, 0, 0], sizes = [1, 8, 4], strides = [1, 1, 1]} : vector<9x8x4xbf16> to vector<1x8x4xbf16>
    %52 = vector.shape_cast %51 : vector<1x8x4xbf16> to vector<8x4xbf16>
    %c15_i32 = arith.constant 15 : i32
    %53 = tpu.dynamic_rotate %9 by %c15_i32 dim 1 : vector<4x256xf32>, i32 -> vector<4x256xf32>
    %c1_i32_27 = arith.constant 1 : i32
    %54 = vector.broadcast %c1_i32_27 : i32 to vector<1x256xi32>
    %55 = arith.cmpi sge, %0, %54 : vector<1x256xi32>
    %c17_i32_28 = arith.constant 17 : i32
    %56 = vector.broadcast %c17_i32_28 : i32 to vector<1x256xi32>
    %57 = arith.cmpi slt, %0, %56 : vector<1x256xi32>
    %58 = arith.andi %55, %57 : vector<1x256xi1>
    %c-1_i32 = arith.constant -1 : i32
    %59 = vector.broadcast %c-1_i32 : i32 to vector<1x256xi32>
    %60 = arith.cmpi sge, %1, %59 : vector<1x256xi32>
    %61 = arith.andi %58, %60 : vector<1x256xi1>
    %c15_i32_29 = arith.constant 15 : i32
    %62 = vector.broadcast %c15_i32_29 : i32 to vector<1x256xi32>
    %63 = arith.cmpi slt, %1, %62 : vector<1x256xi32>
    %64 = arith.andi %61, %63 : vector<1x256xi1>
    %65 = arith.extui %64 : vector<1x256xi1> to vector<1x256xi32>
    %66 = arith.sitofp %65 : vector<1x256xi32> to vector<1x256xf32>
    %67 = vector.broadcast %66 : vector<1x256xf32> to vector<4x256xf32>
    %68 = arith.mulf %53, %67 : vector<4x256xf32>
    %69 = arith.truncf %68 : vector<4x256xf32> to vector<4x256xbf16>
    %cst_30 = arith.constant dense<0.000000e+00> : vector<8x256xf32>
    %70 = tpu.matmul %52, %69, %cst_30 {dimension_numbers = #tpu.dot_dimension_numbers<[1], [0], [0], [1], [0, 0, 1, 1], [], []>} : vector<8x4xbf16>, vector<4x256xbf16>, vector<8x256xf32> -> vector<8x256xf32>
    %71 = arith.addf %50, %70 : vector<8x256xf32>
    %72 = vector.extract_strided_slice %2 {offsets = [3, 0, 0], sizes = [1, 8, 4], strides = [1, 1, 1]} : vector<9x8x4xbf16> to vector<1x8x4xbf16>
    %73 = vector.shape_cast %72 : vector<1x8x4xbf16> to vector<8x4xbf16>
    %c1_i32_31 = arith.constant 1 : i32
    %74 = tpu.dynamic_rotate %9 by %c1_i32_31 dim 1 : vector<4x256xf32>, i32 -> vector<4x256xf32>
    %c0_i32_32 = arith.constant 0 : i32
    %75 = vector.broadcast %c0_i32_32 : i32 to vector<1x256xi32>
    %76 = arith.cmpi sge, %0, %75 : vector<1x256xi32>
    %c16_i32_33 = arith.constant 16 : i32
    %77 = vector.broadcast %c16_i32_33 : i32 to vector<1x256xi32>
    %78 = arith.cmpi slt, %0, %77 : vector<1x256xi32>
    %79 = arith.andi %76, %78 : vector<1x256xi1>
    %c1_i32_34 = arith.constant 1 : i32
    %80 = vector.broadcast %c1_i32_34 : i32 to vector<1x256xi32>
    %81 = arith.cmpi sge, %1, %80 : vector<1x256xi32>
    %82 = arith.andi %79, %81 : vector<1x256xi1>
    %c17_i32_35 = arith.constant 17 : i32
    %83 = vector.broadcast %c17_i32_35 : i32 to vector<1x256xi32>
    %84 = arith.cmpi slt, %1, %83 : vector<1x256xi32>
    %85 = arith.andi %82, %84 : vector<1x256xi1>
    %86 = arith.extui %85 : vector<1x256xi1> to vector<1x256xi32>
    %87 = arith.sitofp %86 : vector<1x256xi32> to vector<1x256xf32>
    %88 = vector.broadcast %87 : vector<1x256xf32> to vector<4x256xf32>
    %89 = arith.mulf %74, %88 : vector<4x256xf32>
    %90 = arith.truncf %89 : vector<4x256xf32> to vector<4x256xbf16>
    %cst_36 = arith.constant dense<0.000000e+00> : vector<8x256xf32>
    %91 = tpu.matmul %73, %90, %cst_36 {dimension_numbers = #tpu.dot_dimension_numbers<[1], [0], [0], [1], [0, 0, 1, 1], [], []>} : vector<8x4xbf16>, vector<4x256xbf16>, vector<8x256xf32> -> vector<8x256xf32>
    %92 = arith.addf %71, %91 : vector<8x256xf32>
    %93 = vector.extract_strided_slice %2 {offsets = [4, 0, 0], sizes = [1, 8, 4], strides = [1, 1, 1]} : vector<9x8x4xbf16> to vector<1x8x4xbf16>
    %94 = vector.shape_cast %93 : vector<1x8x4xbf16> to vector<8x4xbf16>
    %95 = arith.truncf %9 : vector<4x256xf32> to vector<4x256xbf16>
    %cst_37 = arith.constant dense<0.000000e+00> : vector<8x256xf32>
    %96 = tpu.matmul %94, %95, %cst_37 {dimension_numbers = #tpu.dot_dimension_numbers<[1], [0], [0], [1], [0, 0, 1, 1], [], []>} : vector<8x4xbf16>, vector<4x256xbf16>, vector<8x256xf32> -> vector<8x256xf32>
    %97 = arith.addf %92, %96 : vector<8x256xf32>
    %98 = vector.extract_strided_slice %2 {offsets = [5, 0, 0], sizes = [1, 8, 4], strides = [1, 1, 1]} : vector<9x8x4xbf16> to vector<1x8x4xbf16>
    %99 = vector.shape_cast %98 : vector<1x8x4xbf16> to vector<8x4xbf16>
    %c255_i32 = arith.constant 255 : i32
    %100 = tpu.dynamic_rotate %9 by %c255_i32 dim 1 : vector<4x256xf32>, i32 -> vector<4x256xf32>
    %c0_i32_38 = arith.constant 0 : i32
    %101 = vector.broadcast %c0_i32_38 : i32 to vector<1x256xi32>
    %102 = arith.cmpi sge, %0, %101 : vector<1x256xi32>
    %c16_i32_39 = arith.constant 16 : i32
    %103 = vector.broadcast %c16_i32_39 : i32 to vector<1x256xi32>
    %104 = arith.cmpi slt, %0, %103 : vector<1x256xi32>
    %105 = arith.andi %102, %104 : vector<1x256xi1>
    %c-1_i32_40 = arith.constant -1 : i32
    %106 = vector.broadcast %c-1_i32_40 : i32 to vector<1x256xi32>
    %107 = arith.cmpi sge, %1, %106 : vector<1x256xi32>
    %108 = arith.andi %105, %107 : vector<1x256xi1>
    %c15_i32_41 = arith.constant 15 : i32
    %109 = vector.broadcast %c15_i32_41 : i32 to vector<1x256xi32>
    %110 = arith.cmpi slt, %1, %109 : vector<1x256xi32>
    %111 = arith.andi %108, %110 : vector<1x256xi1>
    %112 = arith.extui %111 : vector<1x256xi1> to vector<1x256xi32>
    %113 = arith.sitofp %112 : vector<1x256xi32> to vector<1x256xf32>
    %114 = vector.broadcast %113 : vector<1x256xf32> to vector<4x256xf32>
    %115 = arith.mulf %100, %114 : vector<4x256xf32>
    %116 = arith.truncf %115 : vector<4x256xf32> to vector<4x256xbf16>
    %cst_42 = arith.constant dense<0.000000e+00> : vector<8x256xf32>
    %117 = tpu.matmul %99, %116, %cst_42 {dimension_numbers = #tpu.dot_dimension_numbers<[1], [0], [0], [1], [0, 0, 1, 1], [], []>} : vector<8x4xbf16>, vector<4x256xbf16>, vector<8x256xf32> -> vector<8x256xf32>
    %118 = arith.addf %97, %117 : vector<8x256xf32>
    %119 = vector.extract_strided_slice %2 {offsets = [6, 0, 0], sizes = [1, 8, 4], strides = [1, 1, 1]} : vector<9x8x4xbf16> to vector<1x8x4xbf16>
    %120 = vector.shape_cast %119 : vector<1x8x4xbf16> to vector<8x4xbf16>
    %c241_i32 = arith.constant 241 : i32
    %121 = tpu.dynamic_rotate %9 by %c241_i32 dim 1 : vector<4x256xf32>, i32 -> vector<4x256xf32>
    %c-1_i32_43 = arith.constant -1 : i32
    %122 = vector.broadcast %c-1_i32_43 : i32 to vector<1x256xi32>
    %123 = arith.cmpi sge, %0, %122 : vector<1x256xi32>
    %c15_i32_44 = arith.constant 15 : i32
    %124 = vector.broadcast %c15_i32_44 : i32 to vector<1x256xi32>
    %125 = arith.cmpi slt, %0, %124 : vector<1x256xi32>
    %126 = arith.andi %123, %125 : vector<1x256xi1>
    %c1_i32_45 = arith.constant 1 : i32
    %127 = vector.broadcast %c1_i32_45 : i32 to vector<1x256xi32>
    %128 = arith.cmpi sge, %1, %127 : vector<1x256xi32>
    %129 = arith.andi %126, %128 : vector<1x256xi1>
    %c17_i32_46 = arith.constant 17 : i32
    %130 = vector.broadcast %c17_i32_46 : i32 to vector<1x256xi32>
    %131 = arith.cmpi slt, %1, %130 : vector<1x256xi32>
    %132 = arith.andi %129, %131 : vector<1x256xi1>
    %133 = arith.extui %132 : vector<1x256xi1> to vector<1x256xi32>
    %134 = arith.sitofp %133 : vector<1x256xi32> to vector<1x256xf32>
    %135 = vector.broadcast %134 : vector<1x256xf32> to vector<4x256xf32>
    %136 = arith.mulf %121, %135 : vector<4x256xf32>
    %137 = arith.truncf %136 : vector<4x256xf32> to vector<4x256xbf16>
    %cst_47 = arith.constant dense<0.000000e+00> : vector<8x256xf32>
    %138 = tpu.matmul %120, %137, %cst_47 {dimension_numbers = #tpu.dot_dimension_numbers<[1], [0], [0], [1], [0, 0, 1, 1], [], []>} : vector<8x4xbf16>, vector<4x256xbf16>, vector<8x256xf32> -> vector<8x256xf32>
    %139 = arith.addf %118, %138 : vector<8x256xf32>
    %140 = vector.extract_strided_slice %2 {offsets = [7, 0, 0], sizes = [1, 8, 4], strides = [1, 1, 1]} : vector<9x8x4xbf16> to vector<1x8x4xbf16>
    %141 = vector.shape_cast %140 : vector<1x8x4xbf16> to vector<8x4xbf16>
    %c240_i32 = arith.constant 240 : i32
    %142 = tpu.dynamic_rotate %9 by %c240_i32 dim 1 : vector<4x256xf32>, i32 -> vector<4x256xf32>
    %c-1_i32_48 = arith.constant -1 : i32
    %143 = vector.broadcast %c-1_i32_48 : i32 to vector<1x256xi32>
    %144 = arith.cmpi sge, %0, %143 : vector<1x256xi32>
    %c15_i32_49 = arith.constant 15 : i32
    %145 = vector.broadcast %c15_i32_49 : i32 to vector<1x256xi32>
    %146 = arith.cmpi slt, %0, %145 : vector<1x256xi32>
    %147 = arith.andi %144, %146 : vector<1x256xi1>
    %c0_i32_50 = arith.constant 0 : i32
    %148 = vector.broadcast %c0_i32_50 : i32 to vector<1x256xi32>
    %149 = arith.cmpi sge, %1, %148 : vector<1x256xi32>
    %150 = arith.andi %147, %149 : vector<1x256xi1>
    %c16_i32_51 = arith.constant 16 : i32
    %151 = vector.broadcast %c16_i32_51 : i32 to vector<1x256xi32>
    %152 = arith.cmpi slt, %1, %151 : vector<1x256xi32>
    %153 = arith.andi %150, %152 : vector<1x256xi1>
    %154 = arith.extui %153 : vector<1x256xi1> to vector<1x256xi32>
    %155 = arith.sitofp %154 : vector<1x256xi32> to vector<1x256xf32>
    %156 = vector.broadcast %155 : vector<1x256xf32> to vector<4x256xf32>
    %157 = arith.mulf %142, %156 : vector<4x256xf32>
    %158 = arith.truncf %157 : vector<4x256xf32> to vector<4x256xbf16>
    %cst_52 = arith.constant dense<0.000000e+00> : vector<8x256xf32>
    %159 = tpu.matmul %141, %158, %cst_52 {dimension_numbers = #tpu.dot_dimension_numbers<[1], [0], [0], [1], [0, 0, 1, 1], [], []>} : vector<8x4xbf16>, vector<4x256xbf16>, vector<8x256xf32> -> vector<8x256xf32>
    %160 = arith.addf %139, %159 : vector<8x256xf32>
    %161 = vector.extract_strided_slice %2 {offsets = [8, 0, 0], sizes = [1, 8, 4], strides = [1, 1, 1]} : vector<9x8x4xbf16> to vector<1x8x4xbf16>
    %162 = vector.shape_cast %161 : vector<1x8x4xbf16> to vector<8x4xbf16>
    %c239_i32 = arith.constant 239 : i32
    %163 = tpu.dynamic_rotate %9 by %c239_i32 dim 1 : vector<4x256xf32>, i32 -> vector<4x256xf32>
    %c-1_i32_53 = arith.constant -1 : i32
    %164 = vector.broadcast %c-1_i32_53 : i32 to vector<1x256xi32>
    %165 = arith.cmpi sge, %0, %164 : vector<1x256xi32>
    %c15_i32_54 = arith.constant 15 : i32
    %166 = vector.broadcast %c15_i32_54 : i32 to vector<1x256xi32>
    %167 = arith.cmpi slt, %0, %166 : vector<1x256xi32>
    %168 = arith.andi %165, %167 : vector<1x256xi1>
    %c-1_i32_55 = arith.constant -1 : i32
    %169 = vector.broadcast %c-1_i32_55 : i32 to vector<1x256xi32>
    %170 = arith.cmpi sge, %1, %169 : vector<1x256xi32>
    %171 = arith.andi %168, %170 : vector<1x256xi1>
    %c15_i32_56 = arith.constant 15 : i32
    %172 = vector.broadcast %c15_i32_56 : i32 to vector<1x256xi32>
    %173 = arith.cmpi slt, %1, %172 : vector<1x256xi32>
    %174 = arith.andi %171, %173 : vector<1x256xi1>
    %175 = arith.extui %174 : vector<1x256xi1> to vector<1x256xi32>
    %176 = arith.sitofp %175 : vector<1x256xi32> to vector<1x256xf32>
    %177 = vector.broadcast %176 : vector<1x256xf32> to vector<4x256xf32>
    %178 = arith.mulf %163, %177 : vector<4x256xf32>
    %179 = arith.truncf %178 : vector<4x256xf32> to vector<4x256xbf16>
    %cst_57 = arith.constant dense<0.000000e+00> : vector<8x256xf32>
    %180 = tpu.matmul %162, %179, %cst_57 {dimension_numbers = #tpu.dot_dimension_numbers<[1], [0], [0], [1], [0, 0, 1, 1], [], []>} : vector<8x4xbf16>, vector<4x256xbf16>, vector<8x256xf32> -> vector<8x256xf32>
    %181 = arith.addf %160, %180 : vector<8x256xf32>
    %182 = vector.broadcast %5 : vector<8x1xf32> to vector<8x256xf32>
    %183 = arith.addf %181, %182 : vector<8x256xf32>
    %184 = vector.extract_strided_slice %3 {offsets = [0, 0, 0], sizes = [1, 8, 8], strides = [1, 1, 1]} : vector<19x8x8xbf16> to vector<1x8x8xbf16>
    %185 = vector.shape_cast %184 : vector<1x8x8xbf16> to vector<8x8xbf16>
    %186 = arith.truncf %183 : vector<8x256xf32> to vector<8x256xbf16>
    %cst_58 = arith.constant dense<0.000000e+00> : vector<8x256xf32>
    %187 = tpu.matmul %185, %186, %cst_58 {dimension_numbers = #tpu.dot_dimension_numbers<[1], [0], [0], [1], [0, 0, 1, 1], [], []>} : vector<8x8xbf16>, vector<8x256xbf16>, vector<8x256xf32> -> vector<8x256xf32>
    %188 = vector.extract_strided_slice %3 {offsets = [1, 0, 0], sizes = [1, 8, 8], strides = [1, 1, 1]} : vector<19x8x8xbf16> to vector<1x8x8xbf16>
    %189 = vector.shape_cast %188 : vector<1x8x8xbf16> to vector<8x8xbf16>
    %c17_i32_59 = arith.constant 17 : i32
    %190 = tpu.dynamic_rotate %183 by %c17_i32_59 dim 1 : vector<8x256xf32>, i32 -> vector<8x256xf32>
    %c1_i32_60 = arith.constant 1 : i32
    %191 = vector.broadcast %c1_i32_60 : i32 to vector<1x256xi32>
    %192 = arith.cmpi sge, %0, %191 : vector<1x256xi32>
    %c17_i32_61 = arith.constant 17 : i32
    %193 = vector.broadcast %c17_i32_61 : i32 to vector<1x256xi32>
    %194 = arith.cmpi slt, %0, %193 : vector<1x256xi32>
    %195 = arith.andi %192, %194 : vector<1x256xi1>
    %c1_i32_62 = arith.constant 1 : i32
    %196 = vector.broadcast %c1_i32_62 : i32 to vector<1x256xi32>
    %197 = arith.cmpi sge, %1, %196 : vector<1x256xi32>
    %198 = arith.andi %195, %197 : vector<1x256xi1>
    %c17_i32_63 = arith.constant 17 : i32
    %199 = vector.broadcast %c17_i32_63 : i32 to vector<1x256xi32>
    %200 = arith.cmpi slt, %1, %199 : vector<1x256xi32>
    %201 = arith.andi %198, %200 : vector<1x256xi1>
    %202 = arith.extui %201 : vector<1x256xi1> to vector<1x256xi32>
    %203 = arith.sitofp %202 : vector<1x256xi32> to vector<1x256xf32>
    %204 = vector.broadcast %203 : vector<1x256xf32> to vector<8x256xf32>
    %205 = arith.mulf %190, %204 : vector<8x256xf32>
    %206 = arith.truncf %205 : vector<8x256xf32> to vector<8x256xbf16>
    %cst_64 = arith.constant dense<0.000000e+00> : vector<8x256xf32>
    %207 = tpu.matmul %189, %206, %cst_64 {dimension_numbers = #tpu.dot_dimension_numbers<[1], [0], [0], [1], [0, 0, 1, 1], [], []>} : vector<8x8xbf16>, vector<8x256xbf16>, vector<8x256xf32> -> vector<8x256xf32>
    %208 = arith.addf %187, %207 : vector<8x256xf32>
    %209 = vector.extract_strided_slice %3 {offsets = [2, 0, 0], sizes = [1, 8, 8], strides = [1, 1, 1]} : vector<19x8x8xbf16> to vector<1x8x8xbf16>
    %210 = vector.shape_cast %209 : vector<1x8x8xbf16> to vector<8x8xbf16>
    %c16_i32_65 = arith.constant 16 : i32
    %211 = tpu.dynamic_rotate %183 by %c16_i32_65 dim 1 : vector<8x256xf32>, i32 -> vector<8x256xf32>
    %c1_i32_66 = arith.constant 1 : i32
    %212 = vector.broadcast %c1_i32_66 : i32 to vector<1x256xi32>
    %213 = arith.cmpi sge, %0, %212 : vector<1x256xi32>
    %c17_i32_67 = arith.constant 17 : i32
    %214 = vector.broadcast %c17_i32_67 : i32 to vector<1x256xi32>
    %215 = arith.cmpi slt, %0, %214 : vector<1x256xi32>
    %216 = arith.andi %213, %215 : vector<1x256xi1>
    %c0_i32_68 = arith.constant 0 : i32
    %217 = vector.broadcast %c0_i32_68 : i32 to vector<1x256xi32>
    %218 = arith.cmpi sge, %1, %217 : vector<1x256xi32>
    %219 = arith.andi %216, %218 : vector<1x256xi1>
    %c16_i32_69 = arith.constant 16 : i32
    %220 = vector.broadcast %c16_i32_69 : i32 to vector<1x256xi32>
    %221 = arith.cmpi slt, %1, %220 : vector<1x256xi32>
    %222 = arith.andi %219, %221 : vector<1x256xi1>
    %223 = arith.extui %222 : vector<1x256xi1> to vector<1x256xi32>
    %224 = arith.sitofp %223 : vector<1x256xi32> to vector<1x256xf32>
    %225 = vector.broadcast %224 : vector<1x256xf32> to vector<8x256xf32>
    %226 = arith.mulf %211, %225 : vector<8x256xf32>
    %227 = arith.truncf %226 : vector<8x256xf32> to vector<8x256xbf16>
    %cst_70 = arith.constant dense<0.000000e+00> : vector<8x256xf32>
    %228 = tpu.matmul %210, %227, %cst_70 {dimension_numbers = #tpu.dot_dimension_numbers<[1], [0], [0], [1], [0, 0, 1, 1], [], []>} : vector<8x8xbf16>, vector<8x256xbf16>, vector<8x256xf32> -> vector<8x256xf32>
    %229 = arith.addf %208, %228 : vector<8x256xf32>
    %230 = vector.extract_strided_slice %3 {offsets = [3, 0, 0], sizes = [1, 8, 8], strides = [1, 1, 1]} : vector<19x8x8xbf16> to vector<1x8x8xbf16>
    %231 = vector.shape_cast %230 : vector<1x8x8xbf16> to vector<8x8xbf16>
    %c15_i32_71 = arith.constant 15 : i32
    %232 = tpu.dynamic_rotate %183 by %c15_i32_71 dim 1 : vector<8x256xf32>, i32 -> vector<8x256xf32>
    %c1_i32_72 = arith.constant 1 : i32
    %233 = vector.broadcast %c1_i32_72 : i32 to vector<1x256xi32>
    %234 = arith.cmpi sge, %0, %233 : vector<1x256xi32>
    %c17_i32_73 = arith.constant 17 : i32
    %235 = vector.broadcast %c17_i32_73 : i32 to vector<1x256xi32>
    %236 = arith.cmpi slt, %0, %235 : vector<1x256xi32>
    %237 = arith.andi %234, %236 : vector<1x256xi1>
    %c-1_i32_74 = arith.constant -1 : i32
    %238 = vector.broadcast %c-1_i32_74 : i32 to vector<1x256xi32>
    %239 = arith.cmpi sge, %1, %238 : vector<1x256xi32>
    %240 = arith.andi %237, %239 : vector<1x256xi1>
    %c15_i32_75 = arith.constant 15 : i32
    %241 = vector.broadcast %c15_i32_75 : i32 to vector<1x256xi32>
    %242 = arith.cmpi slt, %1, %241 : vector<1x256xi32>
    %243 = arith.andi %240, %242 : vector<1x256xi1>
    %244 = arith.extui %243 : vector<1x256xi1> to vector<1x256xi32>
    %245 = arith.sitofp %244 : vector<1x256xi32> to vector<1x256xf32>
    %246 = vector.broadcast %245 : vector<1x256xf32> to vector<8x256xf32>
    %247 = arith.mulf %232, %246 : vector<8x256xf32>
    %248 = arith.truncf %247 : vector<8x256xf32> to vector<8x256xbf16>
    %cst_76 = arith.constant dense<0.000000e+00> : vector<8x256xf32>
    %249 = tpu.matmul %231, %248, %cst_76 {dimension_numbers = #tpu.dot_dimension_numbers<[1], [0], [0], [1], [0, 0, 1, 1], [], []>} : vector<8x8xbf16>, vector<8x256xbf16>, vector<8x256xf32> -> vector<8x256xf32>
    %250 = arith.addf %229, %249 : vector<8x256xf32>
    %251 = vector.extract_strided_slice %3 {offsets = [4, 0, 0], sizes = [1, 8, 8], strides = [1, 1, 1]} : vector<19x8x8xbf16> to vector<1x8x8xbf16>
    %252 = vector.shape_cast %251 : vector<1x8x8xbf16> to vector<8x8xbf16>
    %c1_i32_77 = arith.constant 1 : i32
    %253 = tpu.dynamic_rotate %183 by %c1_i32_77 dim 1 : vector<8x256xf32>, i32 -> vector<8x256xf32>
    %c0_i32_78 = arith.constant 0 : i32
    %254 = vector.broadcast %c0_i32_78 : i32 to vector<1x256xi32>
    %255 = arith.cmpi sge, %0, %254 : vector<1x256xi32>
    %c16_i32_79 = arith.constant 16 : i32
    %256 = vector.broadcast %c16_i32_79 : i32 to vector<1x256xi32>
    %257 = arith.cmpi slt, %0, %256 : vector<1x256xi32>
    %258 = arith.andi %255, %257 : vector<1x256xi1>
    %c1_i32_80 = arith.constant 1 : i32
    %259 = vector.broadcast %c1_i32_80 : i32 to vector<1x256xi32>
    %260 = arith.cmpi sge, %1, %259 : vector<1x256xi32>
    %261 = arith.andi %258, %260 : vector<1x256xi1>
    %c17_i32_81 = arith.constant 17 : i32
    %262 = vector.broadcast %c17_i32_81 : i32 to vector<1x256xi32>
    %263 = arith.cmpi slt, %1, %262 : vector<1x256xi32>
    %264 = arith.andi %261, %263 : vector<1x256xi1>
    %265 = arith.extui %264 : vector<1x256xi1> to vector<1x256xi32>
    %266 = arith.sitofp %265 : vector<1x256xi32> to vector<1x256xf32>
    %267 = vector.broadcast %266 : vector<1x256xf32> to vector<8x256xf32>
    %268 = arith.mulf %253, %267 : vector<8x256xf32>
    %269 = arith.truncf %268 : vector<8x256xf32> to vector<8x256xbf16>
    %cst_82 = arith.constant dense<0.000000e+00> : vector<8x256xf32>
    %270 = tpu.matmul %252, %269, %cst_82 {dimension_numbers = #tpu.dot_dimension_numbers<[1], [0], [0], [1], [0, 0, 1, 1], [], []>} : vector<8x8xbf16>, vector<8x256xbf16>, vector<8x256xf32> -> vector<8x256xf32>
    %271 = arith.addf %250, %270 : vector<8x256xf32>
    %272 = vector.extract_strided_slice %3 {offsets = [5, 0, 0], sizes = [1, 8, 8], strides = [1, 1, 1]} : vector<19x8x8xbf16> to vector<1x8x8xbf16>
    %273 = vector.shape_cast %272 : vector<1x8x8xbf16> to vector<8x8xbf16>
    %274 = arith.truncf %183 : vector<8x256xf32> to vector<8x256xbf16>
    %cst_83 = arith.constant dense<0.000000e+00> : vector<8x256xf32>
    %275 = tpu.matmul %273, %274, %cst_83 {dimension_numbers = #tpu.dot_dimension_numbers<[1], [0], [0], [1], [0, 0, 1, 1], [], []>} : vector<8x8xbf16>, vector<8x256xbf16>, vector<8x256xf32> -> vector<8x256xf32>
    %276 = arith.addf %271, %275 : vector<8x256xf32>
    %277 = vector.extract_strided_slice %3 {offsets = [6, 0, 0], sizes = [1, 8, 8], strides = [1, 1, 1]} : vector<19x8x8xbf16> to vector<1x8x8xbf16>
    %278 = vector.shape_cast %277 : vector<1x8x8xbf16> to vector<8x8xbf16>
    %c255_i32_84 = arith.constant 255 : i32
    %279 = tpu.dynamic_rotate %183 by %c255_i32_84 dim 1 : vector<8x256xf32>, i32 -> vector<8x256xf32>
    %c0_i32_85 = arith.constant 0 : i32
    %280 = vector.broadcast %c0_i32_85 : i32 to vector<1x256xi32>
    %281 = arith.cmpi sge, %0, %280 : vector<1x256xi32>
    %c16_i32_86 = arith.constant 16 : i32
    %282 = vector.broadcast %c16_i32_86 : i32 to vector<1x256xi32>
    %283 = arith.cmpi slt, %0, %282 : vector<1x256xi32>
    %284 = arith.andi %281, %283 : vector<1x256xi1>
    %c-1_i32_87 = arith.constant -1 : i32
    %285 = vector.broadcast %c-1_i32_87 : i32 to vector<1x256xi32>
    %286 = arith.cmpi sge, %1, %285 : vector<1x256xi32>
    %287 = arith.andi %284, %286 : vector<1x256xi1>
    %c15_i32_88 = arith.constant 15 : i32
    %288 = vector.broadcast %c15_i32_88 : i32 to vector<1x256xi32>
    %289 = arith.cmpi slt, %1, %288 : vector<1x256xi32>
    %290 = arith.andi %287, %289 : vector<1x256xi1>
    %291 = arith.extui %290 : vector<1x256xi1> to vector<1x256xi32>
    %292 = arith.sitofp %291 : vector<1x256xi32> to vector<1x256xf32>
    %293 = vector.broadcast %292 : vector<1x256xf32> to vector<8x256xf32>
    %294 = arith.mulf %279, %293 : vector<8x256xf32>
    %295 = arith.truncf %294 : vector<8x256xf32> to vector<8x256xbf16>
    %cst_89 = arith.constant dense<0.000000e+00> : vector<8x256xf32>
    %296 = tpu.matmul %278, %295, %cst_89 {dimension_numbers = #tpu.dot_dimension_numbers<[1], [0], [0], [1], [0, 0, 1, 1], [], []>} : vector<8x8xbf16>, vector<8x256xbf16>, vector<8x256xf32> -> vector<8x256xf32>
    %297 = arith.addf %276, %296 : vector<8x256xf32>
    %298 = vector.extract_strided_slice %3 {offsets = [7, 0, 0], sizes = [1, 8, 8], strides = [1, 1, 1]} : vector<19x8x8xbf16> to vector<1x8x8xbf16>
    %299 = vector.shape_cast %298 : vector<1x8x8xbf16> to vector<8x8xbf16>
    %c241_i32_90 = arith.constant 241 : i32
    %300 = tpu.dynamic_rotate %183 by %c241_i32_90 dim 1 : vector<8x256xf32>, i32 -> vector<8x256xf32>
    %c-1_i32_91 = arith.constant -1 : i32
    %301 = vector.broadcast %c-1_i32_91 : i32 to vector<1x256xi32>
    %302 = arith.cmpi sge, %0, %301 : vector<1x256xi32>
    %c15_i32_92 = arith.constant 15 : i32
    %303 = vector.broadcast %c15_i32_92 : i32 to vector<1x256xi32>
    %304 = arith.cmpi slt, %0, %303 : vector<1x256xi32>
    %305 = arith.andi %302, %304 : vector<1x256xi1>
    %c1_i32_93 = arith.constant 1 : i32
    %306 = vector.broadcast %c1_i32_93 : i32 to vector<1x256xi32>
    %307 = arith.cmpi sge, %1, %306 : vector<1x256xi32>
    %308 = arith.andi %305, %307 : vector<1x256xi1>
    %c17_i32_94 = arith.constant 17 : i32
    %309 = vector.broadcast %c17_i32_94 : i32 to vector<1x256xi32>
    %310 = arith.cmpi slt, %1, %309 : vector<1x256xi32>
    %311 = arith.andi %308, %310 : vector<1x256xi1>
    %312 = arith.extui %311 : vector<1x256xi1> to vector<1x256xi32>
    %313 = arith.sitofp %312 : vector<1x256xi32> to vector<1x256xf32>
    %314 = vector.broadcast %313 : vector<1x256xf32> to vector<8x256xf32>
    %315 = arith.mulf %300, %314 : vector<8x256xf32>
    %316 = arith.truncf %315 : vector<8x256xf32> to vector<8x256xbf16>
    %cst_95 = arith.constant dense<0.000000e+00> : vector<8x256xf32>
    %317 = tpu.matmul %299, %316, %cst_95 {dimension_numbers = #tpu.dot_dimension_numbers<[1], [0], [0], [1], [0, 0, 1, 1], [], []>} : vector<8x8xbf16>, vector<8x256xbf16>, vector<8x256xf32> -> vector<8x256xf32>
    %318 = arith.addf %297, %317 : vector<8x256xf32>
    %319 = vector.extract_strided_slice %3 {offsets = [8, 0, 0], sizes = [1, 8, 8], strides = [1, 1, 1]} : vector<19x8x8xbf16> to vector<1x8x8xbf16>
    %320 = vector.shape_cast %319 : vector<1x8x8xbf16> to vector<8x8xbf16>
    %c240_i32_96 = arith.constant 240 : i32
    %321 = tpu.dynamic_rotate %183 by %c240_i32_96 dim 1 : vector<8x256xf32>, i32 -> vector<8x256xf32>
    %c-1_i32_97 = arith.constant -1 : i32
    %322 = vector.broadcast %c-1_i32_97 : i32 to vector<1x256xi32>
    %323 = arith.cmpi sge, %0, %322 : vector<1x256xi32>
    %c15_i32_98 = arith.constant 15 : i32
    %324 = vector.broadcast %c15_i32_98 : i32 to vector<1x256xi32>
    %325 = arith.cmpi slt, %0, %324 : vector<1x256xi32>
    %326 = arith.andi %323, %325 : vector<1x256xi1>
    %c0_i32_99 = arith.constant 0 : i32
    %327 = vector.broadcast %c0_i32_99 : i32 to vector<1x256xi32>
    %328 = arith.cmpi sge, %1, %327 : vector<1x256xi32>
    %329 = arith.andi %326, %328 : vector<1x256xi1>
    %c16_i32_100 = arith.constant 16 : i32
    %330 = vector.broadcast %c16_i32_100 : i32 to vector<1x256xi32>
    %331 = arith.cmpi slt, %1, %330 : vector<1x256xi32>
    %332 = arith.andi %329, %331 : vector<1x256xi1>
    %333 = arith.extui %332 : vector<1x256xi1> to vector<1x256xi32>
    %334 = arith.sitofp %333 : vector<1x256xi32> to vector<1x256xf32>
    %335 = vector.broadcast %334 : vector<1x256xf32> to vector<8x256xf32>
    %336 = arith.mulf %321, %335 : vector<8x256xf32>
    %337 = arith.truncf %336 : vector<8x256xf32> to vector<8x256xbf16>
    %cst_101 = arith.constant dense<0.000000e+00> : vector<8x256xf32>
    %338 = tpu.matmul %320, %337, %cst_101 {dimension_numbers = #tpu.dot_dimension_numbers<[1], [0], [0], [1], [0, 0, 1, 1], [], []>} : vector<8x8xbf16>, vector<8x256xbf16>, vector<8x256xf32> -> vector<8x256xf32>
    %339 = arith.addf %318, %338 : vector<8x256xf32>
    %340 = vector.extract_strided_slice %3 {offsets = [9, 0, 0], sizes = [1, 8, 8], strides = [1, 1, 1]} : vector<19x8x8xbf16> to vector<1x8x8xbf16>
    %341 = vector.shape_cast %340 : vector<1x8x8xbf16> to vector<8x8xbf16>
    %c239_i32_102 = arith.constant 239 : i32
    %342 = tpu.dynamic_rotate %183 by %c239_i32_102 dim 1 : vector<8x256xf32>, i32 -> vector<8x256xf32>
    %c-1_i32_103 = arith.constant -1 : i32
    %343 = vector.broadcast %c-1_i32_103 : i32 to vector<1x256xi32>
    %344 = arith.cmpi sge, %0, %343 : vector<1x256xi32>
    %c15_i32_104 = arith.constant 15 : i32
    %345 = vector.broadcast %c15_i32_104 : i32 to vector<1x256xi32>
    %346 = arith.cmpi slt, %0, %345 : vector<1x256xi32>
    %347 = arith.andi %344, %346 : vector<1x256xi1>
    %c-1_i32_105 = arith.constant -1 : i32
    %348 = vector.broadcast %c-1_i32_105 : i32 to vector<1x256xi32>
    %349 = arith.cmpi sge, %1, %348 : vector<1x256xi32>
    %350 = arith.andi %347, %349 : vector<1x256xi1>
    %c15_i32_106 = arith.constant 15 : i32
    %351 = vector.broadcast %c15_i32_106 : i32 to vector<1x256xi32>
    %352 = arith.cmpi slt, %1, %351 : vector<1x256xi32>
    %353 = arith.andi %350, %352 : vector<1x256xi1>
    %354 = arith.extui %353 : vector<1x256xi1> to vector<1x256xi32>
    %355 = arith.sitofp %354 : vector<1x256xi32> to vector<1x256xf32>
    %356 = vector.broadcast %355 : vector<1x256xf32> to vector<8x256xf32>
    %357 = arith.mulf %342, %356 : vector<8x256xf32>
    %358 = arith.truncf %357 : vector<8x256xf32> to vector<8x256xbf16>
    %cst_107 = arith.constant dense<0.000000e+00> : vector<8x256xf32>
    %359 = tpu.matmul %341, %358, %cst_107 {dimension_numbers = #tpu.dot_dimension_numbers<[1], [0], [0], [1], [0, 0, 1, 1], [], []>} : vector<8x8xbf16>, vector<8x256xbf16>, vector<8x256xf32> -> vector<8x256xf32>
    %360 = arith.addf %339, %359 : vector<8x256xf32>
    %361 = vector.extract_strided_slice %3 {offsets = [10, 0, 0], sizes = [1, 8, 8], strides = [1, 1, 1]} : vector<19x8x8xbf16> to vector<1x8x8xbf16>
    %362 = vector.shape_cast %361 : vector<1x8x8xbf16> to vector<8x8xbf16>
    %c34_i32 = arith.constant 34 : i32
    %363 = tpu.dynamic_rotate %183 by %c34_i32 dim 1 : vector<8x256xf32>, i32 -> vector<8x256xf32>
    %c2_i32 = arith.constant 2 : i32
    %364 = vector.broadcast %c2_i32 : i32 to vector<1x256xi32>
    %365 = arith.cmpi sge, %0, %364 : vector<1x256xi32>
    %c18_i32 = arith.constant 18 : i32
    %366 = vector.broadcast %c18_i32 : i32 to vector<1x256xi32>
    %367 = arith.cmpi slt, %0, %366 : vector<1x256xi32>
    %368 = arith.andi %365, %367 : vector<1x256xi1>
    %c2_i32_108 = arith.constant 2 : i32
    %369 = vector.broadcast %c2_i32_108 : i32 to vector<1x256xi32>
    %370 = arith.cmpi sge, %1, %369 : vector<1x256xi32>
    %371 = arith.andi %368, %370 : vector<1x256xi1>
    %c18_i32_109 = arith.constant 18 : i32
    %372 = vector.broadcast %c18_i32_109 : i32 to vector<1x256xi32>
    %373 = arith.cmpi slt, %1, %372 : vector<1x256xi32>
    %374 = arith.andi %371, %373 : vector<1x256xi1>
    %375 = arith.extui %374 : vector<1x256xi1> to vector<1x256xi32>
    %376 = arith.sitofp %375 : vector<1x256xi32> to vector<1x256xf32>
    %377 = vector.broadcast %376 : vector<1x256xf32> to vector<8x256xf32>
    %378 = arith.mulf %363, %377 : vector<8x256xf32>
    %379 = arith.truncf %378 : vector<8x256xf32> to vector<8x256xbf16>
    %cst_110 = arith.constant dense<0.000000e+00> : vector<8x256xf32>
    %380 = tpu.matmul %362, %379, %cst_110 {dimension_numbers = #tpu.dot_dimension_numbers<[1], [0], [0], [1], [0, 0, 1, 1], [], []>} : vector<8x8xbf16>, vector<8x256xbf16>, vector<8x256xf32> -> vector<8x256xf32>
    %381 = arith.addf %360, %380 : vector<8x256xf32>
    %382 = vector.extract_strided_slice %3 {offsets = [11, 0, 0], sizes = [1, 8, 8], strides = [1, 1, 1]} : vector<19x8x8xbf16> to vector<1x8x8xbf16>
    %383 = vector.shape_cast %382 : vector<1x8x8xbf16> to vector<8x8xbf16>
    %c32_i32 = arith.constant 32 : i32
    %384 = tpu.dynamic_rotate %183 by %c32_i32 dim 1 : vector<8x256xf32>, i32 -> vector<8x256xf32>
    %c2_i32_111 = arith.constant 2 : i32
    %385 = vector.broadcast %c2_i32_111 : i32 to vector<1x256xi32>
    %386 = arith.cmpi sge, %0, %385 : vector<1x256xi32>
    %c18_i32_112 = arith.constant 18 : i32
    %387 = vector.broadcast %c18_i32_112 : i32 to vector<1x256xi32>
    %388 = arith.cmpi slt, %0, %387 : vector<1x256xi32>
    %389 = arith.andi %386, %388 : vector<1x256xi1>
    %c0_i32_113 = arith.constant 0 : i32
    %390 = vector.broadcast %c0_i32_113 : i32 to vector<1x256xi32>
    %391 = arith.cmpi sge, %1, %390 : vector<1x256xi32>
    %392 = arith.andi %389, %391 : vector<1x256xi1>
    %c16_i32_114 = arith.constant 16 : i32
    %393 = vector.broadcast %c16_i32_114 : i32 to vector<1x256xi32>
    %394 = arith.cmpi slt, %1, %393 : vector<1x256xi32>
    %395 = arith.andi %392, %394 : vector<1x256xi1>
    %396 = arith.extui %395 : vector<1x256xi1> to vector<1x256xi32>
    %397 = arith.sitofp %396 : vector<1x256xi32> to vector<1x256xf32>
    %398 = vector.broadcast %397 : vector<1x256xf32> to vector<8x256xf32>
    %399 = arith.mulf %384, %398 : vector<8x256xf32>
    %400 = arith.truncf %399 : vector<8x256xf32> to vector<8x256xbf16>
    %cst_115 = arith.constant dense<0.000000e+00> : vector<8x256xf32>
    %401 = tpu.matmul %383, %400, %cst_115 {dimension_numbers = #tpu.dot_dimension_numbers<[1], [0], [0], [1], [0, 0, 1, 1], [], []>} : vector<8x8xbf16>, vector<8x256xbf16>, vector<8x256xf32> -> vector<8x256xf32>
    %402 = arith.addf %381, %401 : vector<8x256xf32>
    %403 = vector.extract_strided_slice %3 {offsets = [12, 0, 0], sizes = [1, 8, 8], strides = [1, 1, 1]} : vector<19x8x8xbf16> to vector<1x8x8xbf16>
    %404 = vector.shape_cast %403 : vector<1x8x8xbf16> to vector<8x8xbf16>
    %c30_i32 = arith.constant 30 : i32
    %405 = tpu.dynamic_rotate %183 by %c30_i32 dim 1 : vector<8x256xf32>, i32 -> vector<8x256xf32>
    %c2_i32_116 = arith.constant 2 : i32
    %406 = vector.broadcast %c2_i32_116 : i32 to vector<1x256xi32>
    %407 = arith.cmpi sge, %0, %406 : vector<1x256xi32>
    %c18_i32_117 = arith.constant 18 : i32
    %408 = vector.broadcast %c18_i32_117 : i32 to vector<1x256xi32>
    %409 = arith.cmpi slt, %0, %408 : vector<1x256xi32>
    %410 = arith.andi %407, %409 : vector<1x256xi1>
    %c-2_i32 = arith.constant -2 : i32
    %411 = vector.broadcast %c-2_i32 : i32 to vector<1x256xi32>
    %412 = arith.cmpi sge, %1, %411 : vector<1x256xi32>
    %413 = arith.andi %410, %412 : vector<1x256xi1>
    %c14_i32 = arith.constant 14 : i32
    %414 = vector.broadcast %c14_i32 : i32 to vector<1x256xi32>
    %415 = arith.cmpi slt, %1, %414 : vector<1x256xi32>
    %416 = arith.andi %413, %415 : vector<1x256xi1>
    %417 = arith.extui %416 : vector<1x256xi1> to vector<1x256xi32>
    %418 = arith.sitofp %417 : vector<1x256xi32> to vector<1x256xf32>
    %419 = vector.broadcast %418 : vector<1x256xf32> to vector<8x256xf32>
    %420 = arith.mulf %405, %419 : vector<8x256xf32>
    %421 = arith.truncf %420 : vector<8x256xf32> to vector<8x256xbf16>
    %cst_118 = arith.constant dense<0.000000e+00> : vector<8x256xf32>
    %422 = tpu.matmul %404, %421, %cst_118 {dimension_numbers = #tpu.dot_dimension_numbers<[1], [0], [0], [1], [0, 0, 1, 1], [], []>} : vector<8x8xbf16>, vector<8x256xbf16>, vector<8x256xf32> -> vector<8x256xf32>
    %423 = arith.addf %402, %422 : vector<8x256xf32>
    %424 = vector.extract_strided_slice %3 {offsets = [13, 0, 0], sizes = [1, 8, 8], strides = [1, 1, 1]} : vector<19x8x8xbf16> to vector<1x8x8xbf16>
    %425 = vector.shape_cast %424 : vector<1x8x8xbf16> to vector<8x8xbf16>
    %c2_i32_119 = arith.constant 2 : i32
    %426 = tpu.dynamic_rotate %183 by %c2_i32_119 dim 1 : vector<8x256xf32>, i32 -> vector<8x256xf32>
    %c0_i32_120 = arith.constant 0 : i32
    %427 = vector.broadcast %c0_i32_120 : i32 to vector<1x256xi32>
    %428 = arith.cmpi sge, %0, %427 : vector<1x256xi32>
    %c16_i32_121 = arith.constant 16 : i32
    %429 = vector.broadcast %c16_i32_121 : i32 to vector<1x256xi32>
    %430 = arith.cmpi slt, %0, %429 : vector<1x256xi32>
    %431 = arith.andi %428, %430 : vector<1x256xi1>
    %c2_i32_122 = arith.constant 2 : i32
    %432 = vector.broadcast %c2_i32_122 : i32 to vector<1x256xi32>
    %433 = arith.cmpi sge, %1, %432 : vector<1x256xi32>
    %434 = arith.andi %431, %433 : vector<1x256xi1>
    %c18_i32_123 = arith.constant 18 : i32
    %435 = vector.broadcast %c18_i32_123 : i32 to vector<1x256xi32>
    %436 = arith.cmpi slt, %1, %435 : vector<1x256xi32>
    %437 = arith.andi %434, %436 : vector<1x256xi1>
    %438 = arith.extui %437 : vector<1x256xi1> to vector<1x256xi32>
    %439 = arith.sitofp %438 : vector<1x256xi32> to vector<1x256xf32>
    %440 = vector.broadcast %439 : vector<1x256xf32> to vector<8x256xf32>
    %441 = arith.mulf %426, %440 : vector<8x256xf32>
    %442 = arith.truncf %441 : vector<8x256xf32> to vector<8x256xbf16>
    %cst_124 = arith.constant dense<0.000000e+00> : vector<8x256xf32>
    %443 = tpu.matmul %425, %442, %cst_124 {dimension_numbers = #tpu.dot_dimension_numbers<[1], [0], [0], [1], [0, 0, 1, 1], [], []>} : vector<8x8xbf16>, vector<8x256xbf16>, vector<8x256xf32> -> vector<8x256xf32>
    %444 = arith.addf %423, %443 : vector<8x256xf32>
    %445 = vector.extract_strided_slice %3 {offsets = [14, 0, 0], sizes = [1, 8, 8], strides = [1, 1, 1]} : vector<19x8x8xbf16> to vector<1x8x8xbf16>
    %446 = vector.shape_cast %445 : vector<1x8x8xbf16> to vector<8x8xbf16>
    %447 = arith.truncf %183 : vector<8x256xf32> to vector<8x256xbf16>
    %cst_125 = arith.constant dense<0.000000e+00> : vector<8x256xf32>
    %448 = tpu.matmul %446, %447, %cst_125 {dimension_numbers = #tpu.dot_dimension_numbers<[1], [0], [0], [1], [0, 0, 1, 1], [], []>} : vector<8x8xbf16>, vector<8x256xbf16>, vector<8x256xf32> -> vector<8x256xf32>
    %449 = arith.addf %444, %448 : vector<8x256xf32>
    %450 = vector.extract_strided_slice %3 {offsets = [15, 0, 0], sizes = [1, 8, 8], strides = [1, 1, 1]} : vector<19x8x8xbf16> to vector<1x8x8xbf16>
    %451 = vector.shape_cast %450 : vector<1x8x8xbf16> to vector<8x8xbf16>
    %c254_i32 = arith.constant 254 : i32
    %452 = tpu.dynamic_rotate %183 by %c254_i32 dim 1 : vector<8x256xf32>, i32 -> vector<8x256xf32>
    %c0_i32_126 = arith.constant 0 : i32
    %453 = vector.broadcast %c0_i32_126 : i32 to vector<1x256xi32>
    %454 = arith.cmpi sge, %0, %453 : vector<1x256xi32>
    %c16_i32_127 = arith.constant 16 : i32
    %455 = vector.broadcast %c16_i32_127 : i32 to vector<1x256xi32>
    %456 = arith.cmpi slt, %0, %455 : vector<1x256xi32>
    %457 = arith.andi %454, %456 : vector<1x256xi1>
    %c-2_i32_128 = arith.constant -2 : i32
    %458 = vector.broadcast %c-2_i32_128 : i32 to vector<1x256xi32>
    %459 = arith.cmpi sge, %1, %458 : vector<1x256xi32>
    %460 = arith.andi %457, %459 : vector<1x256xi1>
    %c14_i32_129 = arith.constant 14 : i32
    %461 = vector.broadcast %c14_i32_129 : i32 to vector<1x256xi32>
    %462 = arith.cmpi slt, %1, %461 : vector<1x256xi32>
    %463 = arith.andi %460, %462 : vector<1x256xi1>
    %464 = arith.extui %463 : vector<1x256xi1> to vector<1x256xi32>
    %465 = arith.sitofp %464 : vector<1x256xi32> to vector<1x256xf32>
    %466 = vector.broadcast %465 : vector<1x256xf32> to vector<8x256xf32>
    %467 = arith.mulf %452, %466 : vector<8x256xf32>
    %468 = arith.truncf %467 : vector<8x256xf32> to vector<8x256xbf16>
    %cst_130 = arith.constant dense<0.000000e+00> : vector<8x256xf32>
    %469 = tpu.matmul %451, %468, %cst_130 {dimension_numbers = #tpu.dot_dimension_numbers<[1], [0], [0], [1], [0, 0, 1, 1], [], []>} : vector<8x8xbf16>, vector<8x256xbf16>, vector<8x256xf32> -> vector<8x256xf32>
    %470 = arith.addf %449, %469 : vector<8x256xf32>
    %471 = vector.extract_strided_slice %3 {offsets = [16, 0, 0], sizes = [1, 8, 8], strides = [1, 1, 1]} : vector<19x8x8xbf16> to vector<1x8x8xbf16>
    %472 = vector.shape_cast %471 : vector<1x8x8xbf16> to vector<8x8xbf16>
    %c226_i32 = arith.constant 226 : i32
    %473 = tpu.dynamic_rotate %183 by %c226_i32 dim 1 : vector<8x256xf32>, i32 -> vector<8x256xf32>
    %c-2_i32_131 = arith.constant -2 : i32
    %474 = vector.broadcast %c-2_i32_131 : i32 to vector<1x256xi32>
    %475 = arith.cmpi sge, %0, %474 : vector<1x256xi32>
    %c14_i32_132 = arith.constant 14 : i32
    %476 = vector.broadcast %c14_i32_132 : i32 to vector<1x256xi32>
    %477 = arith.cmpi slt, %0, %476 : vector<1x256xi32>
    %478 = arith.andi %475, %477 : vector<1x256xi1>
    %c2_i32_133 = arith.constant 2 : i32
    %479 = vector.broadcast %c2_i32_133 : i32 to vector<1x256xi32>
    %480 = arith.cmpi sge, %1, %479 : vector<1x256xi32>
    %481 = arith.andi %478, %480 : vector<1x256xi1>
    %c18_i32_134 = arith.constant 18 : i32
    %482 = vector.broadcast %c18_i32_134 : i32 to vector<1x256xi32>
    %483 = arith.cmpi slt, %1, %482 : vector<1x256xi32>
    %484 = arith.andi %481, %483 : vector<1x256xi1>
    %485 = arith.extui %484 : vector<1x256xi1> to vector<1x256xi32>
    %486 = arith.sitofp %485 : vector<1x256xi32> to vector<1x256xf32>
    %487 = vector.broadcast %486 : vector<1x256xf32> to vector<8x256xf32>
    %488 = arith.mulf %473, %487 : vector<8x256xf32>
    %489 = arith.truncf %488 : vector<8x256xf32> to vector<8x256xbf16>
    %cst_135 = arith.constant dense<0.000000e+00> : vector<8x256xf32>
    %490 = tpu.matmul %472, %489, %cst_135 {dimension_numbers = #tpu.dot_dimension_numbers<[1], [0], [0], [1], [0, 0, 1, 1], [], []>} : vector<8x8xbf16>, vector<8x256xbf16>, vector<8x256xf32> -> vector<8x256xf32>
    %491 = arith.addf %470, %490 : vector<8x256xf32>
    %492 = vector.extract_strided_slice %3 {offsets = [17, 0, 0], sizes = [1, 8, 8], strides = [1, 1, 1]} : vector<19x8x8xbf16> to vector<1x8x8xbf16>
    %493 = vector.shape_cast %492 : vector<1x8x8xbf16> to vector<8x8xbf16>
    %c224_i32 = arith.constant 224 : i32
    %494 = tpu.dynamic_rotate %183 by %c224_i32 dim 1 : vector<8x256xf32>, i32 -> vector<8x256xf32>
    %c-2_i32_136 = arith.constant -2 : i32
    %495 = vector.broadcast %c-2_i32_136 : i32 to vector<1x256xi32>
    %496 = arith.cmpi sge, %0, %495 : vector<1x256xi32>
    %c14_i32_137 = arith.constant 14 : i32
    %497 = vector.broadcast %c14_i32_137 : i32 to vector<1x256xi32>
    %498 = arith.cmpi slt, %0, %497 : vector<1x256xi32>
    %499 = arith.andi %496, %498 : vector<1x256xi1>
    %c0_i32_138 = arith.constant 0 : i32
    %500 = vector.broadcast %c0_i32_138 : i32 to vector<1x256xi32>
    %501 = arith.cmpi sge, %1, %500 : vector<1x256xi32>
    %502 = arith.andi %499, %501 : vector<1x256xi1>
    %c16_i32_139 = arith.constant 16 : i32
    %503 = vector.broadcast %c16_i32_139 : i32 to vector<1x256xi32>
    %504 = arith.cmpi slt, %1, %503 : vector<1x256xi32>
    %505 = arith.andi %502, %504 : vector<1x256xi1>
    %506 = arith.extui %505 : vector<1x256xi1> to vector<1x256xi32>
    %507 = arith.sitofp %506 : vector<1x256xi32> to vector<1x256xf32>
    %508 = vector.broadcast %507 : vector<1x256xf32> to vector<8x256xf32>
    %509 = arith.mulf %494, %508 : vector<8x256xf32>
    %510 = arith.truncf %509 : vector<8x256xf32> to vector<8x256xbf16>
    %cst_140 = arith.constant dense<0.000000e+00> : vector<8x256xf32>
    %511 = tpu.matmul %493, %510, %cst_140 {dimension_numbers = #tpu.dot_dimension_numbers<[1], [0], [0], [1], [0, 0, 1, 1], [], []>} : vector<8x8xbf16>, vector<8x256xbf16>, vector<8x256xf32> -> vector<8x256xf32>
    %512 = arith.addf %491, %511 : vector<8x256xf32>
    %513 = vector.extract_strided_slice %3 {offsets = [18, 0, 0], sizes = [1, 8, 8], strides = [1, 1, 1]} : vector<19x8x8xbf16> to vector<1x8x8xbf16>
    %514 = vector.shape_cast %513 : vector<1x8x8xbf16> to vector<8x8xbf16>
    %c222_i32 = arith.constant 222 : i32
    %515 = tpu.dynamic_rotate %183 by %c222_i32 dim 1 : vector<8x256xf32>, i32 -> vector<8x256xf32>
    %c-2_i32_141 = arith.constant -2 : i32
    %516 = vector.broadcast %c-2_i32_141 : i32 to vector<1x256xi32>
    %517 = arith.cmpi sge, %0, %516 : vector<1x256xi32>
    %c14_i32_142 = arith.constant 14 : i32
    %518 = vector.broadcast %c14_i32_142 : i32 to vector<1x256xi32>
    %519 = arith.cmpi slt, %0, %518 : vector<1x256xi32>
    %520 = arith.andi %517, %519 : vector<1x256xi1>
    %c-2_i32_143 = arith.constant -2 : i32
    %521 = vector.broadcast %c-2_i32_143 : i32 to vector<1x256xi32>
    %522 = arith.cmpi sge, %1, %521 : vector<1x256xi32>
    %523 = arith.andi %520, %522 : vector<1x256xi1>
    %c14_i32_144 = arith.constant 14 : i32
    %524 = vector.broadcast %c14_i32_144 : i32 to vector<1x256xi32>
    %525 = arith.cmpi slt, %1, %524 : vector<1x256xi32>
    %526 = arith.andi %523, %525 : vector<1x256xi1>
    %527 = arith.extui %526 : vector<1x256xi1> to vector<1x256xi32>
    %528 = arith.sitofp %527 : vector<1x256xi32> to vector<1x256xf32>
    %529 = vector.broadcast %528 : vector<1x256xf32> to vector<8x256xf32>
    %530 = arith.mulf %515, %529 : vector<8x256xf32>
    %531 = arith.truncf %530 : vector<8x256xf32> to vector<8x256xbf16>
    %cst_145 = arith.constant dense<0.000000e+00> : vector<8x256xf32>
    %532 = tpu.matmul %514, %531, %cst_145 {dimension_numbers = #tpu.dot_dimension_numbers<[1], [0], [0], [1], [0, 0, 1, 1], [], []>} : vector<8x8xbf16>, vector<8x256xbf16>, vector<8x256xf32> -> vector<8x256xf32>
    %533 = arith.addf %512, %532 : vector<8x256xf32>
    %534 = vector.broadcast %6 : vector<8x1xf32> to vector<8x256xf32>
    %535 = arith.addf %533, %534 : vector<8x256xf32>
    %cst_146 = arith.constant dense<0.000000e+00> : vector<8x256xf32>
    %536 = tpu.matmul %4, %535, %cst_146 {dimension_numbers = #tpu.dot_dimension_numbers<[1], [0], [0], [1], [0, 0, 1, 1], [], []>} : vector<8x8xf32>, vector<8x256xf32>, vector<8x256xf32> -> vector<8x256xf32>
    %cst_147 = arith.constant dense<0.000000e+00> : vector<8xf32>
    %537 = vector.multi_reduction <add>, %536, %cst_147 [1] : vector<8x256xf32> to vector<8xf32>
    %538 = vector.shape_cast %537 : vector<8xf32> to vector<8x1xf32>
    %cst_148 = arith.constant 2.560000e+02 : f32
    %539 = vector.broadcast %cst_148 : f32 to vector<8x1xf32>
    %540 = arith.divf %538, %539 : vector<8x1xf32>
    %541 = arith.addf %540, %7 : vector<8x1xf32>
    %542 = arith.negf %541 : vector<8x1xf32>
    %543 = math.exp %542 : vector<8x1xf32>
    %cst_149 = arith.constant 1.000000e+00 : f32
    %544 = vector.broadcast %cst_149 : f32 to vector<8x1xf32>
    %545 = arith.addf %544, %543 : vector<8x1xf32>
    %546 = arith.divf %544, %545 : vector<8x1xf32>
    %547 = vector.broadcast %546 : vector<8x1xf32> to vector<8x256xf32>
    %548 = arith.mulf %535, %547 : vector<8x256xf32>
    %cst_150 = arith.constant 0.000000e+00 : f32
    %549 = vector.broadcast %cst_150 : f32 to vector<8x256xf32>
    %550 = arith.maximumf %548, %549 : vector<8x256xf32>
    %c0_151 = arith.constant 0 : index
    %c0_152 = arith.constant 0 : index
    %c0_153 = arith.constant 0 : index
    %551 = vector.load %arg10[%c0_151, %c0_152, %c0_153] : memref<1x8x256xf32, #tpu.memory_space<vmem>>, vector<1x8x256xf32>
    %552 = vector.shape_cast %551 : vector<1x8x256xf32> to vector<8x256xf32>
    %553 = vector.shape_cast %550 : vector<8x256xf32> to vector<1x8x256xf32>
    tpu.vector_store %arg10[%c0_151, %c0_152, %c0_153], %553 {strides = array<i32>} : memref<1x8x256xf32, #tpu.memory_space<vmem>>, vector<1x8x256xf32>,
    return
  }
  func.func @transform_0(%arg0: i32) -> (i32, i32, i32) {
    %c0_i32 = arith.constant 0 : i32
    %c0_i32_0 = arith.constant 0 : i32
    %c0_i32_1 = arith.constant 0 : i32
    return %arg0, %c0_i32, %c0_i32_0 : i32, i32, i32
  }
  func.func @transform_1(%arg0: i32) -> (i32, i32) {
    %c0_i32 = arith.constant 0 : i32
    %c0_i32_0 = arith.constant 0 : i32
    %c0_i32_1 = arith.constant 0 : i32
    return %c0_i32, %c0_i32_0 : i32, i32
  }
  func.func @transform_2(%arg0: i32) -> (i32, i32) {
    %c0_i32 = arith.constant 0 : i32
    %c0_i32_0 = arith.constant 0 : i32
    %c0_i32_1 = arith.constant 0 : i32
    return %c0_i32, %c0_i32_0 : i32, i32
  }
  func.func @transform_3(%arg0: i32) -> (i32, i32, i32) {
    %c0_i32 = arith.constant 0 : i32
    %c0_i32_0 = arith.constant 0 : i32
    %c0_i32_1 = arith.constant 0 : i32
    %c0_i32_2 = arith.constant 0 : i32
    return %c0_i32, %c0_i32_0, %c0_i32_1 : i32, i32, i32
  }
  func.func @transform_4(%arg0: i32) -> (i32, i32) {
    %c0_i32 = arith.constant 0 : i32
    %c0_i32_0 = arith.constant 0 : i32
    %c0_i32_1 = arith.constant 0 : i32
    return %c0_i32, %c0_i32_0 : i32, i32
  }
  func.func @transform_5(%arg0: i32) -> (i32, i32, i32) {
    %c0_i32 = arith.constant 0 : i32
    %c0_i32_0 = arith.constant 0 : i32
    %c0_i32_1 = arith.constant 0 : i32
    %c0_i32_2 = arith.constant 0 : i32
    return %c0_i32, %c0_i32_0, %c0_i32_1 : i32, i32, i32
  }
  func.func @transform_6(%arg0: i32) -> (i32, i32) {
    %c0_i32 = arith.constant 0 : i32
    %c0_i32_0 = arith.constant 0 : i32
    %c0_i32_1 = arith.constant 0 : i32
    return %c0_i32, %c0_i32_0 : i32, i32
  }
  func.func @transform_7(%arg0: i32) -> (i32, i32) {
    %c0_i32 = arith.constant 0 : i32
    %c0_i32_0 = arith.constant 0 : i32
    %c0_i32_1 = arith.constant 0 : i32
    return %c0_i32, %c0_i32_0 : i32, i32
  }
  func.func @transform_8(%arg0: i32) -> (i32, i32) {
    %c0_i32 = arith.constant 0 : i32
    %c0_i32_0 = arith.constant 0 : i32
    %c0_i32_1 = arith.constant 0 : i32
    return %c0_i32, %c0_i32_0 : i32, i32
  }
  func.func @transform_9(%arg0: i32) -> (i32, i32, i32) {
    %c0_i32 = arith.constant 0 : i32
    %c0_i32_0 = arith.constant 0 : i32
    %c0_i32_1 = arith.constant 0 : i32
    return %arg0, %c0_i32, %c0_i32_0 : i32, i32, i32
  }
}

</mosaic_0001>

<llo_original>
// kernel: tpu_custom_call.1
$region0: #{tpu_custom_call.1}
  #allocation0 [shape = 'u32[]', space=smem, size = 0x4, offset = 0x4, fixed_abs, tag = 'smem constant byte address 0x4 - core index']
  #allocation1 [shape = 'u32[144,128]{1,0:T(1,128)}', space=vmem, size = 0x12000, scoped, tag = 'internal scratch']
  %s0 = inlined_call_operand.vmem [shape: f32[2,4,256], index: 0, kind: input, shape index: {}]
  %s1 = inlined_call_operand.vmem [shape: s32[1,256], index: 1, kind: input, shape index: {}]
  %s2 = inlined_call_operand.vmem [shape: s32[1,256], index: 2, kind: input, shape index: {}]
  %s3 = inlined_call_operand.vmem [shape: bf16[9,8,4], index: 3, kind: input, shape index: {}]
  %s4 = inlined_call_operand.vmem [shape: f32[8,1], index: 4, kind: input, shape index: {}]
  %s5 = inlined_call_operand.vmem [shape: bf16[19,8,8], index: 5, kind: input, shape index: {}]
  %s6 = inlined_call_operand.vmem [shape: f32[8,1], index: 6, kind: input, shape index: {}]
  %s7 = inlined_call_operand.vmem [shape: f32[8,8], index: 7, kind: input, shape index: {}]
  %s8 = inlined_call_operand.vmem [shape: f32[8,1], index: 8, kind: input, shape index: {}]
  %s9 = inlined_call_operand.hbm [shape: f32[2,8,256], index: 9, kind: output, shape index: {}]
  %s10 = sld [smem:[#allocation0]]
  $region69: #{tpu_custom_call.1} parent=0
    _
  %s12 = ssub.s32 1, %s10
  %s13 = scalar_select 0, %s12, %s10
  $region1: #{tpu_custom_call.1} parent=0
    #allocation2 [shape = 'u8[16384]{0}', space=vmem, size = 0x4000, scoped, tag = 'output window, operand 0']
    #allocation3 [shape = 's32[2]{0}', space=sflag, size = 0x8, scoped, tag = 'scoped memory for tpu_custom_call.1']
    %14 = vsyncpa [#allocation3], 0
    %s15 = scalar_lea.sflag [#allocation3], 1
    %16 = vsyncpa %s15, 0
    loop: start=0, step=1, limit=4
    $region2: #{tpu_custom_call.1} parent=1 // loop_pre_header
      _
    $region3: #{tpu_custom_call.1} parent=1 // loop_header
      %s18 = sphi 0, %s22
      %p19 = scmp.ge.s32.totalorder %s18, 4
      %s28 = sphi 0, %s30
      %s31 = sphi 0, %s28
      %s32 = sphi 0, %s31
      %s48 = sphi 0, %s32
      %s52 = sphi 0, %s52
      %s54 = sphi 0, %s52
      %s55 = sphi 0, %s54
      %s69 = sphi 0, %s55
      %s73 = sphi 0, %s73
      %s75 = sphi 0, %s73
      %s76 = sphi 0, %s75
      %s90 = sphi 0, %s76
      %s94 = sphi 0, %s94
      %s96 = sphi 0, %s94
      %s97 = sphi 0, %s96
      %s111 = sphi 0, %s97
      %s115 = sphi 0, %s115
      %s117 = sphi 0, %s115
      %s118 = sphi 0, %s117
      %s132 = sphi 0, %s118
      %s136 = sphi 0, %s136
      %s138 = sphi 0, %s136
      %s139 = sphi 0, %s138
      %s153 = sphi 0, %s139
      %s157 = sphi 0, %s157
      %s159 = sphi 0, %s157
      %s160 = sphi 0, %s159
      %s174 = sphi 0, %s160
      %s178 = sphi 0, %s178
      %s180 = sphi 0, %s178
      %s181 = sphi 0, %s180
      %s195 = sphi 0, %s181
      %s199 = sphi 0, %s199
      %s201 = sphi 0, %s199
      %s202 = sphi 0, %s201
      %s216 = sphi 0, %s202
      %s222 = sphi 0, %s224
      %s225 = sphi 0, %s222
      %s226 = sphi 0, %s225
      %s242 = sphi 0, %s226
    $region4: #{tpu_custom_call.1} parent=1 // loop_header_branch
      %21 = sbr.rel (%p19) target = $region8
    $region5: #{tpu_custom_call.1} parent=1 // loop_body
      %s23 = ssub.s32 %s18, 1
      %s24 = ssub.s32 %s18, 2
      %s25 = sadd.s32 %s18, 1
      %s26 = ssub.s32 %s18, %s25
      %p27 = scmp.eq.s32.totalorder %s26, 0
      %s29 = sadd.s32 %s28, 1
      %s30 = scalar_select %p27, %s28, %s29
      %p33 = pneg %p27
      %p34 = scmp.eq.s32.totalorder %s18, 1
      %p35 = por %p33, %p34
      %p36 = scmp.ne.s32.totalorder %s28, %s31
      %p37 = scmp.eq.s32.totalorder %s18, 0
      %p38 = por %p36, %p37
      %p39 = scmp.ne.s32.totalorder %s28, %s31
      %p40 = scmp.eq.s32.totalorder %s23, 1
      %p41 = por %p39, %p40
      %p42 = scmp.ne.s32.totalorder %s31, %s32
      %p43 = scmp.eq.s32.totalorder %s23, 0
      %p44 = por %p42, %p43
      %p45 = scmp.ne.s32.totalorder %s31, %s32
      %p46 = scmp.eq.s32.totalorder %s24, 1
      %p47 = por %p45, %p46
      %p49 = scmp.ne.s32.totalorder %s32, %s48
      %p50 = scmp.eq.s32.totalorder %s24, 0
      %p51 = por %p49, %p50
      %s53 = sadd.s32 %s52, 1
      %p56 = scmp.eq.s32.totalorder %s18, 1
      %p57 = scmp.ne.s32.totalorder %s52, %s54
      %p58 = scmp.eq.s32.totalorder %s18, 0
      %p59 = por %p57, %p58
      %p60 = scmp.ne.s32.totalorder %s52, %s54
      %p61 = scmp.eq.s32.totalorder %s23, 1
      %p62 = por %p60, %p61
      %p63 = scmp.ne.s32.totalorder %s54, %s55
      %p64 = scmp.eq.s32.totalorder %s23, 0
      %p65 = por %p63, %p64
      %p66 = scmp.ne.s32.totalorder %s54, %s55
      %p67 = scmp.eq.s32.totalorder %s24, 1
      %p68 = por %p66, %p67
      %p70 = scmp.ne.s32.totalorder %s55, %s69
      %p71 = scmp.eq.s32.totalorder %s24, 0
      %p72 = por %p70, %p71
      %s74 = sadd.s32 %s73, 1
      %p77 = scmp.eq.s32.totalorder %s18, 1
      %p78 = scmp.ne.s32.totalorder %s73, %s75
      %p79 = scmp.eq.s32.totalorder %s18, 0
      %p80 = por %p78, %p79
      %p81 = scmp.ne.s32.totalorder %s73, %s75
      %p82 = scmp.eq.s32.totalorder %s23, 1
      %p83 = por %p81, %p82
      %p84 = scmp.ne.s32.totalorder %s75, %s76
      %p85 = scmp.eq.s32.totalorder %s23, 0
      %p86 = por %p84, %p85
      %p87 = scmp.ne.s32.totalorder %s75, %s76
      %p88 = scmp.eq.s32.totalorder %s24, 1
      %p89 = por %p87, %p88
      %p91 = scmp.ne.s32.totalorder %s76, %s90
      %p92 = scmp.eq.s32.totalorder %s24, 0
      %p93 = por %p91, %p92
      %s95 = sadd.s32 %s94, 1
      %p98 = scmp.eq.s32.totalorder %s18, 1
      %p99 = scmp.ne.s32.totalorder %s94, %s96
      %p100 = scmp.eq.s32.totalorder %s18, 0
      %p101 = por %p99, %p100
      %p102 = scmp.ne.s32.totalorder %s94, %s96
      %p103 = scmp.eq.s32.totalorder %s23, 1
      %p104 = por %p102, %p103
      %p105 = scmp.ne.s32.totalorder %s96, %s97
      %p106 = scmp.eq.s32.totalorder %s23, 0
      %p107 = por %p105, %p106
      %p108 = scmp.ne.s32.totalorder %s96, %s97
      %p109 = scmp.eq.s32.totalorder %s24, 1
      %p110 = por %p108, %p109
      %p112 = scmp.ne.s32.totalorder %s97, %s111
      %p113 = scmp.eq.s32.totalorder %s24, 0
      %p114 = por %p112, %p113
      %s116 = sadd.s32 %s115, 1
      %p119 = scmp.eq.s32.totalorder %s18, 1
      %p120 = scmp.ne.s32.totalorder %s115, %s117
      %p121 = scmp.eq.s32.totalorder %s18, 0
      %p122 = por %p120, %p121
      %p123 = scmp.ne.s32.totalorder %s115, %s117
      %p124 = scmp.eq.s32.totalorder %s23, 1
      %p125 = por %p123, %p124
      %p126 = scmp.ne.s32.totalorder %s117, %s118
      %p127 = scmp.eq.s32.totalorder %s23, 0
      %p128 = por %p126, %p127
      %p129 = scmp.ne.s32.totalorder %s117, %s118
      %p130 = scmp.eq.s32.totalorder %s24, 1
      %p131 = por %p129, %p130
      %p133 = scmp.ne.s32.totalorder %s118, %s132
      %p134 = scmp.eq.s32.totalorder %s24, 0
      %p135 = por %p133, %p134
      %s137 = sadd.s32 %s136, 1
      %p140 = scmp.eq.s32.totalorder %s18, 1
      %p141 = scmp.ne.s32.totalorder %s136, %s138
      %p142 = scmp.eq.s32.totalorder %s18, 0
      %p143 = por %p141, %p142
      %p144 = scmp.ne.s32.totalorder %s136, %s138
      %p145 = scmp.eq.s32.totalorder %s23, 1
      %p146 = por %p144, %p145
      %p147 = scmp.ne.s32.totalorder %s138, %s139
      %p148 = scmp.eq.s32.totalorder %s23, 0
      %p149 = por %p147, %p148
      %p150 = scmp.ne.s32.totalorder %s138, %s139
      %p151 = scmp.eq.s32.totalorder %s24, 1
      %p152 = por %p150, %p151
      %p154 = scmp.ne.s32.totalorder %s139, %s153
      %p155 = scmp.eq.s32.totalorder %s24, 0
      %p156 = por %p154, %p155
      %s158 = sadd.s32 %s157, 1
      %p161 = scmp.eq.s32.totalorder %s18, 1
      %p162 = scmp.ne.s32.totalorder %s157, %s159
      %p163 = scmp.eq.s32.totalorder %s18, 0
      %p164 = por %p162, %p163
      %p165 = scmp.ne.s32.totalorder %s157, %s159
      %p166 = scmp.eq.s32.totalorder %s23, 1
      %p167 = por %p165, %p166
      %p168 = scmp.ne.s32.totalorder %s159, %s160
      %p169 = scmp.eq.s32.totalorder %s23, 0
      %p170 = por %p168, %p169
      %p171 = scmp.ne.s32.totalorder %s159, %s160
      %p172 = scmp.eq.s32.totalorder %s24, 1
      %p173 = por %p171, %p172
      %p175 = scmp.ne.s32.totalorder %s160, %s174
      %p176 = scmp.eq.s32.totalorder %s24, 0
      %p177 = por %p175, %p176
      %s179 = sadd.s32 %s178, 1
      %p182 = scmp.eq.s32.totalorder %s18, 1
      %p183 = scmp.ne.s32.totalorder %s178, %s180
      %p184 = scmp.eq.s32.totalorder %s18, 0
      %p185 = por %p183, %p184
      %p186 = scmp.ne.s32.totalorder %s178, %s180
      %p187 = scmp.eq.s32.totalorder %s23, 1
      %p188 = por %p186, %p187
      %p189 = scmp.ne.s32.totalorder %s180, %s181
      %p190 = scmp.eq.s32.totalorder %s23, 0
      %p191 = por %p189, %p190
      %p192 = scmp.ne.s32.totalorder %s180, %s181
      %p193 = scmp.eq.s32.totalorder %s24, 1
      %p194 = por %p192, %p193
      %p196 = scmp.ne.s32.totalorder %s181, %s195
      %p197 = scmp.eq.s32.totalorder %s24, 0
      %p198 = por %p196, %p197
      %s200 = sadd.s32 %s199, 1
      %p203 = scmp.eq.s32.totalorder %s18, 1
      %p204 = scmp.ne.s32.totalorder %s199, %s201
      %p205 = scmp.eq.s32.totalorder %s18, 0
      %p206 = por %p204, %p205
      %p207 = scmp.ne.s32.totalorder %s199, %s201
      %p208 = scmp.eq.s32.totalorder %s23, 1
      %p209 = por %p207, %p208
      %p210 = scmp.ne.s32.totalorder %s201, %s202
      %p211 = scmp.eq.s32.totalorder %s23, 0
      %p212 = por %p210, %p211
      %p213 = scmp.ne.s32.totalorder %s201, %s202
      %p214 = scmp.eq.s32.totalorder %s24, 1
      %p215 = por %p213, %p214
      %p217 = scmp.ne.s32.totalorder %s202, %s216
      %p218 = scmp.eq.s32.totalorder %s24, 0
      %p219 = por %p217, %p218
      %s220 = ssub.s32 %s18, %s25
      %p221 = scmp.eq.s32.totalorder %s220, 0
      %s223 = sadd.s32 %s222, 1
      %s224 = scalar_select %p221, %s222, %s223
      %p227 = pneg %p221
      %p228 = scmp.eq.s32.totalorder %s18, 1
      %p229 = por %p227, %p228
      %p230 = scmp.ne.s32.totalorder %s222, %s225
      %p231 = scmp.eq.s32.totalorder %s18, 0
      %p232 = por %p230, %p231
      %p233 = scmp.ne.s32.totalorder %s222, %s225
      %p234 = scmp.eq.s32.totalorder %s23, 1
      %p235 = por %p233, %p234
      %p236 = scmp.ne.s32.totalorder %s225, %s226
      %p237 = scmp.eq.s32.totalorder %s23, 0
      %p238 = por %p236, %p237
      %p239 = scmp.ne.s32.totalorder %s225, %s226
      %p240 = scmp.eq.s32.totalorder %s24, 1
      %p241 = por %p239, %p240
      %p243 = scmp.ne.s32.totalorder %s226, %s242
      %p244 = scmp.eq.s32.totalorder %s24, 0
      %p245 = por %p243, %p244
      %p246 = scmp.le.s32.totalorder 1, %s18
      %p247 = scmp.lt.s32.totalorder %s18, 3
      %p248 = pnand %p246, %p247
      %p249 = pneg %p248
      // Predicated region
      $region9: #{tpu_custom_call.1} parent=5 // pred_check
        _
      $region10: #{tpu_custom_call.1} parent=5 // pred_check_branch
        %251 = sbr.rel (%p248) target = $region12
      $region11: #{tpu_custom_call.1} parent=5 // pred_region
        %s252 = ssub.s32 %s18, 1
        // Predicated region
        $region13: #{tpu_custom_call.1} parent=11 // pred_check
          %p253 = pneg %p65
        $region14: #{tpu_custom_call.1} parent=11 // pred_check_branch
          %255 = sbr.rel (%p253) target = $region16
        $region15: #{tpu_custom_call.1} parent=11 // pred_region
          _
        $region16: #{tpu_custom_call.1} parent=11 // pred_fallthru
          _
        // Predicated region
        $region17: #{tpu_custom_call.1} parent=11 // pred_check
          %p256 = pneg %p86
        $region18: #{tpu_custom_call.1} parent=11 // pred_check_branch
          %258 = sbr.rel (%p256) target = $region20
        $region19: #{tpu_custom_call.1} parent=11 // pred_region
          _
        $region20: #{tpu_custom_call.1} parent=11 // pred_fallthru
          _
        // Predicated region
        $region21: #{tpu_custom_call.1} parent=11 // pred_check
          %p259 = pneg %p107
        $region22: #{tpu_custom_call.1} parent=11 // pred_check_branch
          %261 = sbr.rel (%p259) target = $region24
        $region23: #{tpu_custom_call.1} parent=11 // pred_region
          _
        $region24: #{tpu_custom_call.1} parent=11 // pred_fallthru
          _
        // Predicated region
        $region25: #{tpu_custom_call.1} parent=11 // pred_check
          %p262 = pneg %p128
        $region26: #{tpu_custom_call.1} parent=11 // pred_check_branch
          %264 = sbr.rel (%p262) target = $region28
        $region27: #{tpu_custom_call.1} parent=11 // pred_region
          _
        $region28: #{tpu_custom_call.1} parent=11 // pred_fallthru
          _
        // Predicated region
        $region29: #{tpu_custom_call.1} parent=11 // pred_check
          %p265 = pneg %p149
        $region30: #{tpu_custom_call.1} parent=11 // pred_check_branch
          %267 = sbr.rel (%p265) target = $region32
        $region31: #{tpu_custom_call.1} parent=11 // pred_region
          _
        $region32: #{tpu_custom_call.1} parent=11 // pred_fallthru
          _
        // Predicated region
        $region33: #{tpu_custom_call.1} parent=11 // pred_check
          %p268 = pneg %p170
        $region34: #{tpu_custom_call.1} parent=11 // pred_check_branch
          %270 = sbr.rel (%p268) target = $region36
        $region35: #{tpu_custom_call.1} parent=11 // pred_region
          _
        $region36: #{tpu_custom_call.1} parent=11 // pred_fallthru
          _
        // Predicated region
        $region37: #{tpu_custom_call.1} parent=11 // pred_check
          %p271 = pneg %p191
        $region38: #{tpu_custom_call.1} parent=11 // pred_check_branch
          %273 = sbr.rel (%p271) target = $region40
        $region39: #{tpu_custom_call.1} parent=11 // pred_region
          _
        $region40: #{tpu_custom_call.1} parent=11 // pred_fallthru
          _
        // Predicated region
        $region41: #{tpu_custom_call.1} parent=11 // pred_check
          %p274 = pneg %p212
        $region42: #{tpu_custom_call.1} parent=11 // pred_check_branch
          %276 = sbr.rel (%p274) target = $region44
        $region43: #{tpu_custom_call.1} parent=11 // pred_region
          _
        $region44: #{tpu_custom_call.1} parent=11 // pred_fallthru
          _
      $region12: #{tpu_custom_call.1} parent=5 // pred_fallthru
        _
      %p277 = scmp.lt.s32.totalorder %s18, 2
      // Predicated region
      $region45: #{tpu_custom_call.1} parent=5 // pred_check
        %p278 = pneg %p277
      $region46: #{tpu_custom_call.1} parent=5 // pred_check_branch
        %280 = sbr.rel (%p278) target = $region48
      $region47: #{tpu_custom_call.1} parent=5 // pred_region
        // Predicated region
        $region49: #{tpu_custom_call.1} parent=47 // pred_check
          %p281 = pneg %p38
        $region50: #{tpu_custom_call.1} parent=47 // pred_check_branch
          %283 = sbr.rel (%p281) target = $region52
        $region51: #{tpu_custom_call.1} parent=47 // pred_region
          %p284 = scmp.lt.s32.totalorder %s18, 1
          %s285 = scalar_select %p284, %s18, 1
          %s286 = smul.addr %s285, 2
          %s287 = smul.addr %s286, 4
          %s288 = scalar_lea.vmem %s0, %s287
        $region52: #{tpu_custom_call.1} parent=47 // pred_fallthru
          _
      $region48: #{tpu_custom_call.1} parent=5 // pred_fallthru
        _
      %p289 = scmp.le.s32.totalorder 1, %s18
      %p290 = scmp.lt.s32.totalorder %s18, 3
      %p291 = pnand %p289, %p290
      %p292 = pneg %p291
      // Predicated region
      $region53: #{tpu_custom_call.1} parent=5 // pred_check
        _
      $region54: #{tpu_custom_call.1} parent=5 // pred_check_branch
        %294 = sbr.rel (%p291) target = $region56
      $region55: #{tpu_custom_call.1} parent=5 // pred_region
        %s295 = ssub.s32 %s18, 1
        %p296 = scmp.lt.s32.totalorder %s23, 1
        %s297 = scalar_select %p296, %s23, 1
        %s298 = smul.addr %s297, 2
        %s299 = smul.addr %s298, 4
        %s300 = scalar_lea.vmem %s0, %s299
        %p301 = pneg %p44
        %p302 = pneg %p41
        %p303 = pneg %p65
        %p304 = pneg %p62
        %p305 = pneg %p86
        %p306 = pneg %p83
        %p307 = pneg %p107
        %p308 = pneg %p104
        %p309 = pneg %p128
        %p310 = pneg %p125
        %p311 = pneg %p149
        %p312 = pneg %p146
        %p313 = pneg %p170
        %p314 = pneg %p167
        %p315 = pneg %p191
        %p316 = pneg %p188
        %p317 = pneg %p212
        %p318 = pneg %p209
        %p319 = pneg %p238
        %p320 = pneg %p235
        %s321 = sand.u32 %s225, 1
        %s322 = scalar_lea.sflag [#allocation3], %s321
        %s323 = sand.u32 %s225, 1
        %s324 = smul.addr %s323, 16
        %s325 = scalar_lea.vmem [#allocation2], %s324
        %p326 = scmp.lt.s32.totalorder %s23, 1
        %s327 = scalar_select %p326, %s23, 1
        %s328 = smul.addr %s327, 2
        %s329 = smul.addr %s328, 4
        %s330 = scalar_lea.vmem %s0, %s329
        %v332 = vld [vmem:[%s1] sm:$0x3]
        %v333 = vld [vmem:[%s2] sm:$0x3]
        %v334 = vld [vmem:[%s3] sm:$0xf]
        %v335 = vld [vmem:[%s3 + $0x4] sm:$0xf]
        %v336 = vld [vmem:[%s3 + $0x8] sm:$0xf]
        %v337 = vld [vmem:[%s3 + $0xc] sm:$0xf]
        %v338 = vld [vmem:[%s3 + $0x10] sm:$0xf]
        %v339 = vld [vmem:[%s3 + $0x14] sm:$0xf]
        %v340 = vld [vmem:[%s3 + $0x18] sm:$0xf]
        %v341 = vld [vmem:[%s3 + $0x1c] sm:$0xf]
        %v342 = vld [vmem:[%s3 + $0x20] sm:$0xf]
        %v343 = vld [vmem:[%s5] sm:$0xf]
        %v344 = vld [vmem:[%s5 + $0x4] sm:$0xf]
        %v345 = vld [vmem:[%s5 + $0x8] sm:$0xf]
        %v346 = vld [vmem:[%s5 + $0xc] sm:$0xf]
        %v347 = vld [vmem:[%s5 + $0x10] sm:$0xf]
        %v348 = vld [vmem:[%s5 + $0x14] sm:$0xf]
        %v349 = vld [vmem:[%s5 + $0x18] sm:$0xf]
        %v350 = vld [vmem:[%s5 + $0x1c] sm:$0xf]
        %v351 = vld [vmem:[%s5 + $0x20] sm:$0xf]
        %v352 = vld [vmem:[%s5 + $0x24] sm:$0xf]
        %v353 = vld [vmem:[%s5 + $0x28] sm:$0xf]
        %v354 = vld [vmem:[%s5 + $0x2c] sm:$0xf]
        %v355 = vld [vmem:[%s5 + $0x30] sm:$0xf]
        %v356 = vld [vmem:[%s5 + $0x34] sm:$0xf]
        %v357 = vld [vmem:[%s5 + $0x38] sm:$0xf]
        %v358 = vld [vmem:[%s5 + $0x3c] sm:$0xf]
        %v359 = vld [vmem:[%s5 + $0x40] sm:$0xf]
        %v360 = vld [vmem:[%s5 + $0x44] sm:$0xf]
        %v361 = vld [vmem:[%s5 + $0x48] sm:$0xf]
        %v362 = vld [vmem:[%s7] sm:$0xff]
        %v363 = vld [vmem:[%s4] sm:$0xff]
        %v364 = vld [vmem:[%s6] sm:$0xff]
        %v365 = vld [vmem:[%s8] sm:$0xff]
        %v366 = vld [vmem:[%s330] sm:$0xff]
        %v368 = vcombine.high %v366, %v366
        %370 = vrot.lane.b32.xlu0 %v366, 17
        %v371 = vpop.permute.xlu0 %370
        %372 = vrot.lane.b32.xlu0 %v368, 17
        %v373 = vpop.permute.xlu0 %372
        %v374 = vlaneseq
        %v375 = vand.u32 %v374, 127
        %vm376 = vcmp.lt.s32.totalorder %v375, 17
        %v377 = vsel %vm376, %v371, %v373
        %v378 = vsel %vm376, %v373, %v371
        %vm379 = vcmp.ge.s32.totalorder %v332, 1
        %vm380 = vcmp.lt.s32.totalorder %v332, 17
        %vm381 = vmand %vm379, %vm380
        %vm382 = vcmp.ge.s32.totalorder %v333, 1
        %vm383 = vmand %vm381, %vm382
        %vm384 = vcmp.lt.s32.totalorder %v333, 17
        %vm385 = vmand %vm383, %vm384
        %v386 = vsel %vm385, 1, 0
        %v387 = vcvt.s32.f32 %v386
        %v389 = vlaneseq
        %v390 = vshrl.u32 %v389, 7
        %v391 = vsub.s32 0, %v390
        %v392 = vrot.slane %v387, %v391
        %v393 = vlaneseq
        %v394 = vshrl.u32 %v393, 7
        %v395 = vsub.s32 1, %v394
        %v396 = vrot.slane %v387, %v395
        %v399 = vmul.f32 %v378, %v392
        %v400 = vmul.f32 %v377, %v396
        %v401 = vpack.c.bf16 %v399, %v399
        %v402 = vpack.c.bf16 %v400, %v400
        %403 = vrot.lane.b32.xlu0 %v366, 16
        %v404 = vpop.permute.xlu0 %403
        %405 = vrot.lane.b32.xlu0 %v368, 16
        %v406 = vpop.permute.xlu0 %405
        %vm407 = vcmp.lt.s32.totalorder %v375, 16
        %v408 = vsel %vm407, %v404, %v406
        %v409 = vsel %vm407, %v406, %v404
        %vm410 = vcmp.ge.s32.totalorder %v333, 0
        %vm411 = vmand %vm381, %vm410
        %vm412 = vcmp.lt.s32.totalorder %v333, 16
        %vm413 = vmand %vm411, %vm412
        %v414 = vsel %vm413, 1, 0
        %v415 = vcvt.s32.f32 %v414
        %v417 = vlaneseq
        %v418 = vshrl.u32 %v417, 7
        %v419 = vsub.s32 0, %v418
        %v420 = vrot.slane %v415, %v419
        %v421 = vlaneseq
        %v422 = vshrl.u32 %v421, 7
        %v423 = vsub.s32 1, %v422
        %v424 = vrot.slane %v415, %v423
        %v427 = vmul.f32 %v409, %v420
        %v428 = vmul.f32 %v408, %v424
        %v429 = vpack.c.bf16 %v427, %v427
        %v430 = vpack.c.bf16 %v428, %v428
        %vm431 = vcmask 31744
        %v433 = vsel %vm431, %v335, 0
        %vm435 = vcmask 1041408
        %v437 = vsel %vm435, %v429, 0
        %v440 = vsel %vm435, %v430, 0
        %442 = vmatprep.subr.bf16.mxu0 %v440
        %443 = vmatpush1.bf16.msra.mxu0 %v437
        %444 = vmatprep.subr.bf16.mxu0 0
        %445 = vmatpush1.bf16.msra.mxu0 0
        %446 = vmatprep.subr.bf16.mxu0 0
        %447 = vmatpush1.bf16.msra.mxu0 0
        %448 = vmatprep.subr.bf16.mxu0 0
        %449 = vmatpush1.bf16.msra.mxu0 0
        %450 = vmatprep.subr.bf16.mxu0 0
        %451 = vmatpush1.bf16.msra.mxu0 0
        %452 = vmatprep.subr.bf16.mxu0 0
        %453 = vmatpush1.bf16.msra.mxu0 0
        %454 = vmatprep.subr.bf16.mxu0 0
        %455 = vmatpush1.bf16.msra.mxu0 0
        %456 = vmatprep.subr.bf16.mxu0 0
        %457 = vmatpush1.bf16.msra.mxu0 0
        %458 = vmatprep.subr.bf16.mxu0 0
        %459 = vmatpush1.bf16.msra.mxu0 0
        %460 = vmatprep.subr.bf16.mxu0 0
        %461 = vmatpush1.bf16.msra.mxu0 0
        %462 = vmatprep.subr.bf16.mxu0 0
        %463 = vmatpush1.bf16.msra.mxu0 0
        %464 = vmatprep.subr.bf16.mxu0 0
        %465 = vmatpush1.bf16.msra.mxu0 0
        %466 = vmatprep.subr.bf16.mxu0 0
        %467 = vmatpush1.bf16.msra.mxu0 0
        %468 = vmatprep.subr.bf16.mxu0 0
        %469 = vmatpush1.bf16.msra.mxu0 0
        %470 = vmatprep.subr.bf16.mxu0 0
        %471 = vmatpush1.bf16.msra.mxu0 0
        %472 = vmatprep.subr.bf16.mxu0 0
        %473 = vmatpush1.bf16.msra.mxu0 0
        %474 = vmatprep.mubr.bf16.mxu0 0
        %475 = vmatmul.mubr.bf16.gmra.mrb[0].mxu0 %v433
        %v476 = vpop.f32.mrb[0].mxu0
        %v477 = vadd.f32 0.0, %v476
        %v478 = vpop.f32.mrb[0].mxu0
        %v479 = vadd.f32 0.0, %v478
        %v480 = vpop.f32.mrb[0].mxu0
        %v481 = vpop.f32.mrb[0].mxu0
        %482 = vdwg.mxu0
        %v484 = vsel %vm431, %v334, 0
        %v487 = vsel %vm435, %v401, 0
        %v490 = vsel %vm435, %v402, 0
        %492 = vmatprep.subr.bf16.mxu0 %v490
        %493 = vmatpush1.bf16.msra.mxu0 %v487
        %494 = vmatprep.subr.bf16.mxu0 0
        %495 = vmatpush1.bf16.msra.mxu0 0
        %496 = vmatprep.subr.bf16.mxu0 0
        %497 = vmatpush1.bf16.msra.mxu0 0
        %498 = vmatprep.subr.bf16.mxu0 0
        %499 = vmatpush1.bf16.msra.mxu0 0
        %500 = vmatprep.subr.bf16.mxu0 0
        %501 = vmatpush1.bf16.msra.mxu0 0
        %502 = vmatprep.subr.bf16.mxu0 0
        %503 = vmatpush1.bf16.msra.mxu0 0
        %504 = vmatprep.subr.bf16.mxu0 0
        %505 = vmatpush1.bf16.msra.mxu0 0
        %506 = vmatprep.subr.bf16.mxu0 0
        %507 = vmatpush1.bf16.msra.mxu0 0
        %508 = vmatprep.subr.bf16.mxu0 0
        %509 = vmatpush1.bf16.msra.mxu0 0
        %510 = vmatprep.subr.bf16.mxu0 0
        %511 = vmatpush1.bf16.msra.mxu0 0
        %512 = vmatprep.subr.bf16.mxu0 0
        %513 = vmatpush1.bf16.msra.mxu0 0
        %514 = vmatprep.subr.bf16.mxu0 0
        %515 = vmatpush1.bf16.msra.mxu0 0
        %516 = vmatprep.subr.bf16.mxu0 0
        %517 = vmatpush1.bf16.msra.mxu0 0
        %518 = vmatprep.subr.bf16.mxu0 0
        %519 = vmatpush1.bf16.msra.mxu0 0
        %520 = vmatprep.subr.bf16.mxu0 0
        %521 = vmatpush1.bf16.msra.mxu0 0
        %522 = vmatprep.subr.bf16.mxu0 0
        %523 = vmatpush1.bf16.msra.mxu0 0
        %524 = vmatprep.mubr.bf16.mxu0 0
        %525 = vmatmul.mubr.bf16.gmra.mrb[0].mxu0 %v484
        %v526 = vpop.f32.mrb[0].mxu0
        %v527 = vadd.f32 %v477, %v526
        %v528 = vpop.f32.mrb[0].mxu0
        %v529 = vadd.f32 %v479, %v528
        %v530 = vpop.f32.mrb[0].mxu0
        %v531 = vpop.f32.mrb[0].mxu0
        %532 = vdwg.mxu0
        %533 = vrot.lane.b32.xlu0 %v366, 15
        %v534 = vpop.permute.xlu0 %533
        %535 = vrot.lane.b32.xlu0 %v368, 15
        %v536 = vpop.permute.xlu0 %535
        %vm537 = vcmp.lt.s32.totalorder %v375, 15
        %v538 = vsel %vm537, %v534, %v536
        %v539 = vsel %vm537, %v536, %v534
        %vm540 = vcmp.ge.s32.totalorder %v333, 4294967295
        %vm541 = vmand %vm381, %vm540
        %vm542 = vcmp.lt.s32.totalorder %v333, 15
        %vm543 = vmand %vm541, %vm542
        %v544 = vsel %vm543, 1, 0
        %v545 = vcvt.s32.f32 %v544
        %v547 = vlaneseq
        %v548 = vshrl.u32 %v547, 7
        %v549 = vsub.s32 0, %v548
        %v550 = vrot.slane %v545, %v549
        %v551 = vlaneseq
        %v552 = vshrl.u32 %v551, 7
        %v553 = vsub.s32 1, %v552
        %v554 = vrot.slane %v545, %v553
        %v557 = vmul.f32 %v539, %v550
        %v558 = vmul.f32 %v538, %v554
        %v559 = vpack.c.bf16 %v557, %v557
        %v560 = vpack.c.bf16 %v558, %v558
        %v562 = vsel %vm431, %v336, 0
        %v565 = vsel %vm435, %v559, 0
        %v568 = vsel %vm435, %v560, 0
        %570 = vmatprep.subr.bf16.mxu0 %v568
        %571 = vmatpush1.bf16.msra.mxu0 %v565
        %572 = vmatprep.subr.bf16.mxu0 0
        %573 = vmatpush1.bf16.msra.mxu0 0
        %574 = vmatprep.subr.bf16.mxu0 0
        %575 = vmatpush1.bf16.msra.mxu0 0
        %576 = vmatprep.subr.bf16.mxu0 0
        %577 = vmatpush1.bf16.msra.mxu0 0
        %578 = vmatprep.subr.bf16.mxu0 0
        %579 = vmatpush1.bf16.msra.mxu0 0
        %580 = vmatprep.subr.bf16.mxu0 0
        %581 = vmatpush1.bf16.msra.mxu0 0
        %582 = vmatprep.subr.bf16.mxu0 0
        %583 = vmatpush1.bf16.msra.mxu0 0
        %584 = vmatprep.subr.bf16.mxu0 0
        %585 = vmatpush1.bf16.msra.mxu0 0
        %586 = vmatprep.subr.bf16.mxu0 0
        %587 = vmatpush1.bf16.msra.mxu0 0
        %588 = vmatprep.subr.bf16.mxu0 0
        %589 = vmatpush1.bf16.msra.mxu0 0
        %590 = vmatprep.subr.bf16.mxu0 0
        %591 = vmatpush1.bf16.msra.mxu0 0
        %592 = vmatprep.subr.bf16.mxu0 0
        %593 = vmatpush1.bf16.msra.mxu0 0
        %594 = vmatprep.subr.bf16.mxu0 0
        %595 = vmatpush1.bf16.msra.mxu0 0
        %596 = vmatprep.subr.bf16.mxu0 0
        %597 = vmatpush1.bf16.msra.mxu0 0
        %598 = vmatprep.subr.bf16.mxu0 0
        %599 = vmatpush1.bf16.msra.mxu0 0
        %600 = vmatprep.subr.bf16.mxu0 0
        %601 = vmatpush1.bf16.msra.mxu0 0
        %602 = vmatprep.mubr.bf16.mxu0 0
        %603 = vmatmul.mubr.bf16.gmra.mrb[0].mxu0 %v562
        %v604 = vpop.f32.mrb[0].mxu0
        %v605 = vadd.f32 0.0, %v604
        %v606 = vpop.f32.mrb[0].mxu0
        %v607 = vadd.f32 0.0, %v606
        %v608 = vpop.f32.mrb[0].mxu0
        %v609 = vpop.f32.mrb[0].mxu0
        %610 = vdwg.mxu0
        %v611 = vadd.f32 %v527, %v605
        %v612 = vadd.f32 %v529, %v607
        %613 = vrot.lane.b32.xlu0 %v366, 1
        %v614 = vpop.permute.xlu0 %613
        %615 = vrot.lane.b32.xlu0 %v368, 1
        %v616 = vpop.permute.xlu0 %615
        %vm617 = vcmp.lt.s32.totalorder %v375, 1
        %v618 = vsel %vm617, %v614, %v616
        %v619 = vsel %vm617, %v616, %v614
        %vm620 = vcmp.ge.s32.totalorder %v332, 0
        %vm621 = vcmp.lt.s32.totalorder %v332, 16
        %vm622 = vmand %vm620, %vm621
        %vm623 = vmand %vm622, %vm382
        %vm624 = vmand %vm623, %vm384
        %v625 = vsel %vm624, 1, 0
        %v626 = vcvt.s32.f32 %v625
        %v628 = vlaneseq
        %v629 = vshrl.u32 %v628, 7
        %v630 = vsub.s32 0, %v629
        %v631 = vrot.slane %v626, %v630
        %v632 = vlaneseq
        %v633 = vshrl.u32 %v632, 7
        %v634 = vsub.s32 1, %v633
        %v635 = vrot.slane %v626, %v634
        %v638 = vmul.f32 %v619, %v631
        %v639 = vmul.f32 %v618, %v635
        %v640 = vpack.c.bf16 %v638, %v638
        %v641 = vpack.c.bf16 %v639, %v639
        %v643 = vsel %vm431, %v337, 0
        %v646 = vsel %vm435, %v640, 0
        %v649 = vsel %vm435, %v641, 0
        %651 = vmatprep.subr.bf16.mxu0 %v649
        %652 = vmatpush1.bf16.msra.mxu0 %v646
        %653 = vmatprep.subr.bf16.mxu0 0
        %654 = vmatpush1.bf16.msra.mxu0 0
        %655 = vmatprep.subr.bf16.mxu0 0
        %656 = vmatpush1.bf16.msra.mxu0 0
        %657 = vmatprep.subr.bf16.mxu0 0
        %658 = vmatpush1.bf16.msra.mxu0 0
        %659 = vmatprep.subr.bf16.mxu0 0
        %660 = vmatpush1.bf16.msra.mxu0 0
        %661 = vmatprep.subr.bf16.mxu0 0
        %662 = vmatpush1.bf16.msra.mxu0 0
        %663 = vmatprep.subr.bf16.mxu0 0
        %664 = vmatpush1.bf16.msra.mxu0 0
        %665 = vmatprep.subr.bf16.mxu0 0
        %666 = vmatpush1.bf16.msra.mxu0 0
        %667 = vmatprep.subr.bf16.mxu0 0
        %668 = vmatpush1.bf16.msra.mxu0 0
        %669 = vmatprep.subr.bf16.mxu0 0
        %670 = vmatpush1.bf16.msra.mxu0 0
        %671 = vmatprep.subr.bf16.mxu0 0
        %672 = vmatpush1.bf16.msra.mxu0 0
        %673 = vmatprep.subr.bf16.mxu0 0
        %674 = vmatpush1.bf16.msra.mxu0 0
        %675 = vmatprep.subr.bf16.mxu0 0
        %676 = vmatpush1.bf16.msra.mxu0 0
        %677 = vmatprep.subr.bf16.mxu0 0
        %678 = vmatpush1.bf16.msra.mxu0 0
        %679 = vmatprep.subr.bf16.mxu0 0
        %680 = vmatpush1.bf16.msra.mxu0 0
        %681 = vmatprep.subr.bf16.mxu0 0
        %682 = vmatpush1.bf16.msra.mxu0 0
        %683 = vmatprep.mubr.bf16.mxu0 0
        %684 = vmatmul.mubr.bf16.gmra.mrb[0].mxu0 %v643
        %v685 = vpop.f32.mrb[0].mxu0
        %v686 = vadd.f32 0.0, %v685
        %v687 = vpop.f32.mrb[0].mxu0
        %v688 = vadd.f32 0.0, %v687
        %v689 = vpop.f32.mrb[0].mxu0
        %v690 = vpop.f32.mrb[0].mxu0
        %691 = vdwg.mxu0
        %v692 = vadd.f32 %v611, %v686
        %v693 = vadd.f32 %v612, %v688
        %v694 = vpack.c.bf16 %v366, %v366
        %v695 = vpack.c.bf16 %v368, %v368
        %v697 = vsel %vm431, %v338, 0
        %v700 = vsel %vm435, %v694, 0
        %v703 = vsel %vm435, %v695, 0
        %705 = vmatprep.subr.bf16.mxu0 %v703
        %706 = vmatpush1.bf16.msra.mxu0 %v700
        %707 = vmatprep.subr.bf16.mxu0 0
        %708 = vmatpush1.bf16.msra.mxu0 0
        %709 = vmatprep.subr.bf16.mxu0 0
        %710 = vmatpush1.bf16.msra.mxu0 0
        %711 = vmatprep.subr.bf16.mxu0 0
        %712 = vmatpush1.bf16.msra.mxu0 0
        %713 = vmatprep.subr.bf16.mxu0 0
        %714 = vmatpush1.bf16.msra.mxu0 0
        %715 = vmatprep.subr.bf16.mxu0 0
        %716 = vmatpush1.bf16.msra.mxu0 0
        %717 = vmatprep.subr.bf16.mxu0 0
        %718 = vmatpush1.bf16.msra.mxu0 0
        %719 = vmatprep.subr.bf16.mxu0 0
        %720 = vmatpush1.bf16.msra.mxu0 0
        %721 = vmatprep.subr.bf16.mxu0 0
        %722 = vmatpush1.bf16.msra.mxu0 0
        %723 = vmatprep.subr.bf16.mxu0 0
        %724 = vmatpush1.bf16.msra.mxu0 0
        %725 = vmatprep.subr.bf16.mxu0 0
        %726 = vmatpush1.bf16.msra.mxu0 0
        %727 = vmatprep.subr.bf16.mxu0 0
        %728 = vmatpush1.bf16.msra.mxu0 0
        %729 = vmatprep.subr.bf16.mxu0 0
        %730 = vmatpush1.bf16.msra.mxu0 0
        %731 = vmatprep.subr.bf16.mxu0 0
        %732 = vmatpush1.bf16.msra.mxu0 0
        %733 = vmatprep.subr.bf16.mxu0 0
        %734 = vmatpush1.bf16.msra.mxu0 0
        %735 = vmatprep.subr.bf16.mxu0 0
        %736 = vmatpush1.bf16.msra.mxu0 0
        %737 = vmatprep.mubr.bf16.mxu0 0
        %738 = vmatmul.mubr.bf16.gmra.mrb[0].mxu0 %v697
        %v739 = vpop.f32.mrb[0].mxu0
        %v740 = vadd.f32 0.0, %v739
        %v741 = vpop.f32.mrb[0].mxu0
        %v742 = vadd.f32 0.0, %v741
        %v743 = vpop.f32.mrb[0].mxu0
        %v744 = vpop.f32.mrb[0].mxu0
        %745 = vdwg.mxu0
        %v746 = vadd.f32 %v692, %v740
        %v747 = vadd.f32 %v693, %v742
        %748 = vrot.lane.b32.xlu0 %v366, 127
        %v749 = vpop.permute.xlu0 %748
        %750 = vrot.lane.b32.xlu0 %v368, 127
        %v751 = vpop.permute.xlu0 %750
        %vm752 = vcmp.lt.s32.totalorder %v375, 127
        %v753 = vsel %vm752, %v749, %v751
        %v754 = vsel %vm752, %v751, %v749
        %vm755 = vmand %vm622, %vm540
        %vm756 = vmand %vm755, %vm542
        %v757 = vsel %vm756, 1, 0
        %v758 = vcvt.s32.f32 %v757
        %v760 = vlaneseq
        %v761 = vshrl.u32 %v760, 7
        %v762 = vsub.s32 0, %v761
        %v763 = vrot.slane %v758, %v762
        %v764 = vlaneseq
        %v765 = vshrl.u32 %v764, 7
        %v766 = vsub.s32 1, %v765
        %v767 = vrot.slane %v758, %v766
        %v770 = vmul.f32 %v753, %v763
        %v771 = vmul.f32 %v754, %v767
        %v772 = vpack.c.bf16 %v770, %v770
        %v773 = vpack.c.bf16 %v771, %v771
        %v775 = vsel %vm431, %v339, 0
        %v778 = vsel %vm435, %v772, 0
        %v781 = vsel %vm435, %v773, 0
        %783 = vmatprep.subr.bf16.mxu0 %v781
        %784 = vmatpush1.bf16.msra.mxu0 %v778
        %785 = vmatprep.subr.bf16.mxu0 0
        %786 = vmatpush1.bf16.msra.mxu0 0
        %787 = vmatprep.subr.bf16.mxu0 0
        %788 = vmatpush1.bf16.msra.mxu0 0
        %789 = vmatprep.subr.bf16.mxu0 0
        %790 = vmatpush1.bf16.msra.mxu0 0
        %791 = vmatprep.subr.bf16.mxu0 0
        %792 = vmatpush1.bf16.msra.mxu0 0
        %793 = vmatprep.subr.bf16.mxu0 0
        %794 = vmatpush1.bf16.msra.mxu0 0
        %795 = vmatprep.subr.bf16.mxu0 0
        %796 = vmatpush1.bf16.msra.mxu0 0
        %797 = vmatprep.subr.bf16.mxu0 0
        %798 = vmatpush1.bf16.msra.mxu0 0
        %799 = vmatprep.subr.bf16.mxu0 0
        %800 = vmatpush1.bf16.msra.mxu0 0
        %801 = vmatprep.subr.bf16.mxu0 0
        %802 = vmatpush1.bf16.msra.mxu0 0
        %803 = vmatprep.subr.bf16.mxu0 0
        %804 = vmatpush1.bf16.msra.mxu0 0
        %805 = vmatprep.subr.bf16.mxu0 0
        %806 = vmatpush1.bf16.msra.mxu0 0
        %807 = vmatprep.subr.bf16.mxu0 0
        %808 = vmatpush1.bf16.msra.mxu0 0
        %809 = vmatprep.subr.bf16.mxu0 0
        %810 = vmatpush1.bf16.msra.mxu0 0
        %811 = vmatprep.subr.bf16.mxu0 0
        %812 = vmatpush1.bf16.msra.mxu0 0
        %813 = vmatprep.subr.bf16.mxu0 0
        %814 = vmatpush1.bf16.msra.mxu0 0
        %815 = vmatprep.mubr.bf16.mxu0 0
        %816 = vmatmul.mubr.bf16.gmra.mrb[0].mxu0 %v775
        %v817 = vpop.f32.mrb[0].mxu0
        %v818 = vadd.f32 0.0, %v817
        %v819 = vpop.f32.mrb[0].mxu0
        %v820 = vadd.f32 0.0, %v819
        %v821 = vpop.f32.mrb[0].mxu0
        %v822 = vpop.f32.mrb[0].mxu0
        %823 = vdwg.mxu0
        %v824 = vadd.f32 %v746, %v818
        %v825 = vadd.f32 %v747, %v820
        %826 = vrot.lane.b32.xlu0 %v366, 113
        %v827 = vpop.permute.xlu0 %826
        %828 = vrot.lane.b32.xlu0 %v368, 113
        %v829 = vpop.permute.xlu0 %828
        %vm830 = vcmp.lt.s32.totalorder %v375, 113
        %v831 = vsel %vm830, %v827, %v829
        %v832 = vsel %vm830, %v829, %v827
        %vm833 = vcmp.ge.s32.totalorder %v332, 4294967295
        %vm834 = vcmp.lt.s32.totalorder %v332, 15
        %vm835 = vmand %vm833, %vm834
        %vm836 = vmand %vm835, %vm382
        %vm837 = vmand %vm836, %vm384
        %v838 = vsel %vm837, 1, 0
        %v839 = vcvt.s32.f32 %v838
        %v841 = vlaneseq
        %v842 = vshrl.u32 %v841, 7
        %v843 = vsub.s32 0, %v842
        %v844 = vrot.slane %v839, %v843
        %v845 = vlaneseq
        %v846 = vshrl.u32 %v845, 7
        %v847 = vsub.s32 1, %v846
        %v848 = vrot.slane %v839, %v847
        %v851 = vmul.f32 %v831, %v844
        %v852 = vmul.f32 %v832, %v848
        %v853 = vpack.c.bf16 %v851, %v851
        %v854 = vpack.c.bf16 %v852, %v852
        %v856 = vsel %vm431, %v340, 0
        %v859 = vsel %vm435, %v853, 0
        %v862 = vsel %vm435, %v854, 0
        %864 = vmatprep.subr.bf16.mxu0 %v862
        %865 = vmatpush1.bf16.msra.mxu0 %v859
        %866 = vmatprep.subr.bf16.mxu0 0
        %867 = vmatpush1.bf16.msra.mxu0 0
        %868 = vmatprep.subr.bf16.mxu0 0
        %869 = vmatpush1.bf16.msra.mxu0 0
        %870 = vmatprep.subr.bf16.mxu0 0
        %871 = vmatpush1.bf16.msra.mxu0 0
        %872 = vmatprep.subr.bf16.mxu0 0
        %873 = vmatpush1.bf16.msra.mxu0 0
        %874 = vmatprep.subr.bf16.mxu0 0
        %875 = vmatpush1.bf16.msra.mxu0 0
        %876 = vmatprep.subr.bf16.mxu0 0
        %877 = vmatpush1.bf16.msra.mxu0 0
        %878 = vmatprep.subr.bf16.mxu0 0
        %879 = vmatpush1.bf16.msra.mxu0 0
        %880 = vmatprep.subr.bf16.mxu0 0
        %881 = vmatpush1.bf16.msra.mxu0 0
        %882 = vmatprep.subr.bf16.mxu0 0
        %883 = vmatpush1.bf16.msra.mxu0 0
        %884 = vmatprep.subr.bf16.mxu0 0
        %885 = vmatpush1.bf16.msra.mxu0 0
        %886 = vmatprep.subr.bf16.mxu0 0
        %887 = vmatpush1.bf16.msra.mxu0 0
        %888 = vmatprep.subr.bf16.mxu0 0
        %889 = vmatpush1.bf16.msra.mxu0 0
        %890 = vmatprep.subr.bf16.mxu0 0
        %891 = vmatpush1.bf16.msra.mxu0 0
        %892 = vmatprep.subr.bf16.mxu0 0
        %893 = vmatpush1.bf16.msra.mxu0 0
        %894 = vmatprep.subr.bf16.mxu0 0
        %895 = vmatpush1.bf16.msra.mxu0 0
        %896 = vmatprep.mubr.bf16.mxu0 0
        %897 = vmatmul.mubr.bf16.gmra.mrb[0].mxu0 %v856
        %v898 = vpop.f32.mrb[0].mxu0
        %v899 = vadd.f32 0.0, %v898
        %v900 = vpop.f32.mrb[0].mxu0
        %v901 = vadd.f32 0.0, %v900
        %v902 = vpop.f32.mrb[0].mxu0
        %v903 = vpop.f32.mrb[0].mxu0
        %904 = vdwg.mxu0
        %v905 = vadd.f32 %v824, %v899
        %v906 = vadd.f32 %v825, %v901
        %907 = vrot.lane.b32.xlu0 %v366, 112
        %v908 = vpop.permute.xlu0 %907
        %909 = vrot.lane.b32.xlu0 %v368, 112
        %v910 = vpop.permute.xlu0 %909
        %vm911 = vcmp.lt.s32.totalorder %v375, 112
        %v912 = vsel %vm911, %v908, %v910
        %v913 = vsel %vm911, %v910, %v908
        %vm914 = vmand %vm835, %vm410
        %vm915 = vmand %vm914, %vm412
        %v916 = vsel %vm915, 1, 0
        %v917 = vcvt.s32.f32 %v916
        %v919 = vlaneseq
        %v920 = vshrl.u32 %v919, 7
        %v921 = vsub.s32 0, %v920
        %v922 = vrot.slane %v917, %v921
        %v923 = vlaneseq
        %v924 = vshrl.u32 %v923, 7
        %v925 = vsub.s32 1, %v924
        %v926 = vrot.slane %v917, %v925
        %v929 = vmul.f32 %v912, %v922
        %v930 = vmul.f32 %v913, %v926
        %v931 = vpack.c.bf16 %v929, %v929
        %v932 = vpack.c.bf16 %v930, %v930
        %v934 = vsel %vm431, %v341, 0
        %v937 = vsel %vm435, %v931, 0
        %v940 = vsel %vm435, %v932, 0
        %942 = vmatprep.subr.bf16.mxu0 %v940
        %943 = vmatpush1.bf16.msra.mxu0 %v937
        %944 = vmatprep.subr.bf16.mxu0 0
        %945 = vmatpush1.bf16.msra.mxu0 0
        %946 = vmatprep.subr.bf16.mxu0 0
        %947 = vmatpush1.bf16.msra.mxu0 0
        %948 = vmatprep.subr.bf16.mxu0 0
        %949 = vmatpush1.bf16.msra.mxu0 0
        %950 = vmatprep.subr.bf16.mxu0 0
        %951 = vmatpush1.bf16.msra.mxu0 0
        %952 = vmatprep.subr.bf16.mxu0 0
        %953 = vmatpush1.bf16.msra.mxu0 0
        %954 = vmatprep.subr.bf16.mxu0 0
        %955 = vmatpush1.bf16.msra.mxu0 0
        %956 = vmatprep.subr.bf16.mxu0 0
        %957 = vmatpush1.bf16.msra.mxu0 0
        %958 = vmatprep.subr.bf16.mxu0 0
        %959 = vmatpush1.bf16.msra.mxu0 0
        %960 = vmatprep.subr.bf16.mxu0 0
        %961 = vmatpush1.bf16.msra.mxu0 0
        %962 = vmatprep.subr.bf16.mxu0 0
        %963 = vmatpush1.bf16.msra.mxu0 0
        %964 = vmatprep.subr.bf16.mxu0 0
        %965 = vmatpush1.bf16.msra.mxu0 0
        %966 = vmatprep.subr.bf16.mxu0 0
        %967 = vmatpush1.bf16.msra.mxu0 0
        %968 = vmatprep.subr.bf16.mxu0 0
        %969 = vmatpush1.bf16.msra.mxu0 0
        %970 = vmatprep.subr.bf16.mxu0 0
        %971 = vmatpush1.bf16.msra.mxu0 0
        %972 = vmatprep.subr.bf16.mxu0 0
        %973 = vmatpush1.bf16.msra.mxu0 0
        %974 = vmatprep.mubr.bf16.mxu0 0
        %975 = vmatmul.mubr.bf16.gmra.mrb[0].mxu0 %v934
        %v976 = vpop.f32.mrb[0].mxu0
        %v977 = vadd.f32 0.0, %v976
        %v978 = vpop.f32.mrb[0].mxu0
        %v979 = vadd.f32 0.0, %v978
        %v980 = vpop.f32.mrb[0].mxu0
        %v981 = vpop.f32.mrb[0].mxu0
        %982 = vdwg.mxu0
        %v983 = vadd.f32 %v905, %v977
        %v984 = vadd.f32 %v906, %v979
        %985 = vrot.lane.b32.xlu0 %v366, 111
        %v986 = vpop.permute.xlu0 %985
        %987 = vrot.lane.b32.xlu0 %v368, 111
        %v988 = vpop.permute.xlu0 %987
        %vm989 = vcmp.lt.s32.totalorder %v375, 111
        %v990 = vsel %vm989, %v986, %v988
        %v991 = vsel %vm989, %v988, %v986
        %vm992 = vmand %vm835, %vm540
        %vm993 = vmand %vm992, %vm542
        %v994 = vsel %vm993, 1, 0
        %v995 = vcvt.s32.f32 %v994
        %v997 = vlaneseq
        %v998 = vshrl.u32 %v997, 7
        %v999 = vsub.s32 0, %v998
        %v1000 = vrot.slane %v995, %v999
        %v1001 = vlaneseq
        %v1002 = vshrl.u32 %v1001, 7
        %v1003 = vsub.s32 1, %v1002
        %v1004 = vrot.slane %v995, %v1003
        %v1007 = vmul.f32 %v990, %v1000
        %v1008 = vmul.f32 %v991, %v1004
        %v1009 = vpack.c.bf16 %v1007, %v1007
        %v1010 = vpack.c.bf16 %v1008, %v1008
        %v1012 = vsel %vm431, %v342, 0
        %v1015 = vsel %vm435, %v1009, 0
        %v1018 = vsel %vm435, %v1010, 0
        %1020 = vmatprep.subr.bf16.mxu0 %v1018
        %1021 = vmatpush1.bf16.msra.mxu0 %v1015
        %1022 = vmatprep.subr.bf16.mxu0 0
        %1023 = vmatpush1.bf16.msra.mxu0 0
        %1024 = vmatprep.subr.bf16.mxu0 0
        %1025 = vmatpush1.bf16.msra.mxu0 0
        %1026 = vmatprep.subr.bf16.mxu0 0
        %1027 = vmatpush1.bf16.msra.mxu0 0
        %1028 = vmatprep.subr.bf16.mxu0 0
        %1029 = vmatpush1.bf16.msra.mxu0 0
        %1030 = vmatprep.subr.bf16.mxu0 0
        %1031 = vmatpush1.bf16.msra.mxu0 0
        %1032 = vmatprep.subr.bf16.mxu0 0
        %1033 = vmatpush1.bf16.msra.mxu0 0
        %1034 = vmatprep.subr.bf16.mxu0 0
        %1035 = vmatpush1.bf16.msra.mxu0 0
        %1036 = vmatprep.subr.bf16.mxu0 0
        %1037 = vmatpush1.bf16.msra.mxu0 0
        %1038 = vmatprep.subr.bf16.mxu0 0
        %1039 = vmatpush1.bf16.msra.mxu0 0
        %1040 = vmatprep.subr.bf16.mxu0 0
        %1041 = vmatpush1.bf16.msra.mxu0 0
        %1042 = vmatprep.subr.bf16.mxu0 0
        %1043 = vmatpush1.bf16.msra.mxu0 0
        %1044 = vmatprep.subr.bf16.mxu0 0
        %1045 = vmatpush1.bf16.msra.mxu0 0
        %1046 = vmatprep.subr.bf16.mxu0 0
        %1047 = vmatpush1.bf16.msra.mxu0 0
        %1048 = vmatprep.subr.bf16.mxu0 0
        %1049 = vmatpush1.bf16.msra.mxu0 0
        %1050 = vmatprep.subr.bf16.mxu0 0
        %1051 = vmatpush1.bf16.msra.mxu0 0
        %1052 = vmatprep.mubr.bf16.mxu0 0
        %1053 = vmatmul.mubr.bf16.gmra.mrb[0].mxu0 %v1012
        %v1054 = vpop.f32.mrb[0].mxu0
        %v1055 = vadd.f32 0.0, %v1054
        %v1056 = vpop.f32.mrb[0].mxu0
        %v1057 = vadd.f32 0.0, %v1056
        %v1058 = vpop.f32.mrb[0].mxu0
        %v1059 = vpop.f32.mrb[0].mxu0
        %1060 = vdwg.mxu0
        %v1061 = vadd.f32 %v983, %v1055
        %v1062 = vadd.f32 %v984, %v1057
        %1064 = vset.pattern.permute.xlu0 0
        %1065 = vperm.xlu0 %1064, %v363
        %v1066 = vpop.permute.xlu0 %1065
        %v1068 = vadd.f32 %v1061, %v1066
        %v1069 = vadd.f32 %v1062, %v1066
        %v1070 = vpack.c.bf16 %v1068, %v1068
        %v1071 = vpack.c.bf16 %v1069, %v1069
        %1072 = vrot.lane.b32.xlu0 %v1068, 17
        %v1073 = vpop.permute.xlu0 %1072
        %1074 = vrot.lane.b32.xlu0 %v1069, 17
        %v1075 = vpop.permute.xlu0 %1074
        %v1076 = vsel %vm376, %v1073, %v1075
        %v1077 = vsel %vm376, %v1075, %v1073
        %v1078 = vmul.f32 %v1077, %v392
        %v1079 = vmul.f32 %v1076, %v396
        %v1080 = vpack.c.bf16 %v1078, %v1078
        %v1081 = vpack.c.bf16 %v1079, %v1079
        %vm1082 = vcmask 64512
        %v1084 = vsel %vm1082, %v344, 0
        %vm1086 = vcmask 1043456
        %v1088 = vsel %vm1086, %v1080, 0
        %v1091 = vsel %vm1086, %v1081, 0
        %1093 = vmatprep.subr.bf16.mxu0 %v1091
        %1094 = vmatpush1.bf16.msra.mxu0 %v1088
        %1095 = vmatprep.subr.bf16.mxu0 0
        %1096 = vmatpush1.bf16.msra.mxu0 0
        %1097 = vmatprep.subr.bf16.mxu0 0
        %1098 = vmatpush1.bf16.msra.mxu0 0
        %1099 = vmatprep.subr.bf16.mxu0 0
        %1100 = vmatpush1.bf16.msra.mxu0 0
        %1101 = vmatprep.subr.bf16.mxu0 0
        %1102 = vmatpush1.bf16.msra.mxu0 0
        %1103 = vmatprep.subr.bf16.mxu0 0
        %1104 = vmatpush1.bf16.msra.mxu0 0
        %1105 = vmatprep.subr.bf16.mxu0 0
        %1106 = vmatpush1.bf16.msra.mxu0 0
        %1107 = vmatprep.subr.bf16.mxu0 0
        %1108 = vmatpush1.bf16.msra.mxu0 0
        %1109 = vmatprep.subr.bf16.mxu0 0
        %1110 = vmatpush1.bf16.msra.mxu0 0
        %1111 = vmatprep.subr.bf16.mxu0 0
        %1112 = vmatpush1.bf16.msra.mxu0 0
        %1113 = vmatprep.subr.bf16.mxu0 0
        %1114 = vmatpush1.bf16.msra.mxu0 0
        %1115 = vmatprep.subr.bf16.mxu0 0
        %1116 = vmatpush1.bf16.msra.mxu0 0
        %1117 = vmatprep.subr.bf16.mxu0 0
        %1118 = vmatpush1.bf16.msra.mxu0 0
        %1119 = vmatprep.subr.bf16.mxu0 0
        %1120 = vmatpush1.bf16.msra.mxu0 0
        %1121 = vmatprep.subr.bf16.mxu0 0
        %1122 = vmatpush1.bf16.msra.mxu0 0
        %1123 = vmatprep.subr.bf16.mxu0 0
        %1124 = vmatpush1.bf16.msra.mxu0 0
        %1125 = vmatprep.mubr.bf16.mxu0 0
        %1126 = vmatmul.mubr.bf16.gmra.mrb[0].mxu0 %v1084
        %v1127 = vpop.f32.mrb[0].mxu0
        %v1128 = vadd.f32 0.0, %v1127
        %v1129 = vpop.f32.mrb[0].mxu0
        %v1130 = vadd.f32 0.0, %v1129
        %v1131 = vpop.f32.mrb[0].mxu0
        %v1132 = vpop.f32.mrb[0].mxu0
        %1133 = vdwg.mxu0
        %v1135 = vsel %vm1082, %v343, 0
        %v1138 = vsel %vm1086, %v1070, 0
        %v1141 = vsel %vm1086, %v1071, 0
        %1143 = vmatprep.subr.bf16.mxu0 %v1141
        %1144 = vmatpush1.bf16.msra.mxu0 %v1138
        %1145 = vmatprep.subr.bf16.mxu0 0
        %1146 = vmatpush1.bf16.msra.mxu0 0
        %1147 = vmatprep.subr.bf16.mxu0 0
        %1148 = vmatpush1.bf16.msra.mxu0 0
        %1149 = vmatprep.subr.bf16.mxu0 0
        %1150 = vmatpush1.bf16.msra.mxu0 0
        %1151 = vmatprep.subr.bf16.mxu0 0
        %1152 = vmatpush1.bf16.msra.mxu0 0
        %1153 = vmatprep.subr.bf16.mxu0 0
        %1154 = vmatpush1.bf16.msra.mxu0 0
        %1155 = vmatprep.subr.bf16.mxu0 0
        %1156 = vmatpush1.bf16.msra.mxu0 0
        %1157 = vmatprep.subr.bf16.mxu0 0
        %1158 = vmatpush1.bf16.msra.mxu0 0
        %1159 = vmatprep.subr.bf16.mxu0 0
        %1160 = vmatpush1.bf16.msra.mxu0 0
        %1161 = vmatprep.subr.bf16.mxu0 0
        %1162 = vmatpush1.bf16.msra.mxu0 0
        %1163 = vmatprep.subr.bf16.mxu0 0
        %1164 = vmatpush1.bf16.msra.mxu0 0
        %1165 = vmatprep.subr.bf16.mxu0 0
        %1166 = vmatpush1.bf16.msra.mxu0 0
        %1167 = vmatprep.subr.bf16.mxu0 0
        %1168 = vmatpush1.bf16.msra.mxu0 0
        %1169 = vmatprep.subr.bf16.mxu0 0
        %1170 = vmatpush1.bf16.msra.mxu0 0
        %1171 = vmatprep.subr.bf16.mxu0 0
        %1172 = vmatpush1.bf16.msra.mxu0 0
        %1173 = vmatprep.subr.bf16.mxu0 0
        %1174 = vmatpush1.bf16.msra.mxu0 0
        %1175 = vmatprep.mubr.bf16.mxu0 0
        %1176 = vmatmul.mubr.bf16.gmra.mrb[0].mxu0 %v1135
        %v1177 = vpop.f32.mrb[0].mxu0
        %v1178 = vadd.f32 %v1128, %v1177
        %v1179 = vpop.f32.mrb[0].mxu0
        %v1180 = vadd.f32 %v1130, %v1179
        %v1181 = vpop.f32.mrb[0].mxu0
        %v1182 = vpop.f32.mrb[0].mxu0
        %1183 = vdwg.mxu0
        %1184 = vrot.lane.b32.xlu0 %v1068, 16
        %v1185 = vpop.permute.xlu0 %1184
        %1186 = vrot.lane.b32.xlu0 %v1069, 16
        %v1187 = vpop.permute.xlu0 %1186
        %v1188 = vsel %vm407, %v1185, %v1187
        %v1189 = vsel %vm407, %v1187, %v1185
        %v1190 = vmul.f32 %v1189, %v420
        %v1191 = vmul.f32 %v1188, %v424
        %v1192 = vpack.c.bf16 %v1190, %v1190
        %v1193 = vpack.c.bf16 %v1191, %v1191
        %v1195 = vsel %vm1082, %v345, 0
        %v1198 = vsel %vm1086, %v1192, 0
        %v1201 = vsel %vm1086, %v1193, 0
        %1203 = vmatprep.subr.bf16.mxu0 %v1201
        %1204 = vmatpush1.bf16.msra.mxu0 %v1198
        %1205 = vmatprep.subr.bf16.mxu0 0
        %1206 = vmatpush1.bf16.msra.mxu0 0
        %1207 = vmatprep.subr.bf16.mxu0 0
        %1208 = vmatpush1.bf16.msra.mxu0 0
        %1209 = vmatprep.subr.bf16.mxu0 0
        %1210 = vmatpush1.bf16.msra.mxu0 0
        %1211 = vmatprep.subr.bf16.mxu0 0
        %1212 = vmatpush1.bf16.msra.mxu0 0
        %1213 = vmatprep.subr.bf16.mxu0 0
        %1214 = vmatpush1.bf16.msra.mxu0 0
        %1215 = vmatprep.subr.bf16.mxu0 0
        %1216 = vmatpush1.bf16.msra.mxu0 0
        %1217 = vmatprep.subr.bf16.mxu0 0
        %1218 = vmatpush1.bf16.msra.mxu0 0
        %1219 = vmatprep.subr.bf16.mxu0 0
        %1220 = vmatpush1.bf16.msra.mxu0 0
        %1221 = vmatprep.subr.bf16.mxu0 0
        %1222 = vmatpush1.bf16.msra.mxu0 0
        %1223 = vmatprep.subr.bf16.mxu0 0
        %1224 = vmatpush1.bf16.msra.mxu0 0
        %1225 = vmatprep.subr.bf16.mxu0 0
        %1226 = vmatpush1.bf16.msra.mxu0 0
        %1227 = vmatprep.subr.bf16.mxu0 0
        %1228 = vmatpush1.bf16.msra.mxu0 0
        %1229 = vmatprep.subr.bf16.mxu0 0
        %1230 = vmatpush1.bf16.msra.mxu0 0
        %1231 = vmatprep.subr.bf16.mxu0 0
        %1232 = vmatpush1.bf16.msra.mxu0 0
        %1233 = vmatprep.subr.bf16.mxu0 0
        %1234 = vmatpush1.bf16.msra.mxu0 0
        %1235 = vmatprep.mubr.bf16.mxu0 0
        %1236 = vmatmul.mubr.bf16.gmra.mrb[0].mxu0 %v1195
        %v1237 = vpop.f32.mrb[0].mxu0
        %v1238 = vadd.f32 0.0, %v1237
        %v1239 = vpop.f32.mrb[0].mxu0
        %v1240 = vadd.f32 0.0, %v1239
        %v1241 = vpop.f32.mrb[0].mxu0
        %v1242 = vpop.f32.mrb[0].mxu0
        %1243 = vdwg.mxu0
        %v1244 = vadd.f32 %v1178, %v1238
        %v1245 = vadd.f32 %v1180, %v1240
        %1246 = vrot.lane.b32.xlu0 %v1068, 15
        %v1247 = vpop.permute.xlu0 %1246
        %1248 = vrot.lane.b32.xlu0 %v1069, 15
        %v1249 = vpop.permute.xlu0 %1248
        %v1250 = vsel %vm537, %v1247, %v1249
        %v1251 = vsel %vm537, %v1249, %v1247
        %v1252 = vmul.f32 %v1251, %v550
        %v1253 = vmul.f32 %v1250, %v554
        %v1254 = vpack.c.bf16 %v1252, %v1252
        %v1255 = vpack.c.bf16 %v1253, %v1253
        %v1257 = vsel %vm1082, %v346, 0
        %v1260 = vsel %vm1086, %v1254, 0
        %v1263 = vsel %vm1086, %v1255, 0
        %1265 = vmatprep.subr.bf16.mxu0 %v1263
        %1266 = vmatpush1.bf16.msra.mxu0 %v1260
        %1267 = vmatprep.subr.bf16.mxu0 0
        %1268 = vmatpush1.bf16.msra.mxu0 0
        %1269 = vmatprep.subr.bf16.mxu0 0
        %1270 = vmatpush1.bf16.msra.mxu0 0
        %1271 = vmatprep.subr.bf16.mxu0 0
        %1272 = vmatpush1.bf16.msra.mxu0 0
        %1273 = vmatprep.subr.bf16.mxu0 0
        %1274 = vmatpush1.bf16.msra.mxu0 0
        %1275 = vmatprep.subr.bf16.mxu0 0
        %1276 = vmatpush1.bf16.msra.mxu0 0
        %1277 = vmatprep.subr.bf16.mxu0 0
        %1278 = vmatpush1.bf16.msra.mxu0 0
        %1279 = vmatprep.subr.bf16.mxu0 0
        %1280 = vmatpush1.bf16.msra.mxu0 0
        %1281 = vmatprep.subr.bf16.mxu0 0
        %1282 = vmatpush1.bf16.msra.mxu0 0
        %1283 = vmatprep.subr.bf16.mxu0 0
        %1284 = vmatpush1.bf16.msra.mxu0 0
        %1285 = vmatprep.subr.bf16.mxu0 0
        %1286 = vmatpush1.bf16.msra.mxu0 0
        %1287 = vmatprep.subr.bf16.mxu0 0
        %1288 = vmatpush1.bf16.msra.mxu0 0
        %1289 = vmatprep.subr.bf16.mxu0 0
        %1290 = vmatpush1.bf16.msra.mxu0 0
        %1291 = vmatprep.subr.bf16.mxu0 0
        %1292 = vmatpush1.bf16.msra.mxu0 0
        %1293 = vmatprep.subr.bf16.mxu0 0
        %1294 = vmatpush1.bf16.msra.mxu0 0
        %1295 = vmatprep.subr.bf16.mxu0 0
        %1296 = vmatpush1.bf16.msra.mxu0 0
        %1297 = vmatprep.mubr.bf16.mxu0 0
        %1298 = vmatmul.mubr.bf16.gmra.mrb[0].mxu0 %v1257
        %v1299 = vpop.f32.mrb[0].mxu0
        %v1300 = vadd.f32 0.0, %v1299
        %v1301 = vpop.f32.mrb[0].mxu0
        %v1302 = vadd.f32 0.0, %v1301
        %v1303 = vpop.f32.mrb[0].mxu0
        %v1304 = vpop.f32.mrb[0].mxu0
        %1305 = vdwg.mxu0
        %v1306 = vadd.f32 %v1244, %v1300
        %v1307 = vadd.f32 %v1245, %v1302
        %1308 = vrot.lane.b32.xlu0 %v1068, 1
        %v1309 = vpop.permute.xlu0 %1308
        %1310 = vrot.lane.b32.xlu0 %v1069, 1
        %v1311 = vpop.permute.xlu0 %1310
        %v1312 = vsel %vm617, %v1309, %v1311
        %v1313 = vsel %vm617, %v1311, %v1309
        %v1314 = vmul.f32 %v1313, %v631
        %v1315 = vmul.f32 %v1312, %v635
        %v1316 = vpack.c.bf16 %v1314, %v1314
        %v1317 = vpack.c.bf16 %v1315, %v1315
        %v1319 = vsel %vm1082, %v347, 0
        %v1322 = vsel %vm1086, %v1316, 0
        %v1325 = vsel %vm1086, %v1317, 0
        %1327 = vmatprep.subr.bf16.mxu0 %v1325
        %1328 = vmatpush1.bf16.msra.mxu0 %v1322
        %1329 = vmatprep.subr.bf16.mxu0 0
        %1330 = vmatpush1.bf16.msra.mxu0 0
        %1331 = vmatprep.subr.bf16.mxu0 0
        %1332 = vmatpush1.bf16.msra.mxu0 0
        %1333 = vmatprep.subr.bf16.mxu0 0
        %1334 = vmatpush1.bf16.msra.mxu0 0
        %1335 = vmatprep.subr.bf16.mxu0 0
        %1336 = vmatpush1.bf16.msra.mxu0 0
        %1337 = vmatprep.subr.bf16.mxu0 0
        %1338 = vmatpush1.bf16.msra.mxu0 0
        %1339 = vmatprep.subr.bf16.mxu0 0
        %1340 = vmatpush1.bf16.msra.mxu0 0
        %1341 = vmatprep.subr.bf16.mxu0 0
        %1342 = vmatpush1.bf16.msra.mxu0 0
        %1343 = vmatprep.subr.bf16.mxu0 0
        %1344 = vmatpush1.bf16.msra.mxu0 0
        %1345 = vmatprep.subr.bf16.mxu0 0
        %1346 = vmatpush1.bf16.msra.mxu0 0
        %1347 = vmatprep.subr.bf16.mxu0 0
        %1348 = vmatpush1.bf16.msra.mxu0 0
        %1349 = vmatprep.subr.bf16.mxu0 0
        %1350 = vmatpush1.bf16.msra.mxu0 0
        %1351 = vmatprep.subr.bf16.mxu0 0
        %1352 = vmatpush1.bf16.msra.mxu0 0
        %1353 = vmatprep.subr.bf16.mxu0 0
        %1354 = vmatpush1.bf16.msra.mxu0 0
        %1355 = vmatprep.subr.bf16.mxu0 0
        %1356 = vmatpush1.bf16.msra.mxu0 0
        %1357 = vmatprep.subr.bf16.mxu0 0
        %1358 = vmatpush1.bf16.msra.mxu0 0
        %1359 = vmatprep.mubr.bf16.mxu0 0
        %1360 = vmatmul.mubr.bf16.gmra.mrb[0].mxu0 %v1319
        %v1361 = vpop.f32.mrb[0].mxu0
        %v1362 = vadd.f32 0.0, %v1361
        %v1363 = vpop.f32.mrb[0].mxu0
        %v1364 = vadd.f32 0.0, %v1363
        %v1365 = vpop.f32.mrb[0].mxu0
        %v1366 = vpop.f32.mrb[0].mxu0
        %1367 = vdwg.mxu0
        %v1368 = vadd.f32 %v1306, %v1362
        %v1369 = vadd.f32 %v1307, %v1364
        %v1371 = vsel %vm1082, %v348, 0
        %1373 = vmatprep.subr.bf16.mxu0 %v1141
        %1374 = vmatpush1.bf16.msra.mxu0 %v1138
        %1375 = vmatprep.subr.bf16.mxu0 0
        %1376 = vmatpush1.bf16.msra.mxu0 0
        %1377 = vmatprep.subr.bf16.mxu0 0
        %1378 = vmatpush1.bf16.msra.mxu0 0
        %1379 = vmatprep.subr.bf16.mxu0 0
        %1380 = vmatpush1.bf16.msra.mxu0 0
        %1381 = vmatprep.subr.bf16.mxu0 0
        %1382 = vmatpush1.bf16.msra.mxu0 0
        %1383 = vmatprep.subr.bf16.mxu0 0
        %1384 = vmatpush1.bf16.msra.mxu0 0
        %1385 = vmatprep.subr.bf16.mxu0 0
        %1386 = vmatpush1.bf16.msra.mxu0 0
        %1387 = vmatprep.subr.bf16.mxu0 0
        %1388 = vmatpush1.bf16.msra.mxu0 0
        %1389 = vmatprep.subr.bf16.mxu0 0
        %1390 = vmatpush1.bf16.msra.mxu0 0
        %1391 = vmatprep.subr.bf16.mxu0 0
        %1392 = vmatpush1.bf16.msra.mxu0 0
        %1393 = vmatprep.subr.bf16.mxu0 0
        %1394 = vmatpush1.bf16.msra.mxu0 0
        %1395 = vmatprep.subr.bf16.mxu0 0
        %1396 = vmatpush1.bf16.msra.mxu0 0
        %1397 = vmatprep.subr.bf16.mxu0 0
        %1398 = vmatpush1.bf16.msra.mxu0 0
        %1399 = vmatprep.subr.bf16.mxu0 0
        %1400 = vmatpush1.bf16.msra.mxu0 0
        %1401 = vmatprep.subr.bf16.mxu0 0
        %1402 = vmatpush1.bf16.msra.mxu0 0
        %1403 = vmatprep.subr.bf16.mxu0 0
        %1404 = vmatpush1.bf16.msra.mxu0 0
        %1405 = vmatprep.mubr.bf16.mxu0 0
        %1406 = vmatmul.mubr.bf16.gmra.mrb[0].mxu0 %v1371
        %v1407 = vpop.f32.mrb[0].mxu0
        %v1408 = vadd.f32 0.0, %v1407
        %v1409 = vpop.f32.mrb[0].mxu0
        %v1410 = vadd.f32 0.0, %v1409
        %v1411 = vpop.f32.mrb[0].mxu0
        %v1412 = vpop.f32.mrb[0].mxu0
        %1413 = vdwg.mxu0
        %v1414 = vadd.f32 %v1368, %v1408
        %v1415 = vadd.f32 %v1369, %v1410
        %1416 = vrot.lane.b32.xlu0 %v1068, 127
        %v1417 = vpop.permute.xlu0 %1416
        %1418 = vrot.lane.b32.xlu0 %v1069, 127
        %v1419 = vpop.permute.xlu0 %1418
        %v1420 = vsel %vm752, %v1417, %v1419
        %v1421 = vsel %vm752, %v1419, %v1417
        %v1422 = vmul.f32 %v1420, %v763
        %v1423 = vmul.f32 %v1421, %v767
        %v1424 = vpack.c.bf16 %v1422, %v1422
        %v1425 = vpack.c.bf16 %v1423, %v1423
        %v1427 = vsel %vm1082, %v349, 0
        %v1430 = vsel %vm1086, %v1424, 0
        %v1433 = vsel %vm1086, %v1425, 0
        %1435 = vmatprep.subr.bf16.mxu0 %v1433
        %1436 = vmatpush1.bf16.msra.mxu0 %v1430
        %1437 = vmatprep.subr.bf16.mxu0 0
        %1438 = vmatpush1.bf16.msra.mxu0 0
        %1439 = vmatprep.subr.bf16.mxu0 0
        %1440 = vmatpush1.bf16.msra.mxu0 0
        %1441 = vmatprep.subr.bf16.mxu0 0
        %1442 = vmatpush1.bf16.msra.mxu0 0
        %1443 = vmatprep.subr.bf16.mxu0 0
        %1444 = vmatpush1.bf16.msra.mxu0 0
        %1445 = vmatprep.subr.bf16.mxu0 0
        %1446 = vmatpush1.bf16.msra.mxu0 0
        %1447 = vmatprep.subr.bf16.mxu0 0
        %1448 = vmatpush1.bf16.msra.mxu0 0
        %1449 = vmatprep.subr.bf16.mxu0 0
        %1450 = vmatpush1.bf16.msra.mxu0 0
        %1451 = vmatprep.subr.bf16.mxu0 0
        %1452 = vmatpush1.bf16.msra.mxu0 0
        %1453 = vmatprep.subr.bf16.mxu0 0
        %1454 = vmatpush1.bf16.msra.mxu0 0
        %1455 = vmatprep.subr.bf16.mxu0 0
        %1456 = vmatpush1.bf16.msra.mxu0 0
        %1457 = vmatprep.subr.bf16.mxu0 0
        %1458 = vmatpush1.bf16.msra.mxu0 0
        %1459 = vmatprep.subr.bf16.mxu0 0
        %1460 = vmatpush1.bf16.msra.mxu0 0
        %1461 = vmatprep.subr.bf16.mxu0 0
        %1462 = vmatpush1.bf16.msra.mxu0 0
        %1463 = vmatprep.subr.bf16.mxu0 0
        %1464 = vmatpush1.bf16.msra.mxu0 0
        %1465 = vmatprep.subr.bf16.mxu0 0
        %1466 = vmatpush1.bf16.msra.mxu0 0
        %1467 = vmatprep.mubr.bf16.mxu0 0
        %1468 = vmatmul.mubr.bf16.gmra.mrb[0].mxu0 %v1427
        %v1469 = vpop.f32.mrb[0].mxu0
        %v1470 = vadd.f32 0.0, %v1469
        %v1471 = vpop.f32.mrb[0].mxu0
        %v1472 = vadd.f32 0.0, %v1471
        %v1473 = vpop.f32.mrb[0].mxu0
        %v1474 = vpop.f32.mrb[0].mxu0
        %1475 = vdwg.mxu0
        %v1476 = vadd.f32 %v1414, %v1470
        %v1477 = vadd.f32 %v1415, %v1472
        %1478 = vrot.lane.b32.xlu0 %v1068, 113
        %v1479 = vpop.permute.xlu0 %1478
        %1480 = vrot.lane.b32.xlu0 %v1069, 113
        %v1481 = vpop.permute.xlu0 %1480
        %v1482 = vsel %vm830, %v1479, %v1481
        %v1483 = vsel %vm830, %v1481, %v1479
        %v1484 = vmul.f32 %v1482, %v844
        %v1485 = vmul.f32 %v1483, %v848
        %v1486 = vpack.c.bf16 %v1484, %v1484
        %v1487 = vpack.c.bf16 %v1485, %v1485
        %v1489 = vsel %vm1082, %v350, 0
        %v1492 = vsel %vm1086, %v1486, 0
        %v1495 = vsel %vm1086, %v1487, 0
        %1497 = vmatprep.subr.bf16.mxu0 %v1495
        %1498 = vmatpush1.bf16.msra.mxu0 %v1492
        %1499 = vmatprep.subr.bf16.mxu0 0
        %1500 = vmatpush1.bf16.msra.mxu0 0
        %1501 = vmatprep.subr.bf16.mxu0 0
        %1502 = vmatpush1.bf16.msra.mxu0 0
        %1503 = vmatprep.subr.bf16.mxu0 0
        %1504 = vmatpush1.bf16.msra.mxu0 0
        %1505 = vmatprep.subr.bf16.mxu0 0
        %1506 = vmatpush1.bf16.msra.mxu0 0
        %1507 = vmatprep.subr.bf16.mxu0 0
        %1508 = vmatpush1.bf16.msra.mxu0 0
        %1509 = vmatprep.subr.bf16.mxu0 0
        %1510 = vmatpush1.bf16.msra.mxu0 0
        %1511 = vmatprep.subr.bf16.mxu0 0
        %1512 = vmatpush1.bf16.msra.mxu0 0
        %1513 = vmatprep.subr.bf16.mxu0 0
        %1514 = vmatpush1.bf16.msra.mxu0 0
        %1515 = vmatprep.subr.bf16.mxu0 0
        %1516 = vmatpush1.bf16.msra.mxu0 0
        %1517 = vmatprep.subr.bf16.mxu0 0
        %1518 = vmatpush1.bf16.msra.mxu0 0
        %1519 = vmatprep.subr.bf16.mxu0 0
        %1520 = vmatpush1.bf16.msra.mxu0 0
        %1521 = vmatprep.subr.bf16.mxu0 0
        %1522 = vmatpush1.bf16.msra.mxu0 0
        %1523 = vmatprep.subr.bf16.mxu0 0
        %1524 = vmatpush1.bf16.msra.mxu0 0
        %1525 = vmatprep.subr.bf16.mxu0 0
        %1526 = vmatpush1.bf16.msra.mxu0 0
        %1527 = vmatprep.subr.bf16.mxu0 0
        %1528 = vmatpush1.bf16.msra.mxu0 0
        %1529 = vmatprep.mubr.bf16.mxu0 0
        %1530 = vmatmul.mubr.bf16.gmra.mrb[0].mxu0 %v1489
        %v1531 = vpop.f32.mrb[0].mxu0
        %v1532 = vadd.f32 0.0, %v1531
        %v1533 = vpop.f32.mrb[0].mxu0
        %v1534 = vadd.f32 0.0, %v1533
        %v1535 = vpop.f32.mrb[0].mxu0
        %v1536 = vpop.f32.mrb[0].mxu0
        %1537 = vdwg.mxu0
        %v1538 = vadd.f32 %v1476, %v1532
        %v1539 = vadd.f32 %v1477, %v1534
        %1540 = vrot.lane.b32.xlu0 %v1068, 112
        %v1541 = vpop.permute.xlu0 %1540
        %1542 = vrot.lane.b32.xlu0 %v1069, 112
        %v1543 = vpop.permute.xlu0 %1542
        %v1544 = vsel %vm911, %v1541, %v1543
        %v1545 = vsel %vm911, %v1543, %v1541
        %v1546 = vmul.f32 %v1544, %v922
        %v1547 = vmul.f32 %v1545, %v926
        %v1548 = vpack.c.bf16 %v1546, %v1546
        %v1549 = vpack.c.bf16 %v1547, %v1547
        %v1551 = vsel %vm1082, %v351, 0
        %v1554 = vsel %vm1086, %v1548, 0
        %v1557 = vsel %vm1086, %v1549, 0
        %1559 = vmatprep.subr.bf16.mxu0 %v1557
        %1560 = vmatpush1.bf16.msra.mxu0 %v1554
        %1561 = vmatprep.subr.bf16.mxu0 0
        %1562 = vmatpush1.bf16.msra.mxu0 0
        %1563 = vmatprep.subr.bf16.mxu0 0
        %1564 = vmatpush1.bf16.msra.mxu0 0
        %1565 = vmatprep.subr.bf16.mxu0 0
        %1566 = vmatpush1.bf16.msra.mxu0 0
        %1567 = vmatprep.subr.bf16.mxu0 0
        %1568 = vmatpush1.bf16.msra.mxu0 0
        %1569 = vmatprep.subr.bf16.mxu0 0
        %1570 = vmatpush1.bf16.msra.mxu0 0
        %1571 = vmatprep.subr.bf16.mxu0 0
        %1572 = vmatpush1.bf16.msra.mxu0 0
        %1573 = vmatprep.subr.bf16.mxu0 0
        %1574 = vmatpush1.bf16.msra.mxu0 0
        %1575 = vmatprep.subr.bf16.mxu0 0
        %1576 = vmatpush1.bf16.msra.mxu0 0
        %1577 = vmatprep.subr.bf16.mxu0 0
        %1578 = vmatpush1.bf16.msra.mxu0 0
        %1579 = vmatprep.subr.bf16.mxu0 0
        %1580 = vmatpush1.bf16.msra.mxu0 0
        %1581 = vmatprep.subr.bf16.mxu0 0
        %1582 = vmatpush1.bf16.msra.mxu0 0
        %1583 = vmatprep.subr.bf16.mxu0 0
        %1584 = vmatpush1.bf16.msra.mxu0 0
        %1585 = vmatprep.subr.bf16.mxu0 0
        %1586 = vmatpush1.bf16.msra.mxu0 0
        %1587 = vmatprep.subr.bf16.mxu0 0
        %1588 = vmatpush1.bf16.msra.mxu0 0
        %1589 = vmatprep.subr.bf16.mxu0 0
        %1590 = vmatpush1.bf16.msra.mxu0 0
        %1591 = vmatprep.mubr.bf16.mxu0 0
        %1592 = vmatmul.mubr.bf16.gmra.mrb[0].mxu0 %v1551
        %v1593 = vpop.f32.mrb[0].mxu0
        %v1594 = vadd.f32 0.0, %v1593
        %v1595 = vpop.f32.mrb[0].mxu0
        %v1596 = vadd.f32 0.0, %v1595
        %v1597 = vpop.f32.mrb[0].mxu0
        %v1598 = vpop.f32.mrb[0].mxu0
        %1599 = vdwg.mxu0
        %v1600 = vadd.f32 %v1538, %v1594
        %v1601 = vadd.f32 %v1539, %v1596
        %1602 = vrot.lane.b32.xlu0 %v1068, 111
        %v1603 = vpop.permute.xlu0 %1602
        %1604 = vrot.lane.b32.xlu0 %v1069, 111
        %v1605 = vpop.permute.xlu0 %1604
        %v1606 = vsel %vm989, %v1603, %v1605
        %v1607 = vsel %vm989, %v1605, %v1603
        %v1608 = vmul.f32 %v1606, %v1000
        %v1609 = vmul.f32 %v1607, %v1004
        %v1610 = vpack.c.bf16 %v1608, %v1608
        %v1611 = vpack.c.bf16 %v1609, %v1609
        %v1613 = vsel %vm1082, %v352, 0
        %v1616 = vsel %vm1086, %v1610, 0
        %v1619 = vsel %vm1086, %v1611, 0
        %1621 = vmatprep.subr.bf16.mxu0 %v1619
        %1622 = vmatpush1.bf16.msra.mxu0 %v1616
        %1623 = vmatprep.subr.bf16.mxu0 0
        %1624 = vmatpush1.bf16.msra.mxu0 0
        %1625 = vmatprep.subr.bf16.mxu0 0
        %1626 = vmatpush1.bf16.msra.mxu0 0
        %1627 = vmatprep.subr.bf16.mxu0 0
        %1628 = vmatpush1.bf16.msra.mxu0 0
        %1629 = vmatprep.subr.bf16.mxu0 0
        %1630 = vmatpush1.bf16.msra.mxu0 0
        %1631 = vmatprep.subr.bf16.mxu0 0
        %1632 = vmatpush1.bf16.msra.mxu0 0
        %1633 = vmatprep.subr.bf16.mxu0 0
        %1634 = vmatpush1.bf16.msra.mxu0 0
        %1635 = vmatprep.subr.bf16.mxu0 0
        %1636 = vmatpush1.bf16.msra.mxu0 0
        %1637 = vmatprep.subr.bf16.mxu0 0
        %1638 = vmatpush1.bf16.msra.mxu0 0
        %1639 = vmatprep.subr.bf16.mxu0 0
        %1640 = vmatpush1.bf16.msra.mxu0 0
        %1641 = vmatprep.subr.bf16.mxu0 0
        %1642 = vmatpush1.bf16.msra.mxu0 0
        %1643 = vmatprep.subr.bf16.mxu0 0
        %1644 = vmatpush1.bf16.msra.mxu0 0
        %1645 = vmatprep.subr.bf16.mxu0 0
        %1646 = vmatpush1.bf16.msra.mxu0 0
        %1647 = vmatprep.subr.bf16.mxu0 0
        %1648 = vmatpush1.bf16.msra.mxu0 0
        %1649 = vmatprep.subr.bf16.mxu0 0
        %1650 = vmatpush1.bf16.msra.mxu0 0
        %1651 = vmatprep.subr.bf16.mxu0 0
        %1652 = vmatpush1.bf16.msra.mxu0 0
        %1653 = vmatprep.mubr.bf16.mxu0 0
        %1654 = vmatmul.mubr.bf16.gmra.mrb[0].mxu0 %v1613
        %v1655 = vpop.f32.mrb[0].mxu0
        %v1656 = vadd.f32 0.0, %v1655
        %v1657 = vpop.f32.mrb[0].mxu0
        %v1658 = vadd.f32 0.0, %v1657
        %v1659 = vpop.f32.mrb[0].mxu0
        %v1660 = vpop.f32.mrb[0].mxu0
        %1661 = vdwg.mxu0
        %v1662 = vadd.f32 %v1600, %v1656
        %v1663 = vadd.f32 %v1601, %v1658
        %1664 = vrot.lane.b32.xlu0 %v1068, 34
        %v1665 = vpop.permute.xlu0 %1664
        %1666 = vrot.lane.b32.xlu0 %v1069, 34
        %v1667 = vpop.permute.xlu0 %1666
        %vm1668 = vcmp.lt.s32.totalorder %v375, 34
        %v1669 = vsel %vm1668, %v1665, %v1667
        %v1670 = vsel %vm1668, %v1667, %v1665
        %vm1671 = vcmp.ge.s32.totalorder %v332, 2
        %vm1672 = vcmp.lt.s32.totalorder %v332, 18
        %vm1673 = vmand %vm1671, %vm1672
        %vm1674 = vcmp.ge.s32.totalorder %v333, 2
        %vm1675 = vmand %vm1673, %vm1674
        %vm1676 = vcmp.lt.s32.totalorder %v333, 18
        %vm1677 = vmand %vm1675, %vm1676
        %v1678 = vsel %vm1677, 1, 0
        %v1679 = vcvt.s32.f32 %v1678
        %v1681 = vlaneseq
        %v1682 = vshrl.u32 %v1681, 7
        %v1683 = vsub.s32 0, %v1682
        %v1684 = vrot.slane %v1679, %v1683
        %v1685 = vlaneseq
        %v1686 = vshrl.u32 %v1685, 7
        %v1687 = vsub.s32 1, %v1686
        %v1688 = vrot.slane %v1679, %v1687
        %v1691 = vmul.f32 %v1670, %v1684
        %v1692 = vmul.f32 %v1669, %v1688
        %v1693 = vpack.c.bf16 %v1691, %v1691
        %v1694 = vpack.c.bf16 %v1692, %v1692
        %v1696 = vsel %vm1082, %v353, 0
        %v1699 = vsel %vm1086, %v1693, 0
        %v1702 = vsel %vm1086, %v1694, 0
        %1704 = vmatprep.subr.bf16.mxu0 %v1702
        %1705 = vmatpush1.bf16.msra.mxu0 %v1699
        %1706 = vmatprep.subr.bf16.mxu0 0
        %1707 = vmatpush1.bf16.msra.mxu0 0
        %1708 = vmatprep.subr.bf16.mxu0 0
        %1709 = vmatpush1.bf16.msra.mxu0 0
        %1710 = vmatprep.subr.bf16.mxu0 0
        %1711 = vmatpush1.bf16.msra.mxu0 0
        %1712 = vmatprep.subr.bf16.mxu0 0
        %1713 = vmatpush1.bf16.msra.mxu0 0
        %1714 = vmatprep.subr.bf16.mxu0 0
        %1715 = vmatpush1.bf16.msra.mxu0 0
        %1716 = vmatprep.subr.bf16.mxu0 0
        %1717 = vmatpush1.bf16.msra.mxu0 0
        %1718 = vmatprep.subr.bf16.mxu0 0
        %1719 = vmatpush1.bf16.msra.mxu0 0
        %1720 = vmatprep.subr.bf16.mxu0 0
        %1721 = vmatpush1.bf16.msra.mxu0 0
        %1722 = vmatprep.subr.bf16.mxu0 0
        %1723 = vmatpush1.bf16.msra.mxu0 0
        %1724 = vmatprep.subr.bf16.mxu0 0
        %1725 = vmatpush1.bf16.msra.mxu0 0
        %1726 = vmatprep.subr.bf16.mxu0 0
        %1727 = vmatpush1.bf16.msra.mxu0 0
        %1728 = vmatprep.subr.bf16.mxu0 0
        %1729 = vmatpush1.bf16.msra.mxu0 0
        %1730 = vmatprep.subr.bf16.mxu0 0
        %1731 = vmatpush1.bf16.msra.mxu0 0
        %1732 = vmatprep.subr.bf16.mxu0 0
        %1733 = vmatpush1.bf16.msra.mxu0 0
        %1734 = vmatprep.subr.bf16.mxu0 0
        %1735 = vmatpush1.bf16.msra.mxu0 0
        %1736 = vmatprep.mubr.bf16.mxu0 0
        %1737 = vmatmul.mubr.bf16.gmra.mrb[0].mxu0 %v1696
        %v1738 = vpop.f32.mrb[0].mxu0
        %v1739 = vadd.f32 0.0, %v1738
        %v1740 = vpop.f32.mrb[0].mxu0
        %v1741 = vadd.f32 0.0, %v1740
        %v1742 = vpop.f32.mrb[0].mxu0
        %v1743 = vpop.f32.mrb[0].mxu0
        %1744 = vdwg.mxu0
        %v1745 = vadd.f32 %v1662, %v1739
        %v1746 = vadd.f32 %v1663, %v1741
        %1747 = vrot.lane.b32.xlu0 %v1068, 32
        %v1748 = vpop.permute.xlu0 %1747
        %1749 = vrot.lane.b32.xlu0 %v1069, 32
        %v1750 = vpop.permute.xlu0 %1749
        %vm1751 = vcmp.lt.s32.totalorder %v375, 32
        %v1752 = vsel %vm1751, %v1748, %v1750
        %v1753 = vsel %vm1751, %v1750, %v1748
        %vm1754 = vmand %vm1673, %vm410
        %vm1755 = vmand %vm1754, %vm412
        %v1756 = vsel %vm1755, 1, 0
        %v1757 = vcvt.s32.f32 %v1756
        %v1759 = vlaneseq
        %v1760 = vshrl.u32 %v1759, 7
        %v1761 = vsub.s32 0, %v1760
        %v1762 = vrot.slane %v1757, %v1761
        %v1763 = vlaneseq
        %v1764 = vshrl.u32 %v1763, 7
        %v1765 = vsub.s32 1, %v1764
        %v1766 = vrot.slane %v1757, %v1765
        %v1769 = vmul.f32 %v1753, %v1762
        %v1770 = vmul.f32 %v1752, %v1766
        %v1771 = vpack.c.bf16 %v1769, %v1769
        %v1772 = vpack.c.bf16 %v1770, %v1770
        %v1774 = vsel %vm1082, %v354, 0
        %v1777 = vsel %vm1086, %v1771, 0
        %v1780 = vsel %vm1086, %v1772, 0
        %1782 = vmatprep.subr.bf16.mxu0 %v1780
        %1783 = vmatpush1.bf16.msra.mxu0 %v1777
        %1784 = vmatprep.subr.bf16.mxu0 0
        %1785 = vmatpush1.bf16.msra.mxu0 0
        %1786 = vmatprep.subr.bf16.mxu0 0
        %1787 = vmatpush1.bf16.msra.mxu0 0
        %1788 = vmatprep.subr.bf16.mxu0 0
        %1789 = vmatpush1.bf16.msra.mxu0 0
        %1790 = vmatprep.subr.bf16.mxu0 0
        %1791 = vmatpush1.bf16.msra.mxu0 0
        %1792 = vmatprep.subr.bf16.mxu0 0
        %1793 = vmatpush1.bf16.msra.mxu0 0
        %1794 = vmatprep.subr.bf16.mxu0 0
        %1795 = vmatpush1.bf16.msra.mxu0 0
        %1796 = vmatprep.subr.bf16.mxu0 0
        %1797 = vmatpush1.bf16.msra.mxu0 0
        %1798 = vmatprep.subr.bf16.mxu0 0
        %1799 = vmatpush1.bf16.msra.mxu0 0
        %1800 = vmatprep.subr.bf16.mxu0 0
        %1801 = vmatpush1.bf16.msra.mxu0 0
        %1802 = vmatprep.subr.bf16.mxu0 0
        %1803 = vmatpush1.bf16.msra.mxu0 0
        %1804 = vmatprep.subr.bf16.mxu0 0
        %1805 = vmatpush1.bf16.msra.mxu0 0
        %1806 = vmatprep.subr.bf16.mxu0 0
        %1807 = vmatpush1.bf16.msra.mxu0 0
        %1808 = vmatprep.subr.bf16.mxu0 0
        %1809 = vmatpush1.bf16.msra.mxu0 0
        %1810 = vmatprep.subr.bf16.mxu0 0
        %1811 = vmatpush1.bf16.msra.mxu0 0
        %1812 = vmatprep.subr.bf16.mxu0 0
        %1813 = vmatpush1.bf16.msra.mxu0 0
        %1814 = vmatprep.mubr.bf16.mxu0 0
        %1815 = vmatmul.mubr.bf16.gmra.mrb[0].mxu0 %v1774
        %v1816 = vpop.f32.mrb[0].mxu0
        %v1817 = vadd.f32 0.0, %v1816
        %v1818 = vpop.f32.mrb[0].mxu0
        %v1819 = vadd.f32 0.0, %v1818
        %v1820 = vpop.f32.mrb[0].mxu0
        %v1821 = vpop.f32.mrb[0].mxu0
        %1822 = vdwg.mxu0
        %v1823 = vadd.f32 %v1745, %v1817
        %v1824 = vadd.f32 %v1746, %v1819
        %1825 = vrot.lane.b32.xlu0 %v1068, 30
        %v1826 = vpop.permute.xlu0 %1825
        %1827 = vrot.lane.b32.xlu0 %v1069, 30
        %v1828 = vpop.permute.xlu0 %1827
        %vm1829 = vcmp.lt.s32.totalorder %v375, 30
        %v1830 = vsel %vm1829, %v1826, %v1828
        %v1831 = vsel %vm1829, %v1828, %v1826
        %vm1832 = vcmp.ge.s32.totalorder %v333, 4294967294
        %vm1833 = vmand %vm1673, %vm1832
        %vm1834 = vcmp.lt.s32.totalorder %v333, 14
        %vm1835 = vmand %vm1833, %vm1834
        %v1836 = vsel %vm1835, 1, 0
        %v1837 = vcvt.s32.f32 %v1836
        %v1839 = vlaneseq
        %v1840 = vshrl.u32 %v1839, 7
        %v1841 = vsub.s32 0, %v1840
        %v1842 = vrot.slane %v1837, %v1841
        %v1843 = vlaneseq
        %v1844 = vshrl.u32 %v1843, 7
        %v1845 = vsub.s32 1, %v1844
        %v1846 = vrot.slane %v1837, %v1845
        %v1849 = vmul.f32 %v1831, %v1842
        %v1850 = vmul.f32 %v1830, %v1846
        %v1851 = vpack.c.bf16 %v1849, %v1849
        %v1852 = vpack.c.bf16 %v1850, %v1850
        %v1854 = vsel %vm1082, %v355, 0
        %v1857 = vsel %vm1086, %v1851, 0
        %v1860 = vsel %vm1086, %v1852, 0
        %1862 = vmatprep.subr.bf16.mxu0 %v1860
        %1863 = vmatpush1.bf16.msra.mxu0 %v1857
        %1864 = vmatprep.subr.bf16.mxu0 0
        %1865 = vmatpush1.bf16.msra.mxu0 0
        %1866 = vmatprep.subr.bf16.mxu0 0
        %1867 = vmatpush1.bf16.msra.mxu0 0
        %1868 = vmatprep.subr.bf16.mxu0 0
        %1869 = vmatpush1.bf16.msra.mxu0 0
        %1870 = vmatprep.subr.bf16.mxu0 0
        %1871 = vmatpush1.bf16.msra.mxu0 0
        %1872 = vmatprep.subr.bf16.mxu0 0
        %1873 = vmatpush1.bf16.msra.mxu0 0
        %1874 = vmatprep.subr.bf16.mxu0 0
        %1875 = vmatpush1.bf16.msra.mxu0 0
        %1876 = vmatprep.subr.bf16.mxu0 0
        %1877 = vmatpush1.bf16.msra.mxu0 0
        %1878 = vmatprep.subr.bf16.mxu0 0
        %1879 = vmatpush1.bf16.msra.mxu0 0
        %1880 = vmatprep.subr.bf16.mxu0 0
        %1881 = vmatpush1.bf16.msra.mxu0 0
        %1882 = vmatprep.subr.bf16.mxu0 0
        %1883 = vmatpush1.bf16.msra.mxu0 0
        %1884 = vmatprep.subr.bf16.mxu0 0
        %1885 = vmatpush1.bf16.msra.mxu0 0
        %1886 = vmatprep.subr.bf16.mxu0 0
        %1887 = vmatpush1.bf16.msra.mxu0 0
        %1888 = vmatprep.subr.bf16.mxu0 0
        %1889 = vmatpush1.bf16.msra.mxu0 0
        %1890 = vmatprep.subr.bf16.mxu0 0
        %1891 = vmatpush1.bf16.msra.mxu0 0
        %1892 = vmatprep.subr.bf16.mxu0 0
        %1893 = vmatpush1.bf16.msra.mxu0 0
        %1894 = vmatprep.mubr.bf16.mxu0 0
        %1895 = vmatmul.mubr.bf16.gmra.mrb[0].mxu0 %v1854
        %v1896 = vpop.f32.mrb[0].mxu0
        %v1897 = vadd.f32 0.0, %v1896
        %v1898 = vpop.f32.mrb[0].mxu0
        %v1899 = vadd.f32 0.0, %v1898
        %v1900 = vpop.f32.mrb[0].mxu0
        %v1901 = vpop.f32.mrb[0].mxu0
        %1902 = vdwg.mxu0
        %v1903 = vadd.f32 %v1823, %v1897
        %v1904 = vadd.f32 %v1824, %v1899
        %1905 = vrot.lane.b32.xlu0 %v1068, 2
        %v1906 = vpop.permute.xlu0 %1905
        %1907 = vrot.lane.b32.xlu0 %v1069, 2
        %v1908 = vpop.permute.xlu0 %1907
        %vm1909 = vcmp.lt.s32.totalorder %v375, 2
        %v1910 = vsel %vm1909, %v1906, %v1908
        %v1911 = vsel %vm1909, %v1908, %v1906
        %vm1912 = vmand %vm622, %vm1674
        %vm1913 = vmand %vm1912, %vm1676
        %v1914 = vsel %vm1913, 1, 0
        %v1915 = vcvt.s32.f32 %v1914
        %v1917 = vlaneseq
        %v1918 = vshrl.u32 %v1917, 7
        %v1919 = vsub.s32 0, %v1918
        %v1920 = vrot.slane %v1915, %v1919
        %v1921 = vlaneseq
        %v1922 = vshrl.u32 %v1921, 7
        %v1923 = vsub.s32 1, %v1922
        %v1924 = vrot.slane %v1915, %v1923
        %v1927 = vmul.f32 %v1911, %v1920
        %v1928 = vmul.f32 %v1910, %v1924
        %v1929 = vpack.c.bf16 %v1927, %v1927
        %v1930 = vpack.c.bf16 %v1928, %v1928
        %v1932 = vsel %vm1082, %v356, 0
        %v1935 = vsel %vm1086, %v1929, 0
        %v1938 = vsel %vm1086, %v1930, 0
        %1940 = vmatprep.subr.bf16.mxu0 %v1938
        %1941 = vmatpush1.bf16.msra.mxu0 %v1935
        %1942 = vmatprep.subr.bf16.mxu0 0
        %1943 = vmatpush1.bf16.msra.mxu0 0
        %1944 = vmatprep.subr.bf16.mxu0 0
        %1945 = vmatpush1.bf16.msra.mxu0 0
        %1946 = vmatprep.subr.bf16.mxu0 0
        %1947 = vmatpush1.bf16.msra.mxu0 0
        %1948 = vmatprep.subr.bf16.mxu0 0
        %1949 = vmatpush1.bf16.msra.mxu0 0
        %1950 = vmatprep.subr.bf16.mxu0 0
        %1951 = vmatpush1.bf16.msra.mxu0 0
        %1952 = vmatprep.subr.bf16.mxu0 0
        %1953 = vmatpush1.bf16.msra.mxu0 0
        %1954 = vmatprep.subr.bf16.mxu0 0
        %1955 = vmatpush1.bf16.msra.mxu0 0
        %1956 = vmatprep.subr.bf16.mxu0 0
        %1957 = vmatpush1.bf16.msra.mxu0 0
        %1958 = vmatprep.subr.bf16.mxu0 0
        %1959 = vmatpush1.bf16.msra.mxu0 0
        %1960 = vmatprep.subr.bf16.mxu0 0
        %1961 = vmatpush1.bf16.msra.mxu0 0
        %1962 = vmatprep.subr.bf16.mxu0 0
        %1963 = vmatpush1.bf16.msra.mxu0 0
        %1964 = vmatprep.subr.bf16.mxu0 0
        %1965 = vmatpush1.bf16.msra.mxu0 0
        %1966 = vmatprep.subr.bf16.mxu0 0
        %1967 = vmatpush1.bf16.msra.mxu0 0
        %1968 = vmatprep.subr.bf16.mxu0 0
        %1969 = vmatpush1.bf16.msra.mxu0 0
        %1970 = vmatprep.subr.bf16.mxu0 0
        %1971 = vmatpush1.bf16.msra.mxu0 0
        %1972 = vmatprep.mubr.bf16.mxu0 0
        %1973 = vmatmul.mubr.bf16.gmra.mrb[0].mxu0 %v1932
        %v1974 = vpop.f32.mrb[0].mxu0
        %v1975 = vadd.f32 0.0, %v1974
        %v1976 = vpop.f32.mrb[0].mxu0
        %v1977 = vadd.f32 0.0, %v1976
        %v1978 = vpop.f32.mrb[0].mxu0
        %v1979 = vpop.f32.mrb[0].mxu0
        %1980 = vdwg.mxu0
        %v1981 = vadd.f32 %v1903, %v1975
        %v1982 = vadd.f32 %v1904, %v1977
        %v1984 = vsel %vm1082, %v357, 0
        %1986 = vmatprep.subr.bf16.mxu0 %v1141
        %1987 = vmatpush1.bf16.msra.mxu0 %v1138
        %1988 = vmatprep.subr.bf16.mxu0 0
        %1989 = vmatpush1.bf16.msra.mxu0 0
        %1990 = vmatprep.subr.bf16.mxu0 0
        %1991 = vmatpush1.bf16.msra.mxu0 0
        %1992 = vmatprep.subr.bf16.mxu0 0
        %1993 = vmatpush1.bf16.msra.mxu0 0
        %1994 = vmatprep.subr.bf16.mxu0 0
        %1995 = vmatpush1.bf16.msra.mxu0 0
        %1996 = vmatprep.subr.bf16.mxu0 0
        %1997 = vmatpush1.bf16.msra.mxu0 0
        %1998 = vmatprep.subr.bf16.mxu0 0
        %1999 = vmatpush1.bf16.msra.mxu0 0
        %2000 = vmatprep.subr.bf16.mxu0 0
        %2001 = vmatpush1.bf16.msra.mxu0 0
        %2002 = vmatprep.subr.bf16.mxu0 0
        %2003 = vmatpush1.bf16.msra.mxu0 0
        %2004 = vmatprep.subr.bf16.mxu0 0
        %2005 = vmatpush1.bf16.msra.mxu0 0
        %2006 = vmatprep.subr.bf16.mxu0 0
        %2007 = vmatpush1.bf16.msra.mxu0 0
        %2008 = vmatprep.subr.bf16.mxu0 0
        %2009 = vmatpush1.bf16.msra.mxu0 0
        %2010 = vmatprep.subr.bf16.mxu0 0
        %2011 = vmatpush1.bf16.msra.mxu0 0
        %2012 = vmatprep.subr.bf16.mxu0 0
        %2013 = vmatpush1.bf16.msra.mxu0 0
        %2014 = vmatprep.subr.bf16.mxu0 0
        %2015 = vmatpush1.bf16.msra.mxu0 0
        %2016 = vmatprep.subr.bf16.mxu0 0
        %2017 = vmatpush1.bf16.msra.mxu0 0
        %2018 = vmatprep.mubr.bf16.mxu0 0
        %2019 = vmatmul.mubr.bf16.gmra.mrb[0].mxu0 %v1984
        %v2020 = vpop.f32.mrb[0].mxu0
        %v2021 = vadd.f32 0.0, %v2020
        %v2022 = vpop.f32.mrb[0].mxu0
        %v2023 = vadd.f32 0.0, %v2022
        %v2024 = vpop.f32.mrb[0].mxu0
        %v2025 = vpop.f32.mrb[0].mxu0
        %2026 = vdwg.mxu0
        %v2027 = vadd.f32 %v1981, %v2021
        %v2028 = vadd.f32 %v1982, %v2023
        %2029 = vrot.lane.b32.xlu0 %v1068, 126
        %v2030 = vpop.permute.xlu0 %2029
        %2031 = vrot.lane.b32.xlu0 %v1069, 126
        %v2032 = vpop.permute.xlu0 %2031
        %vm2033 = vcmp.lt.s32.totalorder %v375, 126
        %v2034 = vsel %vm2033, %v2030, %v2032
        %v2035 = vsel %vm2033, %v2032, %v2030
        %vm2036 = vmand %vm622, %vm1832
        %vm2037 = vmand %vm2036, %vm1834
        %v2038 = vsel %vm2037, 1, 0
        %v2039 = vcvt.s32.f32 %v2038
        %v2041 = vlaneseq
        %v2042 = vshrl.u32 %v2041, 7
        %v2043 = vsub.s32 0, %v2042
        %v2044 = vrot.slane %v2039, %v2043
        %v2045 = vlaneseq
        %v2046 = vshrl.u32 %v2045, 7
        %v2047 = vsub.s32 1, %v2046
        %v2048 = vrot.slane %v2039, %v2047
        %v2051 = vmul.f32 %v2034, %v2044
        %v2052 = vmul.f32 %v2035, %v2048
        %v2053 = vpack.c.bf16 %v2051, %v2051
        %v2054 = vpack.c.bf16 %v2052, %v2052
        %v2056 = vsel %vm1082, %v358, 0
        %v2059 = vsel %vm1086, %v2053, 0
        %v2062 = vsel %vm1086, %v2054, 0
        %2064 = vmatprep.subr.bf16.mxu0 %v2062
        %2065 = vmatpush1.bf16.msra.mxu0 %v2059
        %2066 = vmatprep.subr.bf16.mxu0 0
        %2067 = vmatpush1.bf16.msra.mxu0 0
        %2068 = vmatprep.subr.bf16.mxu0 0
        %2069 = vmatpush1.bf16.msra.mxu0 0
        %2070 = vmatprep.subr.bf16.mxu0 0
        %2071 = vmatpush1.bf16.msra.mxu0 0
        %2072 = vmatprep.subr.bf16.mxu0 0
        %2073 = vmatpush1.bf16.msra.mxu0 0
        %2074 = vmatprep.subr.bf16.mxu0 0
        %2075 = vmatpush1.bf16.msra.mxu0 0
        %2076 = vmatprep.subr.bf16.mxu0 0
        %2077 = vmatpush1.bf16.msra.mxu0 0
        %2078 = vmatprep.subr.bf16.mxu0 0
        %2079 = vmatpush1.bf16.msra.mxu0 0
        %2080 = vmatprep.subr.bf16.mxu0 0
        %2081 = vmatpush1.bf16.msra.mxu0 0
        %2082 = vmatprep.subr.bf16.mxu0 0
        %2083 = vmatpush1.bf16.msra.mxu0 0
        %2084 = vmatprep.subr.bf16.mxu0 0
        %2085 = vmatpush1.bf16.msra.mxu0 0
        %2086 = vmatprep.subr.bf16.mxu0 0
        %2087 = vmatpush1.bf16.msra.mxu0 0
        %2088 = vmatprep.subr.bf16.mxu0 0
        %2089 = vmatpush1.bf16.msra.mxu0 0
        %2090 = vmatprep.subr.bf16.mxu0 0
        %2091 = vmatpush1.bf16.msra.mxu0 0
        %2092 = vmatprep.subr.bf16.mxu0 0
        %2093 = vmatpush1.bf16.msra.mxu0 0
        %2094 = vmatprep.subr.bf16.mxu0 0
        %2095 = vmatpush1.bf16.msra.mxu0 0
        %2096 = vmatprep.mubr.bf16.mxu0 0
        %2097 = vmatmul.mubr.bf16.gmra.mrb[0].mxu0 %v2056
        %v2098 = vpop.f32.mrb[0].mxu0
        %v2099 = vadd.f32 0.0, %v2098
        %v2100 = vpop.f32.mrb[0].mxu0
        %v2101 = vadd.f32 0.0, %v2100
        %v2102 = vpop.f32.mrb[0].mxu0
        %v2103 = vpop.f32.mrb[0].mxu0
        %2104 = vdwg.mxu0
        %v2105 = vadd.f32 %v2027, %v2099
        %v2106 = vadd.f32 %v2028, %v2101
        %2107 = vrot.lane.b32.xlu0 %v1068, 98
        %v2108 = vpop.permute.xlu0 %2107
        %2109 = vrot.lane.b32.xlu0 %v1069, 98
        %v2110 = vpop.permute.xlu0 %2109
        %vm2111 = vcmp.lt.s32.totalorder %v375, 98
        %v2112 = vsel %vm2111, %v2108, %v2110
        %v2113 = vsel %vm2111, %v2110, %v2108
        %vm2114 = vcmp.ge.s32.totalorder %v332, 4294967294
        %vm2115 = vcmp.lt.s32.totalorder %v332, 14
        %vm2116 = vmand %vm2114, %vm2115
        %vm2117 = vmand %vm2116, %vm1674
        %vm2118 = vmand %vm2117, %vm1676
        %v2119 = vsel %vm2118, 1, 0
        %v2120 = vcvt.s32.f32 %v2119
        %v2122 = vlaneseq
        %v2123 = vshrl.u32 %v2122, 7
        %v2124 = vsub.s32 0, %v2123
        %v2125 = vrot.slane %v2120, %v2124
        %v2126 = vlaneseq
        %v2127 = vshrl.u32 %v2126, 7
        %v2128 = vsub.s32 1, %v2127
        %v2129 = vrot.slane %v2120, %v2128
        %v2132 = vmul.f32 %v2112, %v2125
        %v2133 = vmul.f32 %v2113, %v2129
        %v2134 = vpack.c.bf16 %v2132, %v2132
        %v2135 = vpack.c.bf16 %v2133, %v2133
        %v2137 = vsel %vm1082, %v359, 0
        %v2140 = vsel %vm1086, %v2134, 0
        %v2143 = vsel %vm1086, %v2135, 0
        %2145 = vmatprep.subr.bf16.mxu0 %v2143
        %2146 = vmatpush1.bf16.msra.mxu0 %v2140
        %2147 = vmatprep.subr.bf16.mxu0 0
        %2148 = vmatpush1.bf16.msra.mxu0 0
        %2149 = vmatprep.subr.bf16.mxu0 0
        %2150 = vmatpush1.bf16.msra.mxu0 0
        %2151 = vmatprep.subr.bf16.mxu0 0
        %2152 = vmatpush1.bf16.msra.mxu0 0
        %2153 = vmatprep.subr.bf16.mxu0 0
        %2154 = vmatpush1.bf16.msra.mxu0 0
        %2155 = vmatprep.subr.bf16.mxu0 0
        %2156 = vmatpush1.bf16.msra.mxu0 0
        %2157 = vmatprep.subr.bf16.mxu0 0
        %2158 = vmatpush1.bf16.msra.mxu0 0
        %2159 = vmatprep.subr.bf16.mxu0 0
        %2160 = vmatpush1.bf16.msra.mxu0 0
        %2161 = vmatprep.subr.bf16.mxu0 0
        %2162 = vmatpush1.bf16.msra.mxu0 0
        %2163 = vmatprep.subr.bf16.mxu0 0
        %2164 = vmatpush1.bf16.msra.mxu0 0
        %2165 = vmatprep.subr.bf16.mxu0 0
        %2166 = vmatpush1.bf16.msra.mxu0 0
        %2167 = vmatprep.subr.bf16.mxu0 0
        %2168 = vmatpush1.bf16.msra.mxu0 0
        %2169 = vmatprep.subr.bf16.mxu0 0
        %2170 = vmatpush1.bf16.msra.mxu0 0
        %2171 = vmatprep.subr.bf16.mxu0 0
        %2172 = vmatpush1.bf16.msra.mxu0 0
        %2173 = vmatprep.subr.bf16.mxu0 0
        %2174 = vmatpush1.bf16.msra.mxu0 0
        %2175 = vmatprep.subr.bf16.mxu0 0
        %2176 = vmatpush1.bf16.msra.mxu0 0
        %2177 = vmatprep.mubr.bf16.mxu0 0
        %2178 = vmatmul.mubr.bf16.gmra.mrb[0].mxu0 %v2137
        %v2179 = vpop.f32.mrb[0].mxu0
        %v2180 = vadd.f32 0.0, %v2179
        %v2181 = vpop.f32.mrb[0].mxu0
        %v2182 = vadd.f32 0.0, %v2181
        %v2183 = vpop.f32.mrb[0].mxu0
        %v2184 = vpop.f32.mrb[0].mxu0
        %2185 = vdwg.mxu0
        %v2186 = vadd.f32 %v2105, %v2180
        %v2187 = vadd.f32 %v2106, %v2182
        %2188 = vrot.lane.b32.xlu0 %v1068, 96
        %v2189 = vpop.permute.xlu0 %2188
        %2190 = vrot.lane.b32.xlu0 %v1069, 96
        %v2191 = vpop.permute.xlu0 %2190
        %vm2192 = vcmp.lt.s32.totalorder %v375, 96
        %v2193 = vsel %vm2192, %v2189, %v2191
        %v2194 = vsel %vm2192, %v2191, %v2189
        %vm2195 = vmand %vm2116, %vm410
        %vm2196 = vmand %vm2195, %vm412
        %v2197 = vsel %vm2196, 1, 0
        %v2198 = vcvt.s32.f32 %v2197
        %v2200 = vlaneseq
        %v2201 = vshrl.u32 %v2200, 7
        %v2202 = vsub.s32 0, %v2201
        %v2203 = vrot.slane %v2198, %v2202
        %v2204 = vlaneseq
        %v2205 = vshrl.u32 %v2204, 7
        %v2206 = vsub.s32 1, %v2205
        %v2207 = vrot.slane %v2198, %v2206
        %v2210 = vmul.f32 %v2193, %v2203
        %v2211 = vmul.f32 %v2194, %v2207
        %v2212 = vpack.c.bf16 %v2210, %v2210
        %v2213 = vpack.c.bf16 %v2211, %v2211
        %v2215 = vsel %vm1082, %v360, 0
        %v2218 = vsel %vm1086, %v2212, 0
        %v2221 = vsel %vm1086, %v2213, 0
        %2223 = vmatprep.subr.bf16.mxu0 %v2221
        %2224 = vmatpush1.bf16.msra.mxu0 %v2218
        %2225 = vmatprep.subr.bf16.mxu0 0
        %2226 = vmatpush1.bf16.msra.mxu0 0
        %2227 = vmatprep.subr.bf16.mxu0 0
        %2228 = vmatpush1.bf16.msra.mxu0 0
        %2229 = vmatprep.subr.bf16.mxu0 0
        %2230 = vmatpush1.bf16.msra.mxu0 0
        %2231 = vmatprep.subr.bf16.mxu0 0
        %2232 = vmatpush1.bf16.msra.mxu0 0
        %2233 = vmatprep.subr.bf16.mxu0 0
        %2234 = vmatpush1.bf16.msra.mxu0 0
        %2235 = vmatprep.subr.bf16.mxu0 0
        %2236 = vmatpush1.bf16.msra.mxu0 0
        %2237 = vmatprep.subr.bf16.mxu0 0
        %2238 = vmatpush1.bf16.msra.mxu0 0
        %2239 = vmatprep.subr.bf16.mxu0 0
        %2240 = vmatpush1.bf16.msra.mxu0 0
        %2241 = vmatprep.subr.bf16.mxu0 0
        %2242 = vmatpush1.bf16.msra.mxu0 0
        %2243 = vmatprep.subr.bf16.mxu0 0
        %2244 = vmatpush1.bf16.msra.mxu0 0
        %2245 = vmatprep.subr.bf16.mxu0 0
        %2246 = vmatpush1.bf16.msra.mxu0 0
        %2247 = vmatprep.subr.bf16.mxu0 0
        %2248 = vmatpush1.bf16.msra.mxu0 0
        %2249 = vmatprep.subr.bf16.mxu0 0
        %2250 = vmatpush1.bf16.msra.mxu0 0
        %2251 = vmatprep.subr.bf16.mxu0 0
        %2252 = vmatpush1.bf16.msra.mxu0 0
        %2253 = vmatprep.subr.bf16.mxu0 0
        %2254 = vmatpush1.bf16.msra.mxu0 0
        %2255 = vmatprep.mubr.bf16.mxu0 0
        %2256 = vmatmul.mubr.bf16.gmra.mrb[0].mxu0 %v2215
        %v2257 = vpop.f32.mrb[0].mxu0
        %v2258 = vadd.f32 0.0, %v2257
        %v2259 = vpop.f32.mrb[0].mxu0
        %v2260 = vadd.f32 0.0, %v2259
        %v2261 = vpop.f32.mrb[0].mxu0
        %v2262 = vpop.f32.mrb[0].mxu0
        %2263 = vdwg.mxu0
        %v2264 = vadd.f32 %v2186, %v2258
        %v2265 = vadd.f32 %v2187, %v2260
        %2266 = vrot.lane.b32.xlu0 %v1068, 94
        %v2267 = vpop.permute.xlu0 %2266
        %2268 = vrot.lane.b32.xlu0 %v1069, 94
        %v2269 = vpop.permute.xlu0 %2268
        %vm2270 = vcmp.lt.s32.totalorder %v375, 94
        %v2271 = vsel %vm2270, %v2267, %v2269
        %v2272 = vsel %vm2270, %v2269, %v2267
        %vm2273 = vmand %vm2116, %vm1832
        %vm2274 = vmand %vm2273, %vm1834
        %v2275 = vsel %vm2274, 1, 0
        %v2276 = vcvt.s32.f32 %v2275
        %v2278 = vlaneseq
        %v2279 = vshrl.u32 %v2278, 7
        %v2280 = vsub.s32 0, %v2279
        %v2281 = vrot.slane %v2276, %v2280
        %v2282 = vlaneseq
        %v2283 = vshrl.u32 %v2282, 7
        %v2284 = vsub.s32 1, %v2283
        %v2285 = vrot.slane %v2276, %v2284
        %v2288 = vmul.f32 %v2271, %v2281
        %v2289 = vmul.f32 %v2272, %v2285
        %v2290 = vpack.c.bf16 %v2288, %v2288
        %v2291 = vpack.c.bf16 %v2289, %v2289
        %v2293 = vsel %vm1082, %v361, 0
        %v2296 = vsel %vm1086, %v2290, 0
        %v2299 = vsel %vm1086, %v2291, 0
        %2301 = vmatprep.subr.bf16.mxu0 %v2299
        %2302 = vmatpush1.bf16.msra.mxu0 %v2296
        %2303 = vmatprep.subr.bf16.mxu0 0
        %2304 = vmatpush1.bf16.msra.mxu0 0
        %2305 = vmatprep.subr.bf16.mxu0 0
        %2306 = vmatpush1.bf16.msra.mxu0 0
        %2307 = vmatprep.subr.bf16.mxu0 0
        %2308 = vmatpush1.bf16.msra.mxu0 0
        %2309 = vmatprep.subr.bf16.mxu0 0
        %2310 = vmatpush1.bf16.msra.mxu0 0
        %2311 = vmatprep.subr.bf16.mxu0 0
        %2312 = vmatpush1.bf16.msra.mxu0 0
        %2313 = vmatprep.subr.bf16.mxu0 0
        %2314 = vmatpush1.bf16.msra.mxu0 0
        %2315 = vmatprep.subr.bf16.mxu0 0
        %2316 = vmatpush1.bf16.msra.mxu0 0
        %2317 = vmatprep.subr.bf16.mxu0 0
        %2318 = vmatpush1.bf16.msra.mxu0 0
        %2319 = vmatprep.subr.bf16.mxu0 0
        %2320 = vmatpush1.bf16.msra.mxu0 0
        %2321 = vmatprep.subr.bf16.mxu0 0
        %2322 = vmatpush1.bf16.msra.mxu0 0
        %2323 = vmatprep.subr.bf16.mxu0 0
        %2324 = vmatpush1.bf16.msra.mxu0 0
        %2325 = vmatprep.subr.bf16.mxu0 0
        %2326 = vmatpush1.bf16.msra.mxu0 0
        %2327 = vmatprep.subr.bf16.mxu0 0
        %2328 = vmatpush1.bf16.msra.mxu0 0
        %2329 = vmatprep.subr.bf16.mxu0 0
        %2330 = vmatpush1.bf16.msra.mxu0 0
        %2331 = vmatprep.subr.bf16.mxu0 0
        %2332 = vmatpush1.bf16.msra.mxu0 0
        %2333 = vmatprep.mubr.bf16.mxu0 0
        %2334 = vmatmul.mubr.bf16.gmra.mrb[0].mxu0 %v2293
        %v2335 = vpop.f32.mrb[0].mxu0
        %v2336 = vadd.f32 0.0, %v2335
        %v2337 = vpop.f32.mrb[0].mxu0
        %v2338 = vadd.f32 0.0, %v2337
        %v2339 = vpop.f32.mrb[0].mxu0
        %v2340 = vpop.f32.mrb[0].mxu0
        %2341 = vdwg.mxu0
        %v2342 = vadd.f32 %v2264, %v2336
        %v2343 = vadd.f32 %v2265, %v2338
        %2345 = vset.pattern.permute.xlu0 0
        %2346 = vperm.xlu0 %2345, %v364
        %v2347 = vpop.permute.xlu0 %2346
        %v2349 = vadd.f32 %v2342, %v2347
        %v2350 = vadd.f32 %v2343, %v2347
        %v2352 = vsel %vm1082, %v362, 0
        %2354 = vmatprep.subr.mxu0 %v2350
        %2355 = vmatpush1.msra.mxu0 %v2349
        %2356 = vmatprep.subr.mxu0 0.0
        %2357 = vmatpush1.msra.mxu0 0.0
        %2358 = vmatprep.subr.mxu0 0.0
        %2359 = vmatpush1.msra.mxu0 0.0
        %2360 = vmatprep.subr.mxu0 0.0
        %2361 = vmatpush1.msra.mxu0 0.0
        %2362 = vmatprep.subr.mxu0 0.0
        %2363 = vmatpush1.msra.mxu0 0.0
        %2364 = vmatprep.subr.mxu0 0.0
        %2365 = vmatpush1.msra.mxu0 0.0
        %2366 = vmatprep.subr.mxu0 0.0
        %2367 = vmatpush1.msra.mxu0 0.0
        %2368 = vmatprep.subr.mxu0 0.0
        %2369 = vmatpush1.msra.mxu0 0.0
        %2370 = vmatprep.subr.mxu0 0.0
        %2371 = vmatpush1.msra.mxu0 0.0
        %2372 = vmatprep.subr.mxu0 0.0
        %2373 = vmatpush1.msra.mxu0 0.0
        %2374 = vmatprep.subr.mxu0 0.0
        %2375 = vmatpush1.msra.mxu0 0.0
        %2376 = vmatprep.subr.mxu0 0.0
        %2377 = vmatpush1.msra.mxu0 0.0
        %2378 = vmatprep.subr.mxu0 0.0
        %2379 = vmatpush1.msra.mxu0 0.0
        %2380 = vmatprep.subr.mxu0 0.0
        %2381 = vmatpush1.msra.mxu0 0.0
        %2382 = vmatprep.subr.mxu0 0.0
        %2383 = vmatpush1.msra.mxu0 0.0
        %2384 = vmatprep.subr.mxu0 0.0
        %2385 = vmatpush1.msra.mxu0 0.0
        %2386 = vmatprep.subr.mxu0 0.0
        %2387 = vmatpush1.msra.mxu0 0.0
        %2388 = vmatprep.subr.mxu0 0.0
        %2389 = vmatpush1.msra.mxu0 0.0
        %2390 = vmatprep.subr.mxu0 0.0
        %2391 = vmatpush1.msra.mxu0 0.0
        %2392 = vmatprep.subr.mxu0 0.0
        %2393 = vmatpush1.msra.mxu0 0.0
        %2394 = vmatprep.subr.mxu0 0.0
        %2395 = vmatpush1.msra.mxu0 0.0
        %2396 = vmatprep.subr.mxu0 0.0
        %2397 = vmatpush1.msra.mxu0 0.0
        %2398 = vmatprep.subr.mxu0 0.0
        %2399 = vmatpush1.msra.mxu0 0.0
        %2400 = vmatprep.subr.mxu0 0.0
        %2401 = vmatpush1.msra.mxu0 0.0
        %2402 = vmatprep.subr.mxu0 0.0
        %2403 = vmatpush1.msra.mxu0 0.0
        %2404 = vmatprep.subr.mxu0 0.0
        %2405 = vmatpush1.msra.mxu0 0.0
        %2406 = vmatprep.subr.mxu0 0.0
        %2407 = vmatpush1.msra.mxu0 0.0
        %2408 = vmatprep.subr.mxu0 0.0
        %2409 = vmatpush1.msra.mxu0 0.0
        %2410 = vmatprep.subr.mxu0 0.0
        %2411 = vmatpush1.msra.mxu0 0.0
        %2412 = vmatprep.subr.mxu0 0.0
        %2413 = vmatpush1.msra.mxu0 0.0
        %2414 = vmatprep.subr.mxu0 0.0
        %2415 = vmatpush1.msra.mxu0 0.0
        %2416 = vmatprep.subr.mxu0 0.0
        %2417 = vmatpush1.msra.mxu0 0.0
        %2418 = vmatprep.mubr.f32.mxu0 0.0
        %2419 = vmatmul.mubr.f32.gmra.mrb[0].mxu0 %v2352
        %v2420 = vpop.f32.mrb[0].mxu0
        %v2421 = vadd.f32 0.0, %v2420
        %v2422 = vpop.f32.mrb[0].mxu0
        %v2423 = vadd.f32 0.0, %v2422
        %2424 = vdwg.mxu0
        %v2425 = vadd.f32 %v2421, %v2423
        %2426 = vadd.xlane.f32.xlu0 %v2425
        %v2427 = vpop.xlane.xlu0 %2426
        %v2428 = vrcp.pop 256.0
        %v2429 = vmul.f32 %v2427, %v2428
        %v2430 = vadd.f32 %v2429, %v365
        %v2431 = vxor.u32 %v2430, 2147483648
        %v2432 = vmul.f32 %v2431, 1.442695
        %v2433 = vpow.pop %v2432
        %v2434 = vadd.f32 %v2433, 1.0
        %v2435 = vrcp.pop %v2434
        %v2436 = vmul.f32 1.0, %v2435
        %2438 = vset.pattern.permute.xlu0 0
        %2439 = vperm.xlu0 %2438, %v2436
        %v2440 = vpop.permute.xlu0 %2439
        %v2442 = vmul.f32 %v2349, %v2440
        %v2443 = vmul.f32 %v2350, %v2440
        %v2444 = vmax.f32 %v2442, 0.0
        %v2445 = vmax.f32 %v2443, 0.0
        %2446 = vst [vmem:[%s325] sm:$0xff] %v2444
        %2447 = vst [vmem:[%s325 + $0x8] sm:$0xff] %v2445
        %s2448 = sand.u32 %s225, 1
        %s2449 = scalar_lea.sflag [#allocation3], %s2448
        %s2450 = sand.u32 %s225, 1
        %s2451 = smul.addr %s2450, 16
        %s2452 = scalar_lea.vmem [#allocation2], %s2451
        // Predicated region
        $region57: #{tpu_custom_call.1} parent=55 // pred_check
          %p2453 = pneg %p235
        $region58: #{tpu_custom_call.1} parent=55 // pred_check_branch
          %2455 = sbr.rel (%p2453) target = $region60
        $region59: #{tpu_custom_call.1} parent=55 // pred_region
          %s2457 = ssub.s32 256, 256
          %2458 = vsyncadd %s2449, %s2457
          %s2459 = smul.addr %s23, 2
          %s2460 = smul.addr %s2459, 128
          %s2461 = scalar_lea.hbm %s9, %s2460
          %s2463 = sshll.u32 %s2452, 4
          %s2464 = int_to_ptr.vmem [resolvable:$true] %s2463
          %2466 = dma.vmem_to_hbm [thread:$0]  %s2464, 256, %s2461, %s2449
        $region60: #{tpu_custom_call.1} parent=55 // pred_fallthru
          _
      $region56: #{tpu_custom_call.1} parent=5 // pred_fallthru
        _
      %p2467 = scmp.le.s32.totalorder 2, %s18
      // Predicated region
      $region61: #{tpu_custom_call.1} parent=5 // pred_check
        %p2468 = pneg %p2467
      $region62: #{tpu_custom_call.1} parent=5 // pred_check_branch
        %2470 = sbr.rel (%p2468) target = $region64
      $region63: #{tpu_custom_call.1} parent=5 // pred_region
        %s2471 = ssub.s32 %s18, 2
        // Predicated region
        $region65: #{tpu_custom_call.1} parent=63 // pred_check
          %p2472 = pneg %p241
        $region66: #{tpu_custom_call.1} parent=63 // pred_check_branch
          %2474 = sbr.rel (%p2472) target = $region68
        $region67: #{tpu_custom_call.1} parent=63 // pred_region
          %s2475 = sand.u32 %s226, 1
          %s2476 = scalar_lea.sflag [#allocation3], %s2475
          %s2477 = sand.u32 %s226, 1
          %s2478 = smul.addr %s2477, 16
          %s2479 = scalar_lea.vmem [#allocation2], %s2478
          %2480 = dma.done %s2476, 256
        $region68: #{tpu_custom_call.1} parent=63 // pred_fallthru
          _
      $region64: #{tpu_custom_call.1} parent=5 // pred_fallthru
        _
    $region6: #{tpu_custom_call.1} parent=1 // loop_footer
      %s22 = sadd.s32 1, %s18
    $region7: #{tpu_custom_call.1} parent=1 // loop_footer_branch
      %17 = sbr.rel target = $region3
    $region8: #{tpu_custom_call.1} parent=1 // loop_exit
      _
    %2481 = vsyncpa [#allocation3], 1
    %s2482 = scalar_lea.sflag [#allocation3], 1
    %2483 = vsyncpa %s2482, 1

</llo_original>
